<compile_context>
chip_gen: v7x
topology: tpu7x:2x2x1
jax: 0.10.0
libtpu: 0.0.40
codegen_flags: <defaults>
</compile_context>

<pallas_src>
import numpy as np

import jax
import jax.numpy as jnp
from jax.experimental import pallas as pl
from jax.experimental.pallas import tpu as pltpu


N_ACTIONS = 6
BN_EPS = 1e-5
K1P = 256        # conv1 im2col K (196 real rows, zero padded to 256)
R2P = 48         # padded row-block height for the conv2 patch gather (36 real)
N_OUT_PAD = 128  # final q-value lanes (N_ACTIONS real, zero padded)


# -----------------------------------------------------------------------------
# The single fused kernel: one image per grid step, everything in VMEM.
# -----------------------------------------------------------------------------
def _qnet_kernel(xp_ref, w1_ref, s1_ref, sel2_ref, w2_ref, s2_ref,
                 sel3_ref, w3_ref, s3_ref, fm_ref, wf1_ref, bf1_ref,
                 wf2_ref, bf2_ref, o_ref):
    f32 = jnp.float32
    bf16 = jnp.bfloat16

    # conv1 (7x7 / stride 5) + folded x/255 + eval-BN + ReLU.
    # Patches are pre-built in the XLA wrapper: (256, 256) bf16.
    h1 = jnp.dot(xp_ref[...], w1_ref[...], preferred_element_type=f32)
    h1 = jnp.maximum(h1 + s1_ref[...], 0.0).astype(bf16)             # (256, 32)

    # conv2 (5x5 / stride 2) + ReLU.  Constant 0/1 selection matmul gathers
    # the 25 shifted taps (rows), then lane-concat builds the patch matrix.
    g2 = jnp.dot(sel2_ref[...], h1, preferred_element_type=f32).astype(bf16)
    p2 = jnp.concatenate(
        [g2[k * R2P:(k + 1) * R2P, :] for k in range(25)], axis=1)   # (48, 800)
    h2 = jnp.dot(p2, w2_ref[...], preferred_element_type=f32)
    h2 = jnp.maximum(h2 + s2_ref[...], 0.0).astype(bf16)             # (48, 64)

    # conv3 (3x3 / stride 1) + ReLU, same trick.
    g3 = jnp.dot(sel3_ref[...], h2, preferred_element_type=f32).astype(bf16)
    p3 = jnp.concatenate(
        [g3[k * 16:(k + 1) * 16, :] for k in range(9)], axis=1)      # (16, 576)
    h3 = jnp.dot(p3, w3_ref[...], preferred_element_type=f32)
    h3 = jnp.maximum(h3 + s3_ref[...], 0.0)                          # (16, 64) f32

    # Flatten (rows -> lanes) without sublane reshapes: tile h3 16x along the
    # lane axis, keep only the block-diagonal with a constant mask, reduce
    # over rows.  flat[0, r*64 + c] == h3[r, c].
    h3_t = jnp.concatenate([h3] * 16, axis=1)                        # (16, 1024)
    flat = jnp.sum(h3_t * fm_ref[...], axis=0, keepdims=True)        # (1, 1024)

    # fc1 + ReLU, then fc2 — weights VMEM-resident, f32 epilogue.
    z = jnp.dot(flat.astype(bf16), wf1_ref[...], preferred_element_type=f32)
    z = jnp.maximum(z + bf1_ref[...], 0.0).astype(bf16)              # (1, 512)
    q = jnp.dot(z, wf2_ref[...], preferred_element_type=f32) + bf2_ref[...]
    o_ref[...] = jnp.broadcast_to(q, o_ref.shape).astype(o_ref.dtype)


# -----------------------------------------------------------------------------
# XLA glue: conv1 im2col on the raw frames (the only HBM activation pass).
# -----------------------------------------------------------------------------
def _conv1_im2col(x):
    """x: (B, 4, 84, 84) NCHW -> (B, 256, K1P) bf16 patch matrices.

    row = y*16 + x_out, col = (i*7 + j)*4 + c; K zero-padded 196 -> K1P.
    """
    B = x.shape[0]
    xh = jnp.transpose(x, (0, 2, 3, 1)).astype(jnp.bfloat16)         # NHWC
    cols = [xh[:, i:i + 76:5, j:j + 76:5, :]
            for i in range(7) for j in range(7)]                     # (B,16,16,4) each
    cols.append(jnp.zeros((B, 16, 16, K1P - 196), jnp.bfloat16))
    return jnp.concatenate(cols, axis=-1).reshape(B, 256, K1P)


# -----------------------------------------------------------------------------
# Forward pass: one pallas_call for the whole network.
# -----------------------------------------------------------------------------
@jax.jit
def qnetwork_forward(prepped, x):
    B = x.shape[0]
    patches = _conv1_im2col(x)                                       # (B, 256, 256)

    const2 = lambda b: (0, 0)
    out = pl.pallas_call(
        _qnet_kernel,
        out_shape=jax.ShapeDtypeStruct((B, 8, N_OUT_PAD), jnp.float32),
        grid_spec=pltpu.PrefetchScalarGridSpec(
            num_scalar_prefetch=0,
            grid=(B,),
            in_specs=[
                pl.BlockSpec((None, 256, K1P), lambda b: (b, 0, 0)),   # conv1 patches
                pl.BlockSpec((K1P, 32), const2),                       # w1
                pl.BlockSpec((1, 32), const2),                         # s1 (BN+bias)
                pl.BlockSpec((25 * R2P, 256), const2),                 # sel2
                pl.BlockSpec((800, 64), const2),                       # w2
                pl.BlockSpec((1, 64), const2),                         # s2
                pl.BlockSpec((144, R2P), const2),                      # sel3
                pl.BlockSpec((576, 64), const2),                       # w3
                pl.BlockSpec((1, 64), const2),                         # s3
                pl.BlockSpec((16, 1024), const2),                      # flatten mask
                pl.BlockSpec((1024, 512), const2),                     # fc1 w
                pl.BlockSpec((1, 512), const2),                        # fc1 b
                pl.BlockSpec((512, N_OUT_PAD), const2),                # fc2 w
                pl.BlockSpec((1, N_OUT_PAD), const2),                  # fc2 b
            ],
            out_specs=pl.BlockSpec((None, 8, N_OUT_PAD), lambda b: (b, 0, 0)),
        ),
        compiler_params=pltpu.CompilerParams(
            dimension_semantics=("parallel",),
        ),
    )(patches, prepped['w1'], prepped['s1'], prepped['sel2'], prepped['w2'],
      prepped['s2'], prepped['sel3'], prepped['w3'], prepped['s3'],
      prepped['fmask'], prepped['wf1'], prepped['bf1'], prepped['wf2'],
      prepped['bf2'])
    return out[:, 0, :N_ACTIONS]


# -----------------------------------------------------------------------------
# Parameters: raw (torch layout) init + host-side fold / permute / cast.
# -----------------------------------------------------------------------------
def init_params(key):
    def uniform(k, shape, fan_in):
        bound = 1.0 / jnp.sqrt(jnp.float32(fan_in))
        return jax.random.uniform(k, shape, jnp.float32, -bound, bound)

    ks = jax.random.split(key, 10)
    p = {}
    p['conv1_w'] = uniform(ks[0], (32, 4, 7, 7), 4 * 7 * 7)
    p['conv1_b'] = uniform(ks[1], (32,), 4 * 7 * 7)
    p['bn_gamma'] = jnp.ones((32,), jnp.float32)
    p['bn_beta'] = jnp.zeros((32,), jnp.float32)
    p['bn_mean'] = jnp.zeros((32,), jnp.float32)
    p['bn_var'] = jnp.ones((32,), jnp.float32)
    p['conv2_w'] = uniform(ks[2], (64, 32, 5, 5), 32 * 5 * 5)
    p['conv2_b'] = uniform(ks[3], (64,), 32 * 5 * 5)
    p['conv3_w'] = uniform(ks[4], (64, 64, 3, 3), 64 * 3 * 3)
    p['conv3_b'] = uniform(ks[5], (64,), 64 * 3 * 3)
    p['fc1_w'] = uniform(ks[6], (512, 64 * 4 * 4), 64 * 4 * 4)
    p['fc1_b'] = uniform(ks[7], (512,), 64 * 4 * 4)
    p['fc2_w'] = uniform(ks[8], (N_ACTIONS, 512), 512)
    p['fc2_b'] = uniform(ks[9], (N_ACTIONS,), 512)
    return p


def _selection_matrices():
    """Constant 0/1 matrices doing the strided-conv row gathers on the MXU."""
    # conv2: 5x5 / stride 2 on a 16x16x32 map -> 6x6 outputs.
    sel2 = np.zeros((25 * R2P, 256), np.float32)
    for i in range(5):
        for j in range(5):
            k = i * 5 + j
            for v in range(6):
                for u in range(6):
                    sel2[k * R2P + v * 6 + u,
                         (2 * v + i) * 16 + (2 * u + j)] = 1.0
    # conv3: 3x3 / stride 1 on a 6x6x64 map (stored padded to 48 rows) -> 4x4.
    sel3 = np.zeros((9 * 16, R2P), np.float32)
    for i in range(3):
        for j in range(3):
            k = i * 3 + j
            for y in range(4):
                for x in range(4):
                    sel3[k * 16 + y * 4 + x, (y + i) * 6 + (x + j)] = 1.0
    # flatten mask: keeps lane block r of the 16x-tiled conv3 output for row r.
    fmask = np.zeros((16, 1024), np.float32)
    for r in range(16):
        fmask[r, r * 64:(r + 1) * 64] = 1.0
    return sel2, sel3, fmask


def prepare_params(p):
    bf16 = jnp.bfloat16
    # Fold x/255 and eval-mode BatchNorm into conv1 weight + per-channel shift.
    sc = p['bn_gamma'] / jnp.sqrt(p['bn_var'] + BN_EPS)
    w1f = p['conv1_w'] * (sc / 255.0)[:, None, None, None]
    s1 = p['bn_beta'] + (p['conv1_b'] - p['bn_mean']) * sc

    # (O, C, KH, KW) -> (KH*KW*C, O) with rows ordered (i, j, c), matching the
    # (i, j, c)-ordered im2col / selection-gather columns.
    w1m = w1f.transpose(2, 3, 1, 0).reshape(49 * 4, 32)
    w1m = jnp.pad(w1m, ((0, K1P - 196), (0, 0))).astype(bf16)        # (256, 32)
    w2m = p['conv2_w'].transpose(2, 3, 1, 0).reshape(25 * 32, 64).astype(bf16)
    w3m = p['conv3_w'].transpose(2, 3, 1, 0).reshape(9 * 64, 64).astype(bf16)

    # fc1: permute columns from torch's channel-major (c, h, w) flatten to the
    # kernel's (h*w, c) flatten (flat index = r*64 + c).
    wf1m = (p['fc1_w'].reshape(512, 64, 16).transpose(2, 1, 0)
            .reshape(1024, 512).astype(bf16))
    wf2m = jnp.pad(p['fc2_w'].T,
                   ((0, 0), (0, N_OUT_PAD - N_ACTIONS))).astype(bf16)

    sel2, sel3, fmask = _selection_matrices()
    return dict(
        w1=w1m, s1=s1.reshape(1, 32).astype(jnp.float32),
        sel2=jnp.asarray(sel2, bf16), w2=w2m,
        s2=p['conv2_b'].reshape(1, 64).astype(jnp.float32),
        sel3=jnp.asarray(sel3, bf16), w3=w3m,
        s3=p['conv3_b'].reshape(1, 64).astype(jnp.float32),
        fmask=jnp.asarray(fmask, jnp.float32),
        wf1=wf1m, bf1=p['fc1_b'].reshape(1, 512).astype(jnp.float32),
        wf2=wf2m,
        bf2=jnp.pad(p['fc2_b'], (0, N_OUT_PAD - N_ACTIONS))
            .reshape(1, N_OUT_PAD).astype(jnp.float32),
    )


# -----------------------------------------------------------------------------
# Pure-JAX f32 reference (sanity check)
# -----------------------------------------------------------------------------
def reference_forward(params, x):
    x = x.astype(jnp.float32) / 255.0

    def conv(h, w, b, stride):
        y = jax.lax.conv_general_dilated(h, w, (stride, stride), 'VALID',
                                         dimension_numbers=('NCHW', 'OIHW', 'NCHW'))
        return y + b.reshape(1, -1, 1, 1)

    y = conv(x, params['conv1_w'], params['conv1_b'], 5)
    g = params['bn_gamma'].reshape(1, -1, 1, 1)
    bta = params['bn_beta'].reshape(1, -1, 1, 1)
    mu = params['bn_mean'].reshape(1, -1, 1, 1)
    var = params['bn_var'].reshape(1, -1, 1, 1)
    y = (y - mu) / jnp.sqrt(var + BN_EPS) * g + bta
    y = jnp.maximum(y, 0.0)
    y = jnp.maximum(conv(y, params['conv2_w'], params['conv2_b'], 2), 0.0)
    y = jnp.maximum(conv(y, params['conv3_w'], params['conv3_b'], 1), 0.0)
    y = y.reshape(y.shape[0], -1)
    y = jnp.maximum(y @ params['fc1_w'].T + params['fc1_b'], 0.0)
    return y @ params['fc2_w'].T + params['fc2_b']


if __name__ == "__main__":
    key = jax.random.PRNGKey(0)
    pkey, xkey = jax.random.split(key)
    params = init_params(pkey)
    prepped = prepare_params(params)

    # Input implied by the module: 4 stacked 84x84 frames -> Linear(64*4*4, ...)
    B = 2
    x = jax.random.uniform(xkey, (B, 4, 84, 84), jnp.float32, 0.0, 255.0)

    out = jax.block_until_ready(qnetwork_forward(prepped, x))
    assert out.shape == (B, N_ACTIONS), out.shape

    ref = jax.block_until_ready(reference_forward(params, x))
    # bf16 MXU inputs / bf16 activation hops -> relaxed tolerance.
    assert jnp.allclose(out, ref, rtol=3e-2, atol=3e-2), (out, ref)

    print("KERNEL_OK")
</pallas_src>

<mosaic_0001>
module attributes {stable_mosaic.version = 11 : i64} {
  func.func @_qnet_kernel(%arg0: i32, %arg1: memref<1x256x256xbf16, #tpu.memory_space<vmem>>, %arg2: memref<256x32xbf16, #tpu.memory_space<vmem>>, %arg3: memref<1x32xf32, #tpu.memory_space<vmem>>, %arg4: memref<1200x256xbf16, #tpu.memory_space<vmem>>, %arg5: memref<800x64xbf16, #tpu.memory_space<vmem>>, %arg6: memref<1x64xf32, #tpu.memory_space<vmem>>, %arg7: memref<144x48xbf16, #tpu.memory_space<vmem>>, %arg8: memref<576x64xbf16, #tpu.memory_space<vmem>>, %arg9: memref<1x64xf32, #tpu.memory_space<vmem>>, %arg10: memref<16x1024xf32, #tpu.memory_space<vmem>>, %arg11: memref<1024x512xbf16, #tpu.memory_space<vmem>>, %arg12: memref<1x512xf32, #tpu.memory_space<vmem>>, %arg13: memref<512x128xbf16, #tpu.memory_space<vmem>>, %arg14: memref<1x128xf32, #tpu.memory_space<vmem>>, %arg15: memref<1x8x128xf32, #tpu.memory_space<vmem>>) attributes {dimension_semantics = [#tpu.dimension_semantics<parallel>], iteration_bounds = array<i64: 2>, scalar_prefetch = 0 : i64, scratch_operands = 0 : i64, tpu.core_type = #tpu.core_type<tc>, window_params = [{transform_indices = @transform_0, window_bounds = array<i64: 1, 256, 256>}, {pipeline_mode = #tpu.pipeline_mode<synchronous>, transform_indices = @transform_1, window_bounds = array<i64: 256, 32>}, {pipeline_mode = #tpu.pipeline_mode<synchronous>, transform_indices = @transform_2, window_bounds = array<i64: 1, 32>}, {pipeline_mode = #tpu.pipeline_mode<synchronous>, transform_indices = @transform_3, window_bounds = array<i64: 1200, 256>}, {pipeline_mode = #tpu.pipeline_mode<synchronous>, transform_indices = @transform_4, window_bounds = array<i64: 800, 64>}, {pipeline_mode = #tpu.pipeline_mode<synchronous>, transform_indices = @transform_5, window_bounds = array<i64: 1, 64>}, {pipeline_mode = #tpu.pipeline_mode<synchronous>, transform_indices = @transform_6, window_bounds = array<i64: 144, 48>}, {pipeline_mode = #tpu.pipeline_mode<synchronous>, transform_indices = @transform_7, window_bounds = array<i64: 576, 64>}, {pipeline_mode = #tpu.pipeline_mode<synchronous>, transform_indices = @transform_8, window_bounds = array<i64: 1, 64>}, {pipeline_mode = #tpu.pipeline_mode<synchronous>, transform_indices = @transform_9, window_bounds = array<i64: 16, 1024>}, {pipeline_mode = #tpu.pipeline_mode<synchronous>, transform_indices = @transform_10, window_bounds = array<i64: 1024, 512>}, {pipeline_mode = #tpu.pipeline_mode<synchronous>, transform_indices = @transform_11, window_bounds = array<i64: 1, 512>}, {pipeline_mode = #tpu.pipeline_mode<synchronous>, transform_indices = @transform_12, window_bounds = array<i64: 512, 128>}, {pipeline_mode = #tpu.pipeline_mode<synchronous>, transform_indices = @transform_13, window_bounds = array<i64: 1, 128>}, {transform_indices = @transform_14, window_bounds = array<i64: 1, 8, 128>}]} {
    %c0 = arith.constant 0 : index
    %c0_0 = arith.constant 0 : index
    %c0_1 = arith.constant 0 : index
    %0 = vector.load %arg1[%c0, %c0_0, %c0_1] : memref<1x256x256xbf16, #tpu.memory_space<vmem>>, vector<1x256x256xbf16>
    %1 = vector.shape_cast %0 : vector<1x256x256xbf16> to vector<256x256xbf16>
    %c0_2 = arith.constant 0 : index
    %c0_3 = arith.constant 0 : index
    %2 = vector.load %arg2[%c0_2, %c0_3] : memref<256x32xbf16, #tpu.memory_space<vmem>>, vector<256x32xbf16>
    %cst = arith.constant dense<0.000000e+00> : vector<256x32xf32>
    %3 = tpu.matmul %1, %2, %cst {dimension_numbers = #tpu.dot_dimension_numbers<[1], [0], [0], [1], [0, 0, 1, 1], [], []>} : vector<256x256xbf16>, vector<256x32xbf16>, vector<256x32xf32> -> vector<256x32xf32>
    %c0_4 = arith.constant 0 : index
    %c0_5 = arith.constant 0 : index
    %4 = vector.load %arg3[%c0_4, %c0_5] : memref<1x32xf32, #tpu.memory_space<vmem>>, vector<1x32xf32>
    %5 = vector.broadcast %4 : vector<1x32xf32> to vector<256x32xf32>
    %6 = arith.addf %3, %5 : vector<256x32xf32>
    %cst_6 = arith.constant 0.000000e+00 : f32
    %7 = vector.broadcast %cst_6 : f32 to vector<256x32xf32>
    %8 = arith.maximumf %6, %7 : vector<256x32xf32>
    %9 = arith.truncf %8 : vector<256x32xf32> to vector<256x32xbf16>
    %c0_7 = arith.constant 0 : index
    %c0_8 = arith.constant 0 : index
    %10 = vector.load %arg4[%c0_7, %c0_8] : memref<1200x256xbf16, #tpu.memory_space<vmem>>, vector<1200x256xbf16>
    %cst_9 = arith.constant dense<0.000000e+00> : vector<1200x32xf32>
    %11 = tpu.matmul %10, %9, %cst_9 {dimension_numbers = #tpu.dot_dimension_numbers<[1], [0], [0], [1], [0, 0, 1, 1], [], []>} : vector<1200x256xbf16>, vector<256x32xbf16>, vector<1200x32xf32> -> vector<1200x32xf32>
    %12 = arith.truncf %11 : vector<1200x32xf32> to vector<1200x32xbf16>
    %13 = vector.extract_strided_slice %12 {offsets = [0, 0], sizes = [48, 32], strides = [1, 1]} : vector<1200x32xbf16> to vector<48x32xbf16>
    %14 = vector.extract_strided_slice %12 {offsets = [48, 0], sizes = [48, 32], strides = [1, 1]} : vector<1200x32xbf16> to vector<48x32xbf16>
    %15 = vector.extract_strided_slice %12 {offsets = [96, 0], sizes = [48, 32], strides = [1, 1]} : vector<1200x32xbf16> to vector<48x32xbf16>
    %16 = vector.extract_strided_slice %12 {offsets = [144, 0], sizes = [48, 32], strides = [1, 1]} : vector<1200x32xbf16> to vector<48x32xbf16>
    %17 = vector.extract_strided_slice %12 {offsets = [192, 0], sizes = [48, 32], strides = [1, 1]} : vector<1200x32xbf16> to vector<48x32xbf16>
    %18 = vector.extract_strided_slice %12 {offsets = [240, 0], sizes = [48, 32], strides = [1, 1]} : vector<1200x32xbf16> to vector<48x32xbf16>
    %19 = vector.extract_strided_slice %12 {offsets = [288, 0], sizes = [48, 32], strides = [1, 1]} : vector<1200x32xbf16> to vector<48x32xbf16>
    %20 = vector.extract_strided_slice %12 {offsets = [336, 0], sizes = [48, 32], strides = [1, 1]} : vector<1200x32xbf16> to vector<48x32xbf16>
    %21 = vector.extract_strided_slice %12 {offsets = [384, 0], sizes = [48, 32], strides = [1, 1]} : vector<1200x32xbf16> to vector<48x32xbf16>
    %22 = vector.extract_strided_slice %12 {offsets = [432, 0], sizes = [48, 32], strides = [1, 1]} : vector<1200x32xbf16> to vector<48x32xbf16>
    %23 = vector.extract_strided_slice %12 {offsets = [480, 0], sizes = [48, 32], strides = [1, 1]} : vector<1200x32xbf16> to vector<48x32xbf16>
    %24 = vector.extract_strided_slice %12 {offsets = [528, 0], sizes = [48, 32], strides = [1, 1]} : vector<1200x32xbf16> to vector<48x32xbf16>
    %25 = vector.extract_strided_slice %12 {offsets = [576, 0], sizes = [48, 32], strides = [1, 1]} : vector<1200x32xbf16> to vector<48x32xbf16>
    %26 = vector.extract_strided_slice %12 {offsets = [624, 0], sizes = [48, 32], strides = [1, 1]} : vector<1200x32xbf16> to vector<48x32xbf16>
    %27 = vector.extract_strided_slice %12 {offsets = [672, 0], sizes = [48, 32], strides = [1, 1]} : vector<1200x32xbf16> to vector<48x32xbf16>
    %28 = vector.extract_strided_slice %12 {offsets = [720, 0], sizes = [48, 32], strides = [1, 1]} : vector<1200x32xbf16> to vector<48x32xbf16>
    %29 = vector.extract_strided_slice %12 {offsets = [768, 0], sizes = [48, 32], strides = [1, 1]} : vector<1200x32xbf16> to vector<48x32xbf16>
    %30 = vector.extract_strided_slice %12 {offsets = [816, 0], sizes = [48, 32], strides = [1, 1]} : vector<1200x32xbf16> to vector<48x32xbf16>
    %31 = vector.extract_strided_slice %12 {offsets = [864, 0], sizes = [48, 32], strides = [1, 1]} : vector<1200x32xbf16> to vector<48x32xbf16>
    %32 = vector.extract_strided_slice %12 {offsets = [912, 0], sizes = [48, 32], strides = [1, 1]} : vector<1200x32xbf16> to vector<48x32xbf16>
    %33 = vector.extract_strided_slice %12 {offsets = [960, 0], sizes = [48, 32], strides = [1, 1]} : vector<1200x32xbf16> to vector<48x32xbf16>
    %34 = vector.extract_strided_slice %12 {offsets = [1008, 0], sizes = [48, 32], strides = [1, 1]} : vector<1200x32xbf16> to vector<48x32xbf16>
    %35 = vector.extract_strided_slice %12 {offsets = [1056, 0], sizes = [48, 32], strides = [1, 1]} : vector<1200x32xbf16> to vector<48x32xbf16>
    %36 = vector.extract_strided_slice %12 {offsets = [1104, 0], sizes = [48, 32], strides = [1, 1]} : vector<1200x32xbf16> to vector<48x32xbf16>
    %37 = vector.extract_strided_slice %12 {offsets = [1152, 0], sizes = [48, 32], strides = [1, 1]} : vector<1200x32xbf16> to vector<48x32xbf16>
    %38 = tpu.concatenate %13, %14, %15, %16, %17, %18, %19, %20, %21, %22, %23, %24, %25, %26, %27, %28 in 1 : vector<48x32xbf16>, vector<48x32xbf16>, vector<48x32xbf16>, vector<48x32xbf16>, vector<48x32xbf16>, vector<48x32xbf16>, vector<48x32xbf16>, vector<48x32xbf16>, vector<48x32xbf16>, vector<48x32xbf16>, vector<48x32xbf16>, vector<48x32xbf16>, vector<48x32xbf16>, vector<48x32xbf16>, vector<48x32xbf16>, vector<48x32xbf16> -> vector<48x512xbf16>
    %39 = tpu.concatenate %29, %30, %31, %32, %33, %34, %35, %36, %37 in 1 : vector<48x32xbf16>, vector<48x32xbf16>, vector<48x32xbf16>, vector<48x32xbf16>, vector<48x32xbf16>, vector<48x32xbf16>, vector<48x32xbf16>, vector<48x32xbf16>, vector<48x32xbf16> -> vector<48x288xbf16>
    %40 = tpu.concatenate %38, %39 in 1 : vector<48x512xbf16>, vector<48x288xbf16> -> vector<48x800xbf16>
    %c0_10 = arith.constant 0 : index
    %c0_11 = arith.constant 0 : index
    %41 = vector.load %arg5[%c0_10, %c0_11] : memref<800x64xbf16, #tpu.memory_space<vmem>>, vector<800x64xbf16>
    %cst_12 = arith.constant dense<0.000000e+00> : vector<48x64xf32>
    %42 = tpu.matmul %40, %41, %cst_12 {dimension_numbers = #tpu.dot_dimension_numbers<[1], [0], [0], [1], [0, 0, 1, 1], [], []>} : vector<48x800xbf16>, vector<800x64xbf16>, vector<48x64xf32> -> vector<48x64xf32>
    %c0_13 = arith.constant 0 : index
    %c0_14 = arith.constant 0 : index
    %43 = vector.load %arg6[%c0_13, %c0_14] : memref<1x64xf32, #tpu.memory_space<vmem>>, vector<1x64xf32>
    %44 = vector.broadcast %43 : vector<1x64xf32> to vector<48x64xf32>
    %45 = arith.addf %42, %44 : vector<48x64xf32>
    %cst_15 = arith.constant 0.000000e+00 : f32
    %46 = vector.broadcast %cst_15 : f32 to vector<48x64xf32>
    %47 = arith.maximumf %45, %46 : vector<48x64xf32>
    %48 = arith.truncf %47 : vector<48x64xf32> to vector<48x64xbf16>
    %c0_16 = arith.constant 0 : index
    %c0_17 = arith.constant 0 : index
    %49 = vector.load %arg7[%c0_16, %c0_17] : memref<144x48xbf16, #tpu.memory_space<vmem>>, vector<144x48xbf16>
    %cst_18 = arith.constant dense<0.000000e+00> : vector<144x64xf32>
    %50 = tpu.matmul %49, %48, %cst_18 {dimension_numbers = #tpu.dot_dimension_numbers<[1], [0], [0], [1], [0, 0, 1, 1], [], []>} : vector<144x48xbf16>, vector<48x64xbf16>, vector<144x64xf32> -> vector<144x64xf32>
    %51 = arith.truncf %50 : vector<144x64xf32> to vector<144x64xbf16>
    %52 = vector.extract_strided_slice %51 {offsets = [0, 0], sizes = [16, 64], strides = [1, 1]} : vector<144x64xbf16> to vector<16x64xbf16>
    %53 = vector.extract_strided_slice %51 {offsets = [16, 0], sizes = [16, 64], strides = [1, 1]} : vector<144x64xbf16> to vector<16x64xbf16>
    %54 = vector.extract_strided_slice %51 {offsets = [32, 0], sizes = [16, 64], strides = [1, 1]} : vector<144x64xbf16> to vector<16x64xbf16>
    %55 = vector.extract_strided_slice %51 {offsets = [48, 0], sizes = [16, 64], strides = [1, 1]} : vector<144x64xbf16> to vector<16x64xbf16>
    %56 = vector.extract_strided_slice %51 {offsets = [64, 0], sizes = [16, 64], strides = [1, 1]} : vector<144x64xbf16> to vector<16x64xbf16>
    %57 = vector.extract_strided_slice %51 {offsets = [80, 0], sizes = [16, 64], strides = [1, 1]} : vector<144x64xbf16> to vector<16x64xbf16>
    %58 = vector.extract_strided_slice %51 {offsets = [96, 0], sizes = [16, 64], strides = [1, 1]} : vector<144x64xbf16> to vector<16x64xbf16>
    %59 = vector.extract_strided_slice %51 {offsets = [112, 0], sizes = [16, 64], strides = [1, 1]} : vector<144x64xbf16> to vector<16x64xbf16>
    %60 = vector.extract_strided_slice %51 {offsets = [128, 0], sizes = [16, 64], strides = [1, 1]} : vector<144x64xbf16> to vector<16x64xbf16>
    %61 = tpu.concatenate %52, %53, %54, %55, %56, %57, %58, %59, %60 in 1 : vector<16x64xbf16>, vector<16x64xbf16>, vector<16x64xbf16>, vector<16x64xbf16>, vector<16x64xbf16>, vector<16x64xbf16>, vector<16x64xbf16>, vector<16x64xbf16>, vector<16x64xbf16> -> vector<16x576xbf16>
    %c0_19 = arith.constant 0 : index
    %c0_20 = arith.constant 0 : index
    %62 = vector.load %arg8[%c0_19, %c0_20] : memref<576x64xbf16, #tpu.memory_space<vmem>>, vector<576x64xbf16>
    %cst_21 = arith.constant dense<0.000000e+00> : vector<16x64xf32>
    %63 = tpu.matmul %61, %62, %cst_21 {dimension_numbers = #tpu.dot_dimension_numbers<[1], [0], [0], [1], [0, 0, 1, 1], [], []>} : vector<16x576xbf16>, vector<576x64xbf16>, vector<16x64xf32> -> vector<16x64xf32>
    %c0_22 = arith.constant 0 : index
    %c0_23 = arith.constant 0 : index
    %64 = vector.load %arg9[%c0_22, %c0_23] : memref<1x64xf32, #tpu.memory_space<vmem>>, vector<1x64xf32>
    %65 = vector.broadcast %64 : vector<1x64xf32> to vector<16x64xf32>
    %66 = arith.addf %63, %65 : vector<16x64xf32>
    %cst_24 = arith.constant 0.000000e+00 : f32
    %67 = vector.broadcast %cst_24 : f32 to vector<16x64xf32>
    %68 = arith.maximumf %66, %67 : vector<16x64xf32>
    %69 = tpu.concatenate %68, %68, %68, %68, %68, %68, %68, %68, %68, %68, %68, %68, %68, %68, %68, %68 in 1 : vector<16x64xf32>, vector<16x64xf32>, vector<16x64xf32>, vector<16x64xf32>, vector<16x64xf32>, vector<16x64xf32>, vector<16x64xf32>, vector<16x64xf32>, vector<16x64xf32>, vector<16x64xf32>, vector<16x64xf32>, vector<16x64xf32>, vector<16x64xf32>, vector<16x64xf32>, vector<16x64xf32>, vector<16x64xf32> -> vector<16x1024xf32>
    %c0_25 = arith.constant 0 : index
    %c0_26 = arith.constant 0 : index
    %70 = vector.load %arg10[%c0_25, %c0_26] : memref<16x1024xf32, #tpu.memory_space<vmem>>, vector<16x1024xf32>
    %71 = arith.mulf %69, %70 : vector<16x1024xf32>
    %cst_27 = arith.constant dense<0.000000e+00> : vector<1024xf32>
    %72 = vector.multi_reduction <add>, %71, %cst_27 [0] : vector<16x1024xf32> to vector<1024xf32>
    %73 = vector.shape_cast %72 : vector<1024xf32> to vector<1x1024xf32>
    %74 = arith.truncf %73 : vector<1x1024xf32> to vector<1x1024xbf16>
    %c0_28 = arith.constant 0 : index
    %c0_29 = arith.constant 0 : index
    %75 = vector.load %arg11[%c0_28, %c0_29] : memref<1024x512xbf16, #tpu.memory_space<vmem>>, vector<1024x512xbf16>
    %cst_30 = arith.constant dense<0.000000e+00> : vector<1x512xf32>
    %76 = tpu.matmul %74, %75, %cst_30 {dimension_numbers = #tpu.dot_dimension_numbers<[1], [0], [0], [1], [0, 0, 1, 1], [], []>} : vector<1x1024xbf16>, vector<1024x512xbf16>, vector<1x512xf32> -> vector<1x512xf32>
    %c0_31 = arith.constant 0 : index
    %c0_32 = arith.constant 0 : index
    %77 = vector.load %arg12[%c0_31, %c0_32] : memref<1x512xf32, #tpu.memory_space<vmem>>, vector<1x512xf32>
    %78 = arith.addf %76, %77 : vector<1x512xf32>
    %cst_33 = arith.constant 0.000000e+00 : f32
    %79 = vector.broadcast %cst_33 : f32 to vector<1x512xf32>
    %80 = arith.maximumf %78, %79 : vector<1x512xf32>
    %81 = arith.truncf %80 : vector<1x512xf32> to vector<1x512xbf16>
    %c0_34 = arith.constant 0 : index
    %c0_35 = arith.constant 0 : index
    %82 = vector.load %arg13[%c0_34, %c0_35] : memref<512x128xbf16, #tpu.memory_space<vmem>>, vector<512x128xbf16>
    %cst_36 = arith.constant dense<0.000000e+00> : vector<1x128xf32>
    %83 = tpu.matmul %81, %82, %cst_36 {dimension_numbers = #tpu.dot_dimension_numbers<[1], [0], [0], [1], [0, 0, 1, 1], [], []>} : vector<1x512xbf16>, vector<512x128xbf16>, vector<1x128xf32> -> vector<1x128xf32>
    %c0_37 = arith.constant 0 : index
    %c0_38 = arith.constant 0 : index
    %84 = vector.load %arg14[%c0_37, %c0_38] : memref<1x128xf32, #tpu.memory_space<vmem>>, vector<1x128xf32>
    %85 = arith.addf %83, %84 : vector<1x128xf32>
    %86 = vector.shape_cast %85 : vector<1x128xf32> to vector<1x128xf32>
    %87 = vector.broadcast %86 : vector<1x128xf32> to vector<8x128xf32>
    %c0_39 = arith.constant 0 : index
    %c0_40 = arith.constant 0 : index
    %c0_41 = arith.constant 0 : index
    %88 = vector.load %arg15[%c0_39, %c0_40, %c0_41] : memref<1x8x128xf32, #tpu.memory_space<vmem>>, vector<1x8x128xf32>
    %89 = vector.shape_cast %88 : vector<1x8x128xf32> to vector<8x128xf32>
    %90 = vector.shape_cast %87 : vector<8x128xf32> to vector<1x8x128xf32>
    tpu.vector_store %arg15[%c0_39, %c0_40, %c0_41], %90 {strides = array<i32>} : memref<1x8x128xf32, #tpu.memory_space<vmem>>, vector<1x8x128xf32>,
    return
  }
  func.func @transform_0(%arg0: i32) -> (i32, i32, i32) {
    %c0_i32 = arith.constant 0 : i32
    %c0_i32_0 = arith.constant 0 : i32
    %c0_i32_1 = arith.constant 0 : i32
    return %arg0, %c0_i32, %c0_i32_0 : i32, i32, i32
  }
  func.func @transform_1(%arg0: i32) -> (i32, i32) {
    %c0_i32 = arith.constant 0 : i32
    %c0_i32_0 = arith.constant 0 : i32
    %c0_i32_1 = arith.constant 0 : i32
    return %c0_i32, %c0_i32_0 : i32, i32
  }
  func.func @transform_2(%arg0: i32) -> (i32, i32) {
    %c0_i32 = arith.constant 0 : i32
    %c0_i32_0 = arith.constant 0 : i32
    %c0_i32_1 = arith.constant 0 : i32
    return %c0_i32, %c0_i32_0 : i32, i32
  }
  func.func @transform_3(%arg0: i32) -> (i32, i32) {
    %c0_i32 = arith.constant 0 : i32
    %c0_i32_0 = arith.constant 0 : i32
    %c0_i32_1 = arith.constant 0 : i32
    return %c0_i32, %c0_i32_0 : i32, i32
  }
  func.func @transform_4(%arg0: i32) -> (i32, i32) {
    %c0_i32 = arith.constant 0 : i32
    %c0_i32_0 = arith.constant 0 : i32
    %c0_i32_1 = arith.constant 0 : i32
    return %c0_i32, %c0_i32_0 : i32, i32
  }
  func.func @transform_5(%arg0: i32) -> (i32, i32) {
    %c0_i32 = arith.constant 0 : i32
    %c0_i32_0 = arith.constant 0 : i32
    %c0_i32_1 = arith.constant 0 : i32
    return %c0_i32, %c0_i32_0 : i32, i32
  }
  func.func @transform_6(%arg0: i32) -> (i32, i32) {
    %c0_i32 = arith.constant 0 : i32
    %c0_i32_0 = arith.constant 0 : i32
    %c0_i32_1 = arith.constant 0 : i32
    return %c0_i32, %c0_i32_0 : i32, i32
  }
  func.func @transform_7(%arg0: i32) -> (i32, i32) {
    %c0_i32 = arith.constant 0 : i32
    %c0_i32_0 = arith.constant 0 : i32
    %c0_i32_1 = arith.constant 0 : i32
    return %c0_i32, %c0_i32_0 : i32, i32
  }
  func.func @transform_8(%arg0: i32) -> (i32, i32) {
    %c0_i32 = arith.constant 0 : i32
    %c0_i32_0 = arith.constant 0 : i32
    %c0_i32_1 = arith.constant 0 : i32
    return %c0_i32, %c0_i32_0 : i32, i32
  }
  func.func @transform_9(%arg0: i32) -> (i32, i32) {
    %c0_i32 = arith.constant 0 : i32
    %c0_i32_0 = arith.constant 0 : i32
    %c0_i32_1 = arith.constant 0 : i32
    return %c0_i32, %c0_i32_0 : i32, i32
  }
  func.func @transform_10(%arg0: i32) -> (i32, i32) {
    %c0_i32 = arith.constant 0 : i32
    %c0_i32_0 = arith.constant 0 : i32
    %c0_i32_1 = arith.constant 0 : i32
    return %c0_i32, %c0_i32_0 : i32, i32
  }
  func.func @transform_11(%arg0: i32) -> (i32, i32) {
    %c0_i32 = arith.constant 0 : i32
    %c0_i32_0 = arith.constant 0 : i32
    %c0_i32_1 = arith.constant 0 : i32
    return %c0_i32, %c0_i32_0 : i32, i32
  }
  func.func @transform_12(%arg0: i32) -> (i32, i32) {
    %c0_i32 = arith.constant 0 : i32
    %c0_i32_0 = arith.constant 0 : i32
    %c0_i32_1 = arith.constant 0 : i32
    return %c0_i32, %c0_i32_0 : i32, i32
  }
  func.func @transform_13(%arg0: i32) -> (i32, i32) {
    %c0_i32 = arith.constant 0 : i32
    %c0_i32_0 = arith.constant 0 : i32
    %c0_i32_1 = arith.constant 0 : i32
    return %c0_i32, %c0_i32_0 : i32, i32
  }
  func.func @transform_14(%arg0: i32) -> (i32, i32, i32) {
    %c0_i32 = arith.constant 0 : i32
    %c0_i32_0 = arith.constant 0 : i32
    %c0_i32_1 = arith.constant 0 : i32
    return %arg0, %c0_i32, %c0_i32_0 : i32, i32, i32
  }
}

</mosaic_0001>

<llo_original>
// kernel: qnetwork_forward.1
$region0: #{qnetwork_forward.1}
  #allocation0 [shape = 'u32[]', space=smem, size = 0x4, offset = 0x4, fixed_abs, tag = 'smem constant byte address 0x4 - core index']
  #allocation1 [shape = 'u32[144,128]{1,0:T(1,128)}', space=vmem, size = 0x12000, scoped, tag = 'internal scratch']
  %s0 = inlined_call_operand.vmem [shape: bf16[2,256,256], index: 0, kind: input, shape index: {}]
  %s1 = inlined_call_operand.vmem [shape: bf16[256,32], index: 1, kind: input, shape index: {}]
  %s2 = inlined_call_operand.vmem [shape: f32[1,32], index: 2, kind: input, shape index: {}]
  %s3 = inlined_call_operand.vmem [shape: bf16[1200,256], index: 3, kind: input, shape index: {}]
  %s4 = inlined_call_operand.vmem [shape: bf16[800,64], index: 4, kind: input, shape index: {}]
  %s5 = inlined_call_operand.vmem [shape: f32[1,64], index: 5, kind: input, shape index: {}]
  %s6 = inlined_call_operand.vmem [shape: bf16[144,48], index: 6, kind: input, shape index: {}]
  %s7 = inlined_call_operand.vmem [shape: bf16[576,64], index: 7, kind: input, shape index: {}]
  %s8 = inlined_call_operand.vmem [shape: f32[1,64], index: 8, kind: input, shape index: {}]
  %s9 = inlined_call_operand.vmem [shape: f32[16,1024], index: 9, kind: input, shape index: {}]
  %s10 = inlined_call_operand.vmem [shape: bf16[1024,512], index: 10, kind: input, shape index: {}]
  %s11 = inlined_call_operand.vmem [shape: f32[1,512], index: 11, kind: input, shape index: {}]
  %s12 = inlined_call_operand.vmem [shape: bf16[512,128], index: 12, kind: input, shape index: {}]
  %s13 = inlined_call_operand.vmem [shape: f32[1,128], index: 13, kind: input, shape index: {}]
  %s14 = inlined_call_operand.vmem [shape: f32[2,8,128], index: 14, kind: output, shape index: {}]
  %s15 = sld [smem:[#allocation0]]
  $region89: #{qnetwork_forward.1} parent=0
    _
  %s17 = ssub.s32 1, %s15
  %s18 = scalar_select 0, %s17, %s15
  loop: start=0, step=1, limit=4
  $region2: #{qnetwork_forward.1} parent=0 // loop_pre_header
    _
  $region3: #{qnetwork_forward.1} parent=0 // loop_header
    %s20 = sphi 0, %s24
    %p21 = scmp.ge.s32.totalorder %s20, 4
    %s30 = sphi 0, %s32
    %s33 = sphi 0, %s30
    %s34 = sphi 0, %s33
    %s50 = sphi 0, %s34
    %s54 = sphi 0, %s54
    %s56 = sphi 0, %s54
    %s57 = sphi 0, %s56
    %s71 = sphi 0, %s57
    %s75 = sphi 0, %s75
    %s77 = sphi 0, %s75
    %s78 = sphi 0, %s77
    %s92 = sphi 0, %s78
    %s96 = sphi 0, %s96
    %s98 = sphi 0, %s96
    %s99 = sphi 0, %s98
    %s113 = sphi 0, %s99
    %s117 = sphi 0, %s117
    %s119 = sphi 0, %s117
    %s120 = sphi 0, %s119
    %s134 = sphi 0, %s120
    %s138 = sphi 0, %s138
    %s140 = sphi 0, %s138
    %s141 = sphi 0, %s140
    %s155 = sphi 0, %s141
    %s159 = sphi 0, %s159
    %s161 = sphi 0, %s159
    %s162 = sphi 0, %s161
    %s176 = sphi 0, %s162
    %s180 = sphi 0, %s180
    %s182 = sphi 0, %s180
    %s183 = sphi 0, %s182
    %s197 = sphi 0, %s183
    %s201 = sphi 0, %s201
    %s203 = sphi 0, %s201
    %s204 = sphi 0, %s203
    %s218 = sphi 0, %s204
    %s222 = sphi 0, %s222
    %s224 = sphi 0, %s222
    %s225 = sphi 0, %s224
    %s239 = sphi 0, %s225
    %s243 = sphi 0, %s243
    %s245 = sphi 0, %s243
    %s246 = sphi 0, %s245
    %s260 = sphi 0, %s246
    %s264 = sphi 0, %s264
    %s266 = sphi 0, %s264
    %s267 = sphi 0, %s266
    %s281 = sphi 0, %s267
    %s285 = sphi 0, %s285
    %s287 = sphi 0, %s285
    %s288 = sphi 0, %s287
    %s302 = sphi 0, %s288
    %s306 = sphi 0, %s306
    %s308 = sphi 0, %s306
    %s309 = sphi 0, %s308
    %s323 = sphi 0, %s309
    %s329 = sphi 0, %s331
    %s332 = sphi 0, %s329
    %s333 = sphi 0, %s332
    %s349 = sphi 0, %s333
  $region4: #{qnetwork_forward.1} parent=0 // loop_header_branch
    %23 = sbr.rel (%p21) target = $region8
  $region5: #{qnetwork_forward.1} parent=0 // loop_body
    %s25 = ssub.s32 %s20, 1
    %s26 = ssub.s32 %s20, 2
    %s27 = sadd.s32 %s20, 1
    %s28 = ssub.s32 %s20, %s27
    %p29 = scmp.eq.s32.totalorder %s28, 0
    %s31 = sadd.s32 %s30, 1
    %s32 = scalar_select %p29, %s30, %s31
    %p35 = pneg %p29
    %p36 = scmp.eq.s32.totalorder %s20, 1
    %p37 = por %p35, %p36
    %p38 = scmp.ne.s32.totalorder %s30, %s33
    %p39 = scmp.eq.s32.totalorder %s20, 0
    %p40 = por %p38, %p39
    %p41 = scmp.ne.s32.totalorder %s30, %s33
    %p42 = scmp.eq.s32.totalorder %s25, 1
    %p43 = por %p41, %p42
    %p44 = scmp.ne.s32.totalorder %s33, %s34
    %p45 = scmp.eq.s32.totalorder %s25, 0
    %p46 = por %p44, %p45
    %p47 = scmp.ne.s32.totalorder %s33, %s34
    %p48 = scmp.eq.s32.totalorder %s26, 1
    %p49 = por %p47, %p48
    %p51 = scmp.ne.s32.totalorder %s34, %s50
    %p52 = scmp.eq.s32.totalorder %s26, 0
    %p53 = por %p51, %p52
    %s55 = sadd.s32 %s54, 1
    %p58 = scmp.eq.s32.totalorder %s20, 1
    %p59 = scmp.ne.s32.totalorder %s54, %s56
    %p60 = scmp.eq.s32.totalorder %s20, 0
    %p61 = por %p59, %p60
    %p62 = scmp.ne.s32.totalorder %s54, %s56
    %p63 = scmp.eq.s32.totalorder %s25, 1
    %p64 = por %p62, %p63
    %p65 = scmp.ne.s32.totalorder %s56, %s57
    %p66 = scmp.eq.s32.totalorder %s25, 0
    %p67 = por %p65, %p66
    %p68 = scmp.ne.s32.totalorder %s56, %s57
    %p69 = scmp.eq.s32.totalorder %s26, 1
    %p70 = por %p68, %p69
    %p72 = scmp.ne.s32.totalorder %s57, %s71
    %p73 = scmp.eq.s32.totalorder %s26, 0
    %p74 = por %p72, %p73
    %s76 = sadd.s32 %s75, 1
    %p79 = scmp.eq.s32.totalorder %s20, 1
    %p80 = scmp.ne.s32.totalorder %s75, %s77
    %p81 = scmp.eq.s32.totalorder %s20, 0
    %p82 = por %p80, %p81
    %p83 = scmp.ne.s32.totalorder %s75, %s77
    %p84 = scmp.eq.s32.totalorder %s25, 1
    %p85 = por %p83, %p84
    %p86 = scmp.ne.s32.totalorder %s77, %s78
    %p87 = scmp.eq.s32.totalorder %s25, 0
    %p88 = por %p86, %p87
    %p89 = scmp.ne.s32.totalorder %s77, %s78
    %p90 = scmp.eq.s32.totalorder %s26, 1
    %p91 = por %p89, %p90
    %p93 = scmp.ne.s32.totalorder %s78, %s92
    %p94 = scmp.eq.s32.totalorder %s26, 0
    %p95 = por %p93, %p94
    %s97 = sadd.s32 %s96, 1
    %p100 = scmp.eq.s32.totalorder %s20, 1
    %p101 = scmp.ne.s32.totalorder %s96, %s98
    %p102 = scmp.eq.s32.totalorder %s20, 0
    %p103 = por %p101, %p102
    %p104 = scmp.ne.s32.totalorder %s96, %s98
    %p105 = scmp.eq.s32.totalorder %s25, 1
    %p106 = por %p104, %p105
    %p107 = scmp.ne.s32.totalorder %s98, %s99
    %p108 = scmp.eq.s32.totalorder %s25, 0
    %p109 = por %p107, %p108
    %p110 = scmp.ne.s32.totalorder %s98, %s99
    %p111 = scmp.eq.s32.totalorder %s26, 1
    %p112 = por %p110, %p111
    %p114 = scmp.ne.s32.totalorder %s99, %s113
    %p115 = scmp.eq.s32.totalorder %s26, 0
    %p116 = por %p114, %p115
    %s118 = sadd.s32 %s117, 1
    %p121 = scmp.eq.s32.totalorder %s20, 1
    %p122 = scmp.ne.s32.totalorder %s117, %s119
    %p123 = scmp.eq.s32.totalorder %s20, 0
    %p124 = por %p122, %p123
    %p125 = scmp.ne.s32.totalorder %s117, %s119
    %p126 = scmp.eq.s32.totalorder %s25, 1
    %p127 = por %p125, %p126
    %p128 = scmp.ne.s32.totalorder %s119, %s120
    %p129 = scmp.eq.s32.totalorder %s25, 0
    %p130 = por %p128, %p129
    %p131 = scmp.ne.s32.totalorder %s119, %s120
    %p132 = scmp.eq.s32.totalorder %s26, 1
    %p133 = por %p131, %p132
    %p135 = scmp.ne.s32.totalorder %s120, %s134
    %p136 = scmp.eq.s32.totalorder %s26, 0
    %p137 = por %p135, %p136
    %s139 = sadd.s32 %s138, 1
    %p142 = scmp.eq.s32.totalorder %s20, 1
    %p143 = scmp.ne.s32.totalorder %s138, %s140
    %p144 = scmp.eq.s32.totalorder %s20, 0
    %p145 = por %p143, %p144
    %p146 = scmp.ne.s32.totalorder %s138, %s140
    %p147 = scmp.eq.s32.totalorder %s25, 1
    %p148 = por %p146, %p147
    %p149 = scmp.ne.s32.totalorder %s140, %s141
    %p150 = scmp.eq.s32.totalorder %s25, 0
    %p151 = por %p149, %p150
    %p152 = scmp.ne.s32.totalorder %s140, %s141
    %p153 = scmp.eq.s32.totalorder %s26, 1
    %p154 = por %p152, %p153
    %p156 = scmp.ne.s32.totalorder %s141, %s155
    %p157 = scmp.eq.s32.totalorder %s26, 0
    %p158 = por %p156, %p157
    %s160 = sadd.s32 %s159, 1
    %p163 = scmp.eq.s32.totalorder %s20, 1
    %p164 = scmp.ne.s32.totalorder %s159, %s161
    %p165 = scmp.eq.s32.totalorder %s20, 0
    %p166 = por %p164, %p165
    %p167 = scmp.ne.s32.totalorder %s159, %s161
    %p168 = scmp.eq.s32.totalorder %s25, 1
    %p169 = por %p167, %p168
    %p170 = scmp.ne.s32.totalorder %s161, %s162
    %p171 = scmp.eq.s32.totalorder %s25, 0
    %p172 = por %p170, %p171
    %p173 = scmp.ne.s32.totalorder %s161, %s162
    %p174 = scmp.eq.s32.totalorder %s26, 1
    %p175 = por %p173, %p174
    %p177 = scmp.ne.s32.totalorder %s162, %s176
    %p178 = scmp.eq.s32.totalorder %s26, 0
    %p179 = por %p177, %p178
    %s181 = sadd.s32 %s180, 1
    %p184 = scmp.eq.s32.totalorder %s20, 1
    %p185 = scmp.ne.s32.totalorder %s180, %s182
    %p186 = scmp.eq.s32.totalorder %s20, 0
    %p187 = por %p185, %p186
    %p188 = scmp.ne.s32.totalorder %s180, %s182
    %p189 = scmp.eq.s32.totalorder %s25, 1
    %p190 = por %p188, %p189
    %p191 = scmp.ne.s32.totalorder %s182, %s183
    %p192 = scmp.eq.s32.totalorder %s25, 0
    %p193 = por %p191, %p192
    %p194 = scmp.ne.s32.totalorder %s182, %s183
    %p195 = scmp.eq.s32.totalorder %s26, 1
    %p196 = por %p194, %p195
    %p198 = scmp.ne.s32.totalorder %s183, %s197
    %p199 = scmp.eq.s32.totalorder %s26, 0
    %p200 = por %p198, %p199
    %s202 = sadd.s32 %s201, 1
    %p205 = scmp.eq.s32.totalorder %s20, 1
    %p206 = scmp.ne.s32.totalorder %s201, %s203
    %p207 = scmp.eq.s32.totalorder %s20, 0
    %p208 = por %p206, %p207
    %p209 = scmp.ne.s32.totalorder %s201, %s203
    %p210 = scmp.eq.s32.totalorder %s25, 1
    %p211 = por %p209, %p210
    %p212 = scmp.ne.s32.totalorder %s203, %s204
    %p213 = scmp.eq.s32.totalorder %s25, 0
    %p214 = por %p212, %p213
    %p215 = scmp.ne.s32.totalorder %s203, %s204
    %p216 = scmp.eq.s32.totalorder %s26, 1
    %p217 = por %p215, %p216
    %p219 = scmp.ne.s32.totalorder %s204, %s218
    %p220 = scmp.eq.s32.totalorder %s26, 0
    %p221 = por %p219, %p220
    %s223 = sadd.s32 %s222, 1
    %p226 = scmp.eq.s32.totalorder %s20, 1
    %p227 = scmp.ne.s32.totalorder %s222, %s224
    %p228 = scmp.eq.s32.totalorder %s20, 0
    %p229 = por %p227, %p228
    %p230 = scmp.ne.s32.totalorder %s222, %s224
    %p231 = scmp.eq.s32.totalorder %s25, 1
    %p232 = por %p230, %p231
    %p233 = scmp.ne.s32.totalorder %s224, %s225
    %p234 = scmp.eq.s32.totalorder %s25, 0
    %p235 = por %p233, %p234
    %p236 = scmp.ne.s32.totalorder %s224, %s225
    %p237 = scmp.eq.s32.totalorder %s26, 1
    %p238 = por %p236, %p237
    %p240 = scmp.ne.s32.totalorder %s225, %s239
    %p241 = scmp.eq.s32.totalorder %s26, 0
    %p242 = por %p240, %p241
    %s244 = sadd.s32 %s243, 1
    %p247 = scmp.eq.s32.totalorder %s20, 1
    %p248 = scmp.ne.s32.totalorder %s243, %s245
    %p249 = scmp.eq.s32.totalorder %s20, 0
    %p250 = por %p248, %p249
    %p251 = scmp.ne.s32.totalorder %s243, %s245
    %p252 = scmp.eq.s32.totalorder %s25, 1
    %p253 = por %p251, %p252
    %p254 = scmp.ne.s32.totalorder %s245, %s246
    %p255 = scmp.eq.s32.totalorder %s25, 0
    %p256 = por %p254, %p255
    %p257 = scmp.ne.s32.totalorder %s245, %s246
    %p258 = scmp.eq.s32.totalorder %s26, 1
    %p259 = por %p257, %p258
    %p261 = scmp.ne.s32.totalorder %s246, %s260
    %p262 = scmp.eq.s32.totalorder %s26, 0
    %p263 = por %p261, %p262
    %s265 = sadd.s32 %s264, 1
    %p268 = scmp.eq.s32.totalorder %s20, 1
    %p269 = scmp.ne.s32.totalorder %s264, %s266
    %p270 = scmp.eq.s32.totalorder %s20, 0
    %p271 = por %p269, %p270
    %p272 = scmp.ne.s32.totalorder %s264, %s266
    %p273 = scmp.eq.s32.totalorder %s25, 1
    %p274 = por %p272, %p273
    %p275 = scmp.ne.s32.totalorder %s266, %s267
    %p276 = scmp.eq.s32.totalorder %s25, 0
    %p277 = por %p275, %p276
    %p278 = scmp.ne.s32.totalorder %s266, %s267
    %p279 = scmp.eq.s32.totalorder %s26, 1
    %p280 = por %p278, %p279
    %p282 = scmp.ne.s32.totalorder %s267, %s281
    %p283 = scmp.eq.s32.totalorder %s26, 0
    %p284 = por %p282, %p283
    %s286 = sadd.s32 %s285, 1
    %p289 = scmp.eq.s32.totalorder %s20, 1
    %p290 = scmp.ne.s32.totalorder %s285, %s287
    %p291 = scmp.eq.s32.totalorder %s20, 0
    %p292 = por %p290, %p291
    %p293 = scmp.ne.s32.totalorder %s285, %s287
    %p294 = scmp.eq.s32.totalorder %s25, 1
    %p295 = por %p293, %p294
    %p296 = scmp.ne.s32.totalorder %s287, %s288
    %p297 = scmp.eq.s32.totalorder %s25, 0
    %p298 = por %p296, %p297
    %p299 = scmp.ne.s32.totalorder %s287, %s288
    %p300 = scmp.eq.s32.totalorder %s26, 1
    %p301 = por %p299, %p300
    %p303 = scmp.ne.s32.totalorder %s288, %s302
    %p304 = scmp.eq.s32.totalorder %s26, 0
    %p305 = por %p303, %p304
    %s307 = sadd.s32 %s306, 1
    %p310 = scmp.eq.s32.totalorder %s20, 1
    %p311 = scmp.ne.s32.totalorder %s306, %s308
    %p312 = scmp.eq.s32.totalorder %s20, 0
    %p313 = por %p311, %p312
    %p314 = scmp.ne.s32.totalorder %s306, %s308
    %p315 = scmp.eq.s32.totalorder %s25, 1
    %p316 = por %p314, %p315
    %p317 = scmp.ne.s32.totalorder %s308, %s309
    %p318 = scmp.eq.s32.totalorder %s25, 0
    %p319 = por %p317, %p318
    %p320 = scmp.ne.s32.totalorder %s308, %s309
    %p321 = scmp.eq.s32.totalorder %s26, 1
    %p322 = por %p320, %p321
    %p324 = scmp.ne.s32.totalorder %s309, %s323
    %p325 = scmp.eq.s32.totalorder %s26, 0
    %p326 = por %p324, %p325
    %s327 = ssub.s32 %s20, %s27
    %p328 = scmp.eq.s32.totalorder %s327, 0
    %s330 = sadd.s32 %s329, 1
    %s331 = scalar_select %p328, %s329, %s330
    %p334 = pneg %p328
    %p335 = scmp.eq.s32.totalorder %s20, 1
    %p336 = por %p334, %p335
    %p337 = scmp.ne.s32.totalorder %s329, %s332
    %p338 = scmp.eq.s32.totalorder %s20, 0
    %p339 = por %p337, %p338
    %p340 = scmp.ne.s32.totalorder %s329, %s332
    %p341 = scmp.eq.s32.totalorder %s25, 1
    %p342 = por %p340, %p341
    %p343 = scmp.ne.s32.totalorder %s332, %s333
    %p344 = scmp.eq.s32.totalorder %s25, 0
    %p345 = por %p343, %p344
    %p346 = scmp.ne.s32.totalorder %s332, %s333
    %p347 = scmp.eq.s32.totalorder %s26, 1
    %p348 = por %p346, %p347
    %p350 = scmp.ne.s32.totalorder %s333, %s349
    %p351 = scmp.eq.s32.totalorder %s26, 0
    %p352 = por %p350, %p351
    %p353 = scmp.le.s32.totalorder 1, %s20
    %p354 = scmp.lt.s32.totalorder %s20, 3
    %p355 = pnand %p353, %p354
    %p356 = pneg %p355
    // Predicated region
    $region9: #{qnetwork_forward.1} parent=5 // pred_check
      _
    $region10: #{qnetwork_forward.1} parent=5 // pred_check_branch
      %358 = sbr.rel (%p355) target = $region12
    $region11: #{qnetwork_forward.1} parent=5 // pred_region
      %s359 = ssub.s32 %s20, 1
      // Predicated region
      $region13: #{qnetwork_forward.1} parent=11 // pred_check
        %p360 = pneg %p67
      $region14: #{qnetwork_forward.1} parent=11 // pred_check_branch
        %362 = sbr.rel (%p360) target = $region16
      $region15: #{qnetwork_forward.1} parent=11 // pred_region
        _
      $region16: #{qnetwork_forward.1} parent=11 // pred_fallthru
        _
      // Predicated region
      $region17: #{qnetwork_forward.1} parent=11 // pred_check
        %p363 = pneg %p88
      $region18: #{qnetwork_forward.1} parent=11 // pred_check_branch
        %365 = sbr.rel (%p363) target = $region20
      $region19: #{qnetwork_forward.1} parent=11 // pred_region
        _
      $region20: #{qnetwork_forward.1} parent=11 // pred_fallthru
        _
      // Predicated region
      $region21: #{qnetwork_forward.1} parent=11 // pred_check
        %p366 = pneg %p109
      $region22: #{qnetwork_forward.1} parent=11 // pred_check_branch
        %368 = sbr.rel (%p366) target = $region24
      $region23: #{qnetwork_forward.1} parent=11 // pred_region
        _
      $region24: #{qnetwork_forward.1} parent=11 // pred_fallthru
        _
      // Predicated region
      $region25: #{qnetwork_forward.1} parent=11 // pred_check
        %p369 = pneg %p130
      $region26: #{qnetwork_forward.1} parent=11 // pred_check_branch
        %371 = sbr.rel (%p369) target = $region28
      $region27: #{qnetwork_forward.1} parent=11 // pred_region
        _
      $region28: #{qnetwork_forward.1} parent=11 // pred_fallthru
        _
      // Predicated region
      $region29: #{qnetwork_forward.1} parent=11 // pred_check
        %p372 = pneg %p151
      $region30: #{qnetwork_forward.1} parent=11 // pred_check_branch
        %374 = sbr.rel (%p372) target = $region32
      $region31: #{qnetwork_forward.1} parent=11 // pred_region
        _
      $region32: #{qnetwork_forward.1} parent=11 // pred_fallthru
        _
      // Predicated region
      $region33: #{qnetwork_forward.1} parent=11 // pred_check
        %p375 = pneg %p172
      $region34: #{qnetwork_forward.1} parent=11 // pred_check_branch
        %377 = sbr.rel (%p375) target = $region36
      $region35: #{qnetwork_forward.1} parent=11 // pred_region
        _
      $region36: #{qnetwork_forward.1} parent=11 // pred_fallthru
        _
      // Predicated region
      $region37: #{qnetwork_forward.1} parent=11 // pred_check
        %p378 = pneg %p193
      $region38: #{qnetwork_forward.1} parent=11 // pred_check_branch
        %380 = sbr.rel (%p378) target = $region40
      $region39: #{qnetwork_forward.1} parent=11 // pred_region
        _
      $region40: #{qnetwork_forward.1} parent=11 // pred_fallthru
        _
      // Predicated region
      $region41: #{qnetwork_forward.1} parent=11 // pred_check
        %p381 = pneg %p214
      $region42: #{qnetwork_forward.1} parent=11 // pred_check_branch
        %383 = sbr.rel (%p381) target = $region44
      $region43: #{qnetwork_forward.1} parent=11 // pred_region
        _
      $region44: #{qnetwork_forward.1} parent=11 // pred_fallthru
        _
      // Predicated region
      $region45: #{qnetwork_forward.1} parent=11 // pred_check
        %p384 = pneg %p235
      $region46: #{qnetwork_forward.1} parent=11 // pred_check_branch
        %386 = sbr.rel (%p384) target = $region48
      $region47: #{qnetwork_forward.1} parent=11 // pred_region
        _
      $region48: #{qnetwork_forward.1} parent=11 // pred_fallthru
        _
      // Predicated region
      $region49: #{qnetwork_forward.1} parent=11 // pred_check
        %p387 = pneg %p256
      $region50: #{qnetwork_forward.1} parent=11 // pred_check_branch
        %389 = sbr.rel (%p387) target = $region52
      $region51: #{qnetwork_forward.1} parent=11 // pred_region
        _
      $region52: #{qnetwork_forward.1} parent=11 // pred_fallthru
        _
      // Predicated region
      $region53: #{qnetwork_forward.1} parent=11 // pred_check
        %p390 = pneg %p277
      $region54: #{qnetwork_forward.1} parent=11 // pred_check_branch
        %392 = sbr.rel (%p390) target = $region56
      $region55: #{qnetwork_forward.1} parent=11 // pred_region
        _
      $region56: #{qnetwork_forward.1} parent=11 // pred_fallthru
        _
      // Predicated region
      $region57: #{qnetwork_forward.1} parent=11 // pred_check
        %p393 = pneg %p298
      $region58: #{qnetwork_forward.1} parent=11 // pred_check_branch
        %395 = sbr.rel (%p393) target = $region60
      $region59: #{qnetwork_forward.1} parent=11 // pred_region
        _
      $region60: #{qnetwork_forward.1} parent=11 // pred_fallthru
        _
      // Predicated region
      $region61: #{qnetwork_forward.1} parent=11 // pred_check
        %p396 = pneg %p319
      $region62: #{qnetwork_forward.1} parent=11 // pred_check_branch
        %398 = sbr.rel (%p396) target = $region64
      $region63: #{qnetwork_forward.1} parent=11 // pred_region
        _
      $region64: #{qnetwork_forward.1} parent=11 // pred_fallthru
        _
    $region12: #{qnetwork_forward.1} parent=5 // pred_fallthru
      _
    %p399 = scmp.lt.s32.totalorder %s20, 2
    // Predicated region
    $region65: #{qnetwork_forward.1} parent=5 // pred_check
      %p400 = pneg %p399
    $region66: #{qnetwork_forward.1} parent=5 // pred_check_branch
      %402 = sbr.rel (%p400) target = $region68
    $region67: #{qnetwork_forward.1} parent=5 // pred_region
      // Predicated region
      $region69: #{qnetwork_forward.1} parent=67 // pred_check
        %p403 = pneg %p40
      $region70: #{qnetwork_forward.1} parent=67 // pred_check_branch
        %405 = sbr.rel (%p403) target = $region72
      $region71: #{qnetwork_forward.1} parent=67 // pred_region
        %p406 = scmp.lt.s32.totalorder %s20, 1
        %s407 = scalar_select %p406, %s20, 1
        %s408 = smul.addr %s407, 64
        %s409 = smul.addr %s408, 4
        %s410 = scalar_lea.vmem %s0, %s409
      $region72: #{qnetwork_forward.1} parent=67 // pred_fallthru
        _
    $region68: #{qnetwork_forward.1} parent=5 // pred_fallthru
      _
    %p411 = scmp.le.s32.totalorder 1, %s20
    %p412 = scmp.lt.s32.totalorder %s20, 3
    %p413 = pnand %p411, %p412
    %p414 = pneg %p413
    // Predicated region
    $region73: #{qnetwork_forward.1} parent=5 // pred_check
      _
    $region74: #{qnetwork_forward.1} parent=5 // pred_check_branch
      %416 = sbr.rel (%p413) target = $region76
    $region75: #{qnetwork_forward.1} parent=5 // pred_region
      %s417 = ssub.s32 %s20, 1
      %p418 = scmp.lt.s32.totalorder %s25, 1
      %s419 = scalar_select %p418, %s25, 1
      %s420 = smul.addr %s419, 64
      %s421 = smul.addr %s420, 4
      %s422 = scalar_lea.vmem %s0, %s421
      %p423 = pneg %p46
      %p424 = pneg %p43
      %p425 = pneg %p67
      %p426 = pneg %p64
      %p427 = pneg %p88
      %p428 = pneg %p85
      %p429 = pneg %p109
      %p430 = pneg %p106
      %p431 = pneg %p130
      %p432 = pneg %p127
      %p433 = pneg %p151
      %p434 = pneg %p148
      %p435 = pneg %p172
      %p436 = pneg %p169
      %p437 = pneg %p193
      %p438 = pneg %p190
      %p439 = pneg %p214
      %p440 = pneg %p211
      %p441 = pneg %p235
      %p442 = pneg %p232
      %p443 = pneg %p256
      %p444 = pneg %p253
      %p445 = pneg %p277
      %p446 = pneg %p274
      %p447 = pneg %p298
      %p448 = pneg %p295
      %p449 = pneg %p319
      %p450 = pneg %p316
      %p451 = pneg %p345
      %p452 = pneg %p342
      %p453 = scmp.lt.s32.totalorder %s25, 1
      %s454 = scalar_select %p453, %s25, 1
      %s455 = smul.addr %s454, 8
      %s456 = scalar_lea.vmem %s14, %s455
      %p457 = scmp.lt.s32.totalorder %s25, 1
      %s458 = scalar_select %p457, %s25, 1
      %s459 = smul.addr %s458, 64
      %s460 = smul.addr %s459, 4
      %s461 = scalar_lea.vmem %s0, %s460
      %p462 = scmp.lt.s32.totalorder %s25, 1
      %s463 = scalar_select %p462, %s25, 1
      %s464 = smul.addr %s463, 8
      %s465 = scalar_lea.vmem %s14, %s464
      %v467 = vld [vmem:[%s461] sm:$0xff]
      %v468 = vld [vmem:[%s461 + $0x8] sm:$0xff]
      %v469 = vld [vmem:[%s461 + $0x10] sm:$0xff]
      %v470 = vld [vmem:[%s461 + $0x18] sm:$0xff]
      %v471 = vld [vmem:[%s461 + $0x20] sm:$0xff]
      %v472 = vld [vmem:[%s461 + $0x28] sm:$0xff]
      %v473 = vld [vmem:[%s461 + $0x30] sm:$0xff]
      %v474 = vld [vmem:[%s461 + $0x38] sm:$0xff]
      %v475 = vld [vmem:[%s461 + $0x40] sm:$0xff]
      %v476 = vld [vmem:[%s461 + $0x48] sm:$0xff]
      %v477 = vld [vmem:[%s461 + $0x50] sm:$0xff]
      %v478 = vld [vmem:[%s461 + $0x58] sm:$0xff]
      %v479 = vld [vmem:[%s461 + $0x60] sm:$0xff]
      %v480 = vld [vmem:[%s461 + $0x68] sm:$0xff]
      %v481 = vld [vmem:[%s461 + $0x70] sm:$0xff]
      %v482 = vld [vmem:[%s461 + $0x78] sm:$0xff]
      %v483 = vld [vmem:[%s461 + $0x80] sm:$0xff]
      %v484 = vld [vmem:[%s461 + $0x88] sm:$0xff]
      %v485 = vld [vmem:[%s461 + $0x90] sm:$0xff]
      %v486 = vld [vmem:[%s461 + $0x98] sm:$0xff]
      %v487 = vld [vmem:[%s461 + $0xa0] sm:$0xff]
      %v488 = vld [vmem:[%s461 + $0xa8] sm:$0xff]
      %v489 = vld [vmem:[%s461 + $0xb0] sm:$0xff]
      %v490 = vld [vmem:[%s461 + $0xb8] sm:$0xff]
      %v491 = vld [vmem:[%s461 + $0xc0] sm:$0xff]
      %v492 = vld [vmem:[%s461 + $0xc8] sm:$0xff]
      %v493 = vld [vmem:[%s461 + $0xd0] sm:$0xff]
      %v494 = vld [vmem:[%s461 + $0xd8] sm:$0xff]
      %v495 = vld [vmem:[%s461 + $0xe0] sm:$0xff]
      %v496 = vld [vmem:[%s461 + $0xe8] sm:$0xff]
      %v497 = vld [vmem:[%s461 + $0xf0] sm:$0xff]
      %v498 = vld [vmem:[%s461 + $0xf8] sm:$0xff]
      %v499 = vld [vmem:[%s1] sm:$0xf]
      %v500 = vld [vmem:[%s1 + $0x4] sm:$0xf]
      %v501 = vld [vmem:[%s1 + $0x8] sm:$0xf]
      %v502 = vld [vmem:[%s1 + $0xc] sm:$0xf]
      %v503 = vld [vmem:[%s1 + $0x10] sm:$0xf]
      %v504 = vld [vmem:[%s1 + $0x14] sm:$0xf]
      %v505 = vld [vmem:[%s1 + $0x18] sm:$0xf]
      %v506 = vld [vmem:[%s1 + $0x1c] sm:$0xf]
      %v507 = vld [vmem:[%s1 + $0x20] sm:$0xf]
      %v508 = vld [vmem:[%s1 + $0x24] sm:$0xf]
      %v509 = vld [vmem:[%s1 + $0x28] sm:$0xf]
      %v510 = vld [vmem:[%s1 + $0x2c] sm:$0xf]
      %v511 = vld [vmem:[%s1 + $0x30] sm:$0xf]
      %v512 = vld [vmem:[%s1 + $0x34] sm:$0xf]
      %v513 = vld [vmem:[%s1 + $0x38] sm:$0xf]
      %v514 = vld [vmem:[%s1 + $0x3c] sm:$0xf]
      %v515 = vld [vmem:[%s1 + $0x40] sm:$0xf]
      %v516 = vld [vmem:[%s1 + $0x44] sm:$0xf]
      %v517 = vld [vmem:[%s1 + $0x48] sm:$0xf]
      %v518 = vld [vmem:[%s1 + $0x4c] sm:$0xf]
      %v519 = vld [vmem:[%s1 + $0x50] sm:$0xf]
      %v520 = vld [vmem:[%s1 + $0x54] sm:$0xf]
      %v521 = vld [vmem:[%s1 + $0x58] sm:$0xf]
      %v522 = vld [vmem:[%s1 + $0x5c] sm:$0xf]
      %v523 = vld [vmem:[%s1 + $0x60] sm:$0xf]
      %v524 = vld [vmem:[%s1 + $0x64] sm:$0xf]
      %v525 = vld [vmem:[%s1 + $0x68] sm:$0xf]
      %v526 = vld [vmem:[%s1 + $0x6c] sm:$0xf]
      %v527 = vld [vmem:[%s1 + $0x70] sm:$0xf]
      %v528 = vld [vmem:[%s1 + $0x74] sm:$0xf]
      %v529 = vld [vmem:[%s1 + $0x78] sm:$0xf]
      %v530 = vld [vmem:[%s1 + $0x7c] sm:$0xf]
      %v531 = vld [vmem:[%s2] sm:$0x1]
      %v533 = vlaneseq
      %v534 = vshrl.u32 %v533, 7
      %v535 = vsub.s32 0, %v534
      %v536 = vrot.slane %v531, %v535
      %v570 = vunpack.c.l.b16 %v467
      %v571 = vunpack.c.h.b16 %v467
      %v572 = vunpack.c.l.b16 %v468
      %v573 = vunpack.c.h.b16 %v468
      %v574 = vunpack.c.l.b16 %v469
      %v575 = vunpack.c.h.b16 %v469
      %v576 = vunpack.c.l.b16 %v470
      %v577 = vunpack.c.h.b16 %v470
      %v578 = vunpack.c.l.b16 %v471
      %v579 = vunpack.c.h.b16 %v471
      %v580 = vunpack.c.l.b16 %v472
      %v581 = vunpack.c.h.b16 %v472
      %v582 = vunpack.c.l.b16 %v473
      %v583 = vunpack.c.h.b16 %v473
      %v584 = vunpack.c.l.b16 %v474
      %v585 = vunpack.c.h.b16 %v474
      %v586 = vunpack.c.l.b16 %v475
      %v587 = vunpack.c.h.b16 %v475
      %v588 = vunpack.c.l.b16 %v476
      %v589 = vunpack.c.h.b16 %v476
      %v590 = vunpack.c.l.b16 %v477
      %v591 = vunpack.c.h.b16 %v477
      %v592 = vunpack.c.l.b16 %v478
      %v593 = vunpack.c.h.b16 %v478
      %v594 = vunpack.c.l.b16 %v479
      %v595 = vunpack.c.h.b16 %v479
      %v596 = vunpack.c.l.b16 %v480
      %v597 = vunpack.c.h.b16 %v480
      %v598 = vunpack.c.l.b16 %v481
      %v599 = vunpack.c.h.b16 %v481
      %v600 = vunpack.c.l.b16 %v482
      %v601 = vunpack.c.h.b16 %v482
      %v602 = vunpack.c.l.b16 %v483
      %v603 = vunpack.c.h.b16 %v483
      %v604 = vunpack.c.l.b16 %v484
      %v605 = vunpack.c.h.b16 %v484
      %v606 = vunpack.c.l.b16 %v485
      %v607 = vunpack.c.h.b16 %v485
      %v608 = vunpack.c.l.b16 %v486
      %v609 = vunpack.c.h.b16 %v486
      %v610 = vunpack.c.l.b16 %v487
      %v611 = vunpack.c.h.b16 %v487
      %v612 = vunpack.c.l.b16 %v488
      %v613 = vunpack.c.h.b16 %v488
      %v614 = vunpack.c.l.b16 %v489
      %v615 = vunpack.c.h.b16 %v489
      %v616 = vunpack.c.l.b16 %v490
      %v617 = vunpack.c.h.b16 %v490
      %v618 = vunpack.c.l.b16 %v491
      %v619 = vunpack.c.h.b16 %v491
      %v620 = vunpack.c.l.b16 %v492
      %v621 = vunpack.c.h.b16 %v492
      %v622 = vunpack.c.l.b16 %v493
      %v623 = vunpack.c.h.b16 %v493
      %v624 = vunpack.c.l.b16 %v494
      %v625 = vunpack.c.h.b16 %v494
      %v626 = vunpack.c.l.b16 %v495
      %v627 = vunpack.c.h.b16 %v495
      %v628 = vunpack.c.l.b16 %v496
      %v629 = vunpack.c.h.b16 %v496
      %v630 = vunpack.c.l.b16 %v497
      %v631 = vunpack.c.h.b16 %v497
      %v632 = vunpack.c.l.b16 %v498
      %v633 = vunpack.c.h.b16 %v498
      %v634 = vpack.c.b16 %v572, %v570
      %v635 = vpack.c.b16 %v573, %v571
      %v636 = vpack.c.b16 %v576, %v574
      %v637 = vpack.c.b16 %v577, %v575
      %v638 = vpack.c.b16 %v580, %v578
      %v639 = vpack.c.b16 %v581, %v579
      %v640 = vpack.c.b16 %v584, %v582
      %v641 = vpack.c.b16 %v585, %v583
      %v642 = vpack.c.b16 %v588, %v586
      %v643 = vpack.c.b16 %v589, %v587
      %v644 = vpack.c.b16 %v592, %v590
      %v645 = vpack.c.b16 %v593, %v591
      %v646 = vpack.c.b16 %v596, %v594
      %v647 = vpack.c.b16 %v597, %v595
      %v648 = vpack.c.b16 %v600, %v598
      %v649 = vpack.c.b16 %v601, %v599
      %v650 = vpack.c.b16 %v604, %v602
      %v651 = vpack.c.b16 %v605, %v603
      %v652 = vpack.c.b16 %v608, %v606
      %v653 = vpack.c.b16 %v609, %v607
      %v654 = vpack.c.b16 %v612, %v610
      %v655 = vpack.c.b16 %v613, %v611
      %v656 = vpack.c.b16 %v616, %v614
      %v657 = vpack.c.b16 %v617, %v615
      %v658 = vpack.c.b16 %v620, %v618
      %v659 = vpack.c.b16 %v621, %v619
      %v660 = vpack.c.b16 %v624, %v622
      %v661 = vpack.c.b16 %v625, %v623
      %v662 = vpack.c.b16 %v628, %v626
      %v663 = vpack.c.b16 %v629, %v627
      %v664 = vpack.c.b16 %v632, %v630
      %v665 = vpack.c.b16 %v633, %v631
      %v730 = vunpack.c.l.b16 %v499
      %v731 = vunpack.c.l.b16 %v500
      %v732 = vunpack.c.l.b16 %v501
      %v733 = vunpack.c.l.b16 %v502
      %v734 = vunpack.c.l.b16 %v503
      %v735 = vunpack.c.l.b16 %v504
      %v736 = vunpack.c.l.b16 %v505
      %v737 = vunpack.c.l.b16 %v506
      %v738 = vunpack.c.l.b16 %v507
      %v739 = vunpack.c.l.b16 %v508
      %v740 = vunpack.c.l.b16 %v509
      %v741 = vunpack.c.l.b16 %v510
      %v742 = vunpack.c.l.b16 %v511
      %v743 = vunpack.c.l.b16 %v512
      %v744 = vunpack.c.l.b16 %v513
      %v745 = vunpack.c.l.b16 %v514
      %v746 = vunpack.c.l.b16 %v515
      %v747 = vunpack.c.l.b16 %v516
      %v748 = vunpack.c.l.b16 %v517
      %v749 = vunpack.c.l.b16 %v518
      %v750 = vunpack.c.l.b16 %v519
      %v751 = vunpack.c.l.b16 %v520
      %v752 = vunpack.c.l.b16 %v521
      %v753 = vunpack.c.l.b16 %v522
      %v754 = vunpack.c.l.b16 %v523
      %v755 = vunpack.c.l.b16 %v524
      %v756 = vunpack.c.l.b16 %v525
      %v757 = vunpack.c.l.b16 %v526
      %v758 = vunpack.c.l.b16 %v527
      %v759 = vunpack.c.l.b16 %v528
      %v760 = vunpack.c.l.b16 %v529
      %v761 = vunpack.c.l.b16 %v530
      %v762 = vpack.c.b16 %v731, %v730
      %v763 = vpack.c.b16 %v733, %v732
      %v764 = vpack.c.b16 %v735, %v734
      %v765 = vpack.c.b16 %v737, %v736
      %v766 = vpack.c.b16 %v739, %v738
      %v767 = vpack.c.b16 %v741, %v740
      %v768 = vpack.c.b16 %v743, %v742
      %v769 = vpack.c.b16 %v745, %v744
      %v770 = vpack.c.b16 %v747, %v746
      %v771 = vpack.c.b16 %v749, %v748
      %v772 = vpack.c.b16 %v751, %v750
      %v773 = vpack.c.b16 %v753, %v752
      %v774 = vpack.c.b16 %v755, %v754
      %v775 = vpack.c.b16 %v757, %v756
      %v776 = vpack.c.b16 %v759, %v758
      %v777 = vpack.c.b16 %v761, %v760
      %794 = vmatprep.subr.bf16.mxu0 0
      %795 = vmatpush1.bf16.msra.mxu0 %v762
      %796 = vmatprep.subr.bf16.mxu0 0
      %797 = vmatpush1.bf16.msra.mxu0 %v763
      %798 = vmatprep.subr.bf16.mxu0 0
      %799 = vmatpush1.bf16.msra.mxu0 %v764
      %800 = vmatprep.subr.bf16.mxu0 0
      %801 = vmatpush1.bf16.msra.mxu0 %v765
      %802 = vmatprep.subr.bf16.mxu0 0
      %803 = vmatpush1.bf16.msra.mxu0 %v766
      %804 = vmatprep.subr.bf16.mxu0 0
      %805 = vmatpush1.bf16.msra.mxu0 %v767
      %806 = vmatprep.subr.bf16.mxu0 0
      %807 = vmatpush1.bf16.msra.mxu0 %v768
      %808 = vmatprep.subr.bf16.mxu0 0
      %809 = vmatpush1.bf16.msra.mxu0 %v769
      %810 = vmatprep.subr.bf16.mxu0 0
      %811 = vmatpush1.bf16.msra.mxu0 %v770
      %812 = vmatprep.subr.bf16.mxu0 0
      %813 = vmatpush1.bf16.msra.mxu0 %v771
      %814 = vmatprep.subr.bf16.mxu0 0
      %815 = vmatpush1.bf16.msra.mxu0 %v772
      %816 = vmatprep.subr.bf16.mxu0 0
      %817 = vmatpush1.bf16.msra.mxu0 %v773
      %818 = vmatprep.subr.bf16.mxu0 0
      %819 = vmatpush1.bf16.msra.mxu0 %v774
      %820 = vmatprep.subr.bf16.mxu0 0
      %821 = vmatpush1.bf16.msra.mxu0 %v775
      %822 = vmatprep.subr.bf16.mxu0 0
      %823 = vmatpush1.bf16.msra.mxu0 %v776
      %824 = vmatprep.subr.bf16.mxu0 0
      %825 = vmatpush1.bf16.msra.mxu0 %v777
      %826 = vmatprep.mubr.bf16.mxu0 %v635
      %827 = vmatmul.mubr.bf16.gmra.mrb[0].mxu0 %v634
      %v828 = vpop.f32.mrb[0].mxu0
      %v829 = vadd.f32 %v536, %v828
      %v830 = vpop.f32.mrb[0].mxu0
      %v831 = vpop.f32.mrb[0].mxu0
      %v832 = vadd.f32 %v536, %v831
      %v833 = vpop.f32.mrb[0].mxu0
      %834 = vmatprep.mubr.bf16.mxu0 %v637
      %835 = vmatmul.mubr.bf16.gmra.mrb[0].mxu0 %v636
      %v836 = vpop.f32.mrb[0].mxu0
      %v837 = vadd.f32 %v536, %v836
      %v838 = vpop.f32.mrb[0].mxu0
      %v839 = vpop.f32.mrb[0].mxu0
      %v840 = vadd.f32 %v536, %v839
      %v841 = vpop.f32.mrb[0].mxu0
      %842 = vmatprep.mubr.bf16.mxu0 %v639
      %843 = vmatmul.mubr.bf16.gmra.mrb[0].mxu0 %v638
      %v844 = vpop.f32.mrb[0].mxu0
      %v845 = vadd.f32 %v536, %v844
      %v846 = vpop.f32.mrb[0].mxu0
      %v847 = vpop.f32.mrb[0].mxu0
      %v848 = vadd.f32 %v536, %v847
      %v849 = vpop.f32.mrb[0].mxu0
      %850 = vmatprep.mubr.bf16.mxu0 %v641
      %851 = vmatmul.mubr.bf16.gmra.mrb[0].mxu0 %v640
      %v852 = vpop.f32.mrb[0].mxu0
      %v853 = vadd.f32 %v536, %v852
      %v854 = vpop.f32.mrb[0].mxu0
      %v855 = vpop.f32.mrb[0].mxu0
      %v856 = vadd.f32 %v536, %v855
      %v857 = vpop.f32.mrb[0].mxu0
      %858 = vmatprep.mubr.bf16.mxu0 %v643
      %859 = vmatmul.mubr.bf16.gmra.mrb[0].mxu0 %v642
      %v860 = vpop.f32.mrb[0].mxu0
      %v861 = vadd.f32 %v536, %v860
      %v862 = vpop.f32.mrb[0].mxu0
      %v863 = vpop.f32.mrb[0].mxu0
      %v864 = vadd.f32 %v536, %v863
      %v865 = vpop.f32.mrb[0].mxu0
      %866 = vmatprep.mubr.bf16.mxu0 %v645
      %867 = vmatmul.mubr.bf16.gmra.mrb[0].mxu0 %v644
      %v868 = vpop.f32.mrb[0].mxu0
      %v869 = vadd.f32 %v536, %v868
      %v870 = vpop.f32.mrb[0].mxu0
      %v871 = vpop.f32.mrb[0].mxu0
      %v872 = vadd.f32 %v536, %v871
      %v873 = vpop.f32.mrb[0].mxu0
      %874 = vmatprep.mubr.bf16.mxu0 %v647
      %875 = vmatmul.mubr.bf16.gmra.mrb[0].mxu0 %v646
      %v876 = vpop.f32.mrb[0].mxu0
      %v877 = vadd.f32 %v536, %v876
      %v878 = vpop.f32.mrb[0].mxu0
      %v879 = vpop.f32.mrb[0].mxu0
      %v880 = vadd.f32 %v536, %v879
      %v881 = vpop.f32.mrb[0].mxu0
      %882 = vmatprep.mubr.bf16.mxu0 %v649
      %883 = vmatmul.mubr.bf16.gmra.mrb[0].mxu0 %v648
      %v884 = vpop.f32.mrb[0].mxu0
      %v885 = vadd.f32 %v536, %v884
      %v886 = vpop.f32.mrb[0].mxu0
      %v887 = vpop.f32.mrb[0].mxu0
      %v888 = vadd.f32 %v536, %v887
      %v889 = vpop.f32.mrb[0].mxu0
      %890 = vmatprep.mubr.bf16.mxu0 %v651
      %891 = vmatmul.mubr.bf16.gmra.mrb[0].mxu0 %v650
      %v892 = vpop.f32.mrb[0].mxu0
      %v893 = vadd.f32 %v536, %v892
      %v894 = vpop.f32.mrb[0].mxu0
      %v895 = vpop.f32.mrb[0].mxu0
      %v896 = vadd.f32 %v536, %v895
      %v897 = vpop.f32.mrb[0].mxu0
      %898 = vmatprep.mubr.bf16.mxu0 %v653
      %899 = vmatmul.mubr.bf16.gmra.mrb[0].mxu0 %v652
      %v900 = vpop.f32.mrb[0].mxu0
      %v901 = vadd.f32 %v536, %v900
      %v902 = vpop.f32.mrb[0].mxu0
      %v903 = vpop.f32.mrb[0].mxu0
      %v904 = vadd.f32 %v536, %v903
      %v905 = vpop.f32.mrb[0].mxu0
      %906 = vmatprep.mubr.bf16.mxu0 %v655
      %907 = vmatmul.mubr.bf16.gmra.mrb[0].mxu0 %v654
      %v908 = vpop.f32.mrb[0].mxu0
      %v909 = vadd.f32 %v536, %v908
      %v910 = vpop.f32.mrb[0].mxu0
      %v911 = vpop.f32.mrb[0].mxu0
      %v912 = vadd.f32 %v536, %v911
      %v913 = vpop.f32.mrb[0].mxu0
      %914 = vmatprep.mubr.bf16.mxu0 %v657
      %915 = vmatmul.mubr.bf16.gmra.mrb[0].mxu0 %v656
      %v916 = vpop.f32.mrb[0].mxu0
      %v917 = vadd.f32 %v536, %v916
      %v918 = vpop.f32.mrb[0].mxu0
      %v919 = vpop.f32.mrb[0].mxu0
      %v920 = vadd.f32 %v536, %v919
      %v921 = vpop.f32.mrb[0].mxu0
      %922 = vmatprep.mubr.bf16.mxu0 %v659
      %923 = vmatmul.mubr.bf16.gmra.mrb[0].mxu0 %v658
      %v924 = vpop.f32.mrb[0].mxu0
      %v925 = vadd.f32 %v536, %v924
      %v926 = vpop.f32.mrb[0].mxu0
      %v927 = vpop.f32.mrb[0].mxu0
      %v928 = vadd.f32 %v536, %v927
      %v929 = vpop.f32.mrb[0].mxu0
      %930 = vmatprep.mubr.bf16.mxu0 %v661
      %931 = vmatmul.mubr.bf16.gmra.mrb[0].mxu0 %v660
      %v932 = vpop.f32.mrb[0].mxu0
      %v933 = vadd.f32 %v536, %v932
      %v934 = vpop.f32.mrb[0].mxu0
      %v935 = vpop.f32.mrb[0].mxu0
      %v936 = vadd.f32 %v536, %v935
      %v937 = vpop.f32.mrb[0].mxu0
      %938 = vmatprep.mubr.bf16.mxu0 %v663
      %939 = vmatmul.mubr.bf16.gmra.mrb[0].mxu0 %v662
      %v940 = vpop.f32.mrb[0].mxu0
      %v941 = vadd.f32 %v536, %v940
      %v942 = vpop.f32.mrb[0].mxu0
      %v943 = vpop.f32.mrb[0].mxu0
      %v944 = vadd.f32 %v536, %v943
      %v945 = vpop.f32.mrb[0].mxu0
      %946 = vmatprep.mubr.bf16.mxu0 %v665
      %947 = vmatmul.mubr.bf16.gmra.mrb[0].mxu0 %v664
      %v948 = vpop.f32.mrb[0].mxu0
      %v949 = vadd.f32 %v536, %v948
      %v950 = vpop.f32.mrb[0].mxu0
      %v951 = vpop.f32.mrb[0].mxu0
      %v952 = vadd.f32 %v536, %v951
      %v953 = vpop.f32.mrb[0].mxu0
      %954 = vdwg.mxu0
      %v955 = vmax.f32 %v829, 0.0
      %v956 = vmax.f32 %v832, 0.0
      %v957 = vmax.f32 %v837, 0.0
      %v958 = vmax.f32 %v840, 0.0
      %v959 = vmax.f32 %v845, 0.0
      %v960 = vmax.f32 %v848, 0.0
      %v961 = vmax.f32 %v853, 0.0
      %v962 = vmax.f32 %v856, 0.0
      %v963 = vmax.f32 %v861, 0.0
      %v964 = vmax.f32 %v864, 0.0
      %v965 = vmax.f32 %v869, 0.0
      %v966 = vmax.f32 %v872, 0.0
      %v967 = vmax.f32 %v877, 0.0
      %v968 = vmax.f32 %v880, 0.0
      %v969 = vmax.f32 %v885, 0.0
      %v970 = vmax.f32 %v888, 0.0
      %v971 = vmax.f32 %v893, 0.0
      %v972 = vmax.f32 %v896, 0.0
      %v973 = vmax.f32 %v901, 0.0
      %v974 = vmax.f32 %v904, 0.0
      %v975 = vmax.f32 %v909, 0.0
      %v976 = vmax.f32 %v912, 0.0
      %v977 = vmax.f32 %v917, 0.0
      %v978 = vmax.f32 %v920, 0.0
      %v979 = vmax.f32 %v925, 0.0
      %v980 = vmax.f32 %v928, 0.0
      %v981 = vmax.f32 %v933, 0.0
      %v982 = vmax.f32 %v936, 0.0
      %v983 = vmax.f32 %v941, 0.0
      %v984 = vmax.f32 %v944, 0.0
      %v985 = vmax.f32 %v949, 0.0
      %v986 = vmax.f32 %v952, 0.0
      %v987 = vpack.c.bf16 %v956, %v955
      %v988 = vpack.c.bf16 %v958, %v957
      %v989 = vpack.c.bf16 %v960, %v959
      %v990 = vpack.c.bf16 %v962, %v961
      %v991 = vpack.c.bf16 %v964, %v963
      %v992 = vpack.c.bf16 %v966, %v965
      %v993 = vpack.c.bf16 %v968, %v967
      %v994 = vpack.c.bf16 %v970, %v969
      %v995 = vpack.c.bf16 %v972, %v971
      %v996 = vpack.c.bf16 %v974, %v973
      %v997 = vpack.c.bf16 %v976, %v975
      %v998 = vpack.c.bf16 %v978, %v977
      %v999 = vpack.c.bf16 %v980, %v979
      %v1000 = vpack.c.bf16 %v982, %v981
      %v1001 = vpack.c.bf16 %v984, %v983
      %v1002 = vpack.c.bf16 %v986, %v985
      %v1003 = vld [vmem:[%s3] sm:$0xff]
      %v1004 = vld [vmem:[%s3 + $0x8] sm:$0xff]
      %v1005 = vld [vmem:[%s3 + $0x10] sm:$0xff]
      %v1006 = vld [vmem:[%s3 + $0x18] sm:$0xff]
      %v1007 = vld [vmem:[%s3 + $0x20] sm:$0xff]
      %v1008 = vld [vmem:[%s3 + $0x28] sm:$0xff]
      %v1009 = vld [vmem:[%s3 + $0x30] sm:$0xff]
      %v1010 = vld [vmem:[%s3 + $0x38] sm:$0xff]
      %v1011 = vld [vmem:[%s3 + $0x40] sm:$0xff]
      %v1012 = vld [vmem:[%s3 + $0x48] sm:$0xff]
      %v1013 = vld [vmem:[%s3 + $0x50] sm:$0xff]
      %v1014 = vld [vmem:[%s3 + $0x58] sm:$0xff]
      %v1015 = vld [vmem:[%s3 + $0x60] sm:$0xff]
      %v1016 = vld [vmem:[%s3 + $0x68] sm:$0xff]
      %v1017 = vld [vmem:[%s3 + $0x70] sm:$0xff]
      %v1018 = vld [vmem:[%s3 + $0x78] sm:$0xff]
      %v1019 = vld [vmem:[%s3 + $0x80] sm:$0xff]
      %v1020 = vld [vmem:[%s3 + $0x88] sm:$0xff]
      %v1021 = vld [vmem:[%s3 + $0x90] sm:$0xff]
      %v1022 = vld [vmem:[%s3 + $0x98] sm:$0xff]
      %v1023 = vld [vmem:[%s3 + $0xa0] sm:$0xff]
      %v1024 = vld [vmem:[%s3 + $0xa8] sm:$0xff]
      %v1025 = vld [vmem:[%s3 + $0xb0] sm:$0xff]
      %v1026 = vld [vmem:[%s3 + $0xb8] sm:$0xff]
      %v1027 = vld [vmem:[%s3 + $0xc0] sm:$0xff]
      %v1028 = vld [vmem:[%s3 + $0xc8] sm:$0xff]
      %v1029 = vld [vmem:[%s3 + $0xd0] sm:$0xff]
      %v1030 = vld [vmem:[%s3 + $0xd8] sm:$0xff]
      %v1031 = vld [vmem:[%s3 + $0xe0] sm:$0xff]
      %v1032 = vld [vmem:[%s3 + $0xe8] sm:$0xff]
      %v1033 = vld [vmem:[%s3 + $0xf0] sm:$0xff]
      %v1034 = vld [vmem:[%s3 + $0xf8] sm:$0xff]
      %v1035 = vld [vmem:[%s3 + $0x100] sm:$0xff]
      %v1036 = vld [vmem:[%s3 + $0x108] sm:$0xff]
      %v1037 = vld [vmem:[%s3 + $0x110] sm:$0xff]
      %v1038 = vld [vmem:[%s3 + $0x118] sm:$0xff]
      %v1039 = vld [vmem:[%s3 + $0x120] sm:$0xff]
      %v1040 = vld [vmem:[%s3 + $0x128] sm:$0xff]
      %v1041 = vld [vmem:[%s3 + $0x130] sm:$0xff]
      %v1042 = vld [vmem:[%s3 + $0x138] sm:$0xff]
      %v1043 = vld [vmem:[%s3 + $0x140] sm:$0xff]
      %v1044 = vld [vmem:[%s3 + $0x148] sm:$0xff]
      %v1045 = vld [vmem:[%s3 + $0x150] sm:$0xff]
      %v1046 = vld [vmem:[%s3 + $0x158] sm:$0xff]
      %v1047 = vld [vmem:[%s3 + $0x160] sm:$0xff]
      %v1048 = vld [vmem:[%s3 + $0x168] sm:$0xff]
      %v1049 = vld [vmem:[%s3 + $0x170] sm:$0xff]
      %v1050 = vld [vmem:[%s3 + $0x178] sm:$0xff]
      %v1051 = vld [vmem:[%s3 + $0x180] sm:$0xff]
      %v1052 = vld [vmem:[%s3 + $0x188] sm:$0xff]
      %v1053 = vld [vmem:[%s3 + $0x190] sm:$0xff]
      %v1054 = vld [vmem:[%s3 + $0x198] sm:$0xff]
      %v1055 = vld [vmem:[%s3 + $0x1a0] sm:$0xff]
      %v1056 = vld [vmem:[%s3 + $0x1a8] sm:$0xff]
      %v1057 = vld [vmem:[%s3 + $0x1b0] sm:$0xff]
      %v1058 = vld [vmem:[%s3 + $0x1b8] sm:$0xff]
      %v1059 = vld [vmem:[%s3 + $0x1c0] sm:$0xff]
      %v1060 = vld [vmem:[%s3 + $0x1c8] sm:$0xff]
      %v1061 = vld [vmem:[%s3 + $0x1d0] sm:$0xff]
      %v1062 = vld [vmem:[%s3 + $0x1d8] sm:$0xff]
      %v1063 = vld [vmem:[%s3 + $0x1e0] sm:$0xff]
      %v1064 = vld [vmem:[%s3 + $0x1e8] sm:$0xff]
      %v1065 = vld [vmem:[%s3 + $0x1f0] sm:$0xff]
      %v1066 = vld [vmem:[%s3 + $0x1f8] sm:$0xff]
      %v1067 = vld [vmem:[%s3 + $0x200] sm:$0xff]
      %v1068 = vld [vmem:[%s3 + $0x208] sm:$0xff]
      %v1069 = vld [vmem:[%s3 + $0x210] sm:$0xff]
      %v1070 = vld [vmem:[%s3 + $0x218] sm:$0xff]
      %v1071 = vld [vmem:[%s3 + $0x220] sm:$0xff]
      %v1072 = vld [vmem:[%s3 + $0x228] sm:$0xff]
      %v1073 = vld [vmem:[%s3 + $0x230] sm:$0xff]
      %v1074 = vld [vmem:[%s3 + $0x238] sm:$0xff]
      %v1075 = vld [vmem:[%s3 + $0x240] sm:$0xff]
      %v1076 = vld [vmem:[%s3 + $0x248] sm:$0xff]
      %v1077 = vld [vmem:[%s3 + $0x250] sm:$0xff]
      %v1078 = vld [vmem:[%s3 + $0x258] sm:$0xff]
      %v1079 = vld [vmem:[%s3 + $0x260] sm:$0xff]
      %v1080 = vld [vmem:[%s3 + $0x268] sm:$0xff]
      %v1081 = vld [vmem:[%s3 + $0x270] sm:$0xff]
      %v1082 = vld [vmem:[%s3 + $0x278] sm:$0xff]
      %v1083 = vld [vmem:[%s3 + $0x280] sm:$0xff]
      %v1084 = vld [vmem:[%s3 + $0x288] sm:$0xff]
      %v1085 = vld [vmem:[%s3 + $0x290] sm:$0xff]
      %v1086 = vld [vmem:[%s3 + $0x298] sm:$0xff]
      %v1087 = vld [vmem:[%s3 + $0x2a0] sm:$0xff]
      %v1088 = vld [vmem:[%s3 + $0x2a8] sm:$0xff]
      %v1089 = vld [vmem:[%s3 + $0x2b0] sm:$0xff]
      %v1090 = vld [vmem:[%s3 + $0x2b8] sm:$0xff]
      %v1091 = vld [vmem:[%s3 + $0x2c0] sm:$0xff]
      %v1092 = vld [vmem:[%s3 + $0x2c8] sm:$0xff]
      %v1093 = vld [vmem:[%s3 + $0x2d0] sm:$0xff]
      %v1094 = vld [vmem:[%s3 + $0x2d8] sm:$0xff]
      %v1095 = vld [vmem:[%s3 + $0x2e0] sm:$0xff]
      %v1096 = vld [vmem:[%s3 + $0x2e8] sm:$0xff]
      %v1097 = vld [vmem:[%s3 + $0x2f0] sm:$0xff]
      %v1098 = vld [vmem:[%s3 + $0x2f8] sm:$0xff]
      %v1099 = vld [vmem:[%s3 + $0x300] sm:$0xff]
      %v1100 = vld [vmem:[%s3 + $0x308] sm:$0xff]
      %v1101 = vld [vmem:[%s3 + $0x310] sm:$0xff]
      %v1102 = vld [vmem:[%s3 + $0x318] sm:$0xff]
      %v1103 = vld [vmem:[%s3 + $0x320] sm:$0xff]
      %v1104 = vld [vmem:[%s3 + $0x328] sm:$0xff]
      %v1105 = vld [vmem:[%s3 + $0x330] sm:$0xff]
      %v1106 = vld [vmem:[%s3 + $0x338] sm:$0xff]
      %v1107 = vld [vmem:[%s3 + $0x340] sm:$0xff]
      %v1108 = vld [vmem:[%s3 + $0x348] sm:$0xff]
      %v1109 = vld [vmem:[%s3 + $0x350] sm:$0xff]
      %v1110 = vld [vmem:[%s3 + $0x358] sm:$0xff]
      %v1111 = vld [vmem:[%s3 + $0x360] sm:$0xff]
      %v1112 = vld [vmem:[%s3 + $0x368] sm:$0xff]
      %v1113 = vld [vmem:[%s3 + $0x370] sm:$0xff]
      %v1114 = vld [vmem:[%s3 + $0x378] sm:$0xff]
      %v1115 = vld [vmem:[%s3 + $0x380] sm:$0xff]
      %v1116 = vld [vmem:[%s3 + $0x388] sm:$0xff]
      %v1117 = vld [vmem:[%s3 + $0x390] sm:$0xff]
      %v1118 = vld [vmem:[%s3 + $0x398] sm:$0xff]
      %v1119 = vld [vmem:[%s3 + $0x3a0] sm:$0xff]
      %v1120 = vld [vmem:[%s3 + $0x3a8] sm:$0xff]
      %v1121 = vld [vmem:[%s3 + $0x3b0] sm:$0xff]
      %v1122 = vld [vmem:[%s3 + $0x3b8] sm:$0xff]
      %v1123 = vld [vmem:[%s3 + $0x3c0] sm:$0xff]
      %v1124 = vld [vmem:[%s3 + $0x3c8] sm:$0xff]
      %v1125 = vld [vmem:[%s3 + $0x3d0] sm:$0xff]
      %v1126 = vld [vmem:[%s3 + $0x3d8] sm:$0xff]
      %v1127 = vld [vmem:[%s3 + $0x3e0] sm:$0xff]
      %v1128 = vld [vmem:[%s3 + $0x3e8] sm:$0xff]
      %v1129 = vld [vmem:[%s3 + $0x3f0] sm:$0xff]
      %v1130 = vld [vmem:[%s3 + $0x3f8] sm:$0xff]
      %v1131 = vld [vmem:[%s3 + $0x400] sm:$0xff]
      %v1132 = vld [vmem:[%s3 + $0x408] sm:$0xff]
      %v1133 = vld [vmem:[%s3 + $0x410] sm:$0xff]
      %v1134 = vld [vmem:[%s3 + $0x418] sm:$0xff]
      %v1135 = vld [vmem:[%s3 + $0x420] sm:$0xff]
      %v1136 = vld [vmem:[%s3 + $0x428] sm:$0xff]
      %v1137 = vld [vmem:[%s3 + $0x430] sm:$0xff]
      %v1138 = vld [vmem:[%s3 + $0x438] sm:$0xff]
      %v1139 = vld [vmem:[%s3 + $0x440] sm:$0xff]
      %v1140 = vld [vmem:[%s3 + $0x448] sm:$0xff]
      %v1141 = vld [vmem:[%s3 + $0x450] sm:$0xff]
      %v1142 = vld [vmem:[%s3 + $0x458] sm:$0xff]
      %v1143 = vld [vmem:[%s3 + $0x460] sm:$0xff]
      %v1144 = vld [vmem:[%s3 + $0x468] sm:$0xff]
      %v1145 = vld [vmem:[%s3 + $0x470] sm:$0xff]
      %v1146 = vld [vmem:[%s3 + $0x478] sm:$0xff]
      %v1147 = vld [vmem:[%s3 + $0x480] sm:$0xff]
      %v1148 = vld [vmem:[%s3 + $0x488] sm:$0xff]
      %v1149 = vld [vmem:[%s3 + $0x490] sm:$0xff]
      %v1150 = vld [vmem:[%s3 + $0x498] sm:$0xff]
      %v1151 = vld [vmem:[%s3 + $0x4a0] sm:$0xff]
      %v1152 = vld [vmem:[%s3 + $0x4a8] sm:$0xff]
      %v1303 = vunpack.c.l.b16 %v1003
      %v1304 = vunpack.c.h.b16 %v1003
      %v1305 = vunpack.c.l.b16 %v1004
      %v1306 = vunpack.c.h.b16 %v1004
      %v1307 = vunpack.c.l.b16 %v1005
      %v1308 = vunpack.c.h.b16 %v1005
      %v1309 = vunpack.c.l.b16 %v1006
      %v1310 = vunpack.c.h.b16 %v1006
      %v1311 = vunpack.c.l.b16 %v1007
      %v1312 = vunpack.c.h.b16 %v1007
      %v1313 = vunpack.c.l.b16 %v1008
      %v1314 = vunpack.c.h.b16 %v1008
      %v1315 = vunpack.c.l.b16 %v1009
      %v1316 = vunpack.c.h.b16 %v1009
      %v1317 = vunpack.c.l.b16 %v1010
      %v1318 = vunpack.c.h.b16 %v1010
      %v1319 = vunpack.c.l.b16 %v1011
      %v1320 = vunpack.c.h.b16 %v1011
      %v1321 = vunpack.c.l.b16 %v1012
      %v1322 = vunpack.c.h.b16 %v1012
      %v1323 = vunpack.c.l.b16 %v1013
      %v1324 = vunpack.c.h.b16 %v1013
      %v1325 = vunpack.c.l.b16 %v1014
      %v1326 = vunpack.c.h.b16 %v1014
      %v1327 = vunpack.c.l.b16 %v1015
      %v1328 = vunpack.c.h.b16 %v1015
      %v1329 = vunpack.c.l.b16 %v1016
      %v1330 = vunpack.c.h.b16 %v1016
      %v1331 = vunpack.c.l.b16 %v1017
      %v1332 = vunpack.c.h.b16 %v1017
      %v1333 = vunpack.c.l.b16 %v1018
      %v1334 = vunpack.c.h.b16 %v1018
      %v1335 = vunpack.c.l.b16 %v1019
      %v1336 = vunpack.c.h.b16 %v1019
      %v1337 = vunpack.c.l.b16 %v1020
      %v1338 = vunpack.c.h.b16 %v1020
      %v1339 = vunpack.c.l.b16 %v1021
      %v1340 = vunpack.c.h.b16 %v1021
      %v1341 = vunpack.c.l.b16 %v1022
      %v1342 = vunpack.c.h.b16 %v1022
      %v1343 = vunpack.c.l.b16 %v1023
      %v1344 = vunpack.c.h.b16 %v1023
      %v1345 = vunpack.c.l.b16 %v1024
      %v1346 = vunpack.c.h.b16 %v1024
      %v1347 = vunpack.c.l.b16 %v1025
      %v1348 = vunpack.c.h.b16 %v1025
      %v1349 = vunpack.c.l.b16 %v1026
      %v1350 = vunpack.c.h.b16 %v1026
      %v1351 = vunpack.c.l.b16 %v1027
      %v1352 = vunpack.c.h.b16 %v1027
      %v1353 = vunpack.c.l.b16 %v1028
      %v1354 = vunpack.c.h.b16 %v1028
      %v1355 = vunpack.c.l.b16 %v1029
      %v1356 = vunpack.c.h.b16 %v1029
      %v1357 = vunpack.c.l.b16 %v1030
      %v1358 = vunpack.c.h.b16 %v1030
      %v1359 = vunpack.c.l.b16 %v1031
      %v1360 = vunpack.c.h.b16 %v1031
      %v1361 = vunpack.c.l.b16 %v1032
      %v1362 = vunpack.c.h.b16 %v1032
      %v1363 = vunpack.c.l.b16 %v1033
      %v1364 = vunpack.c.h.b16 %v1033
      %v1365 = vunpack.c.l.b16 %v1034
      %v1366 = vunpack.c.h.b16 %v1034
      %v1367 = vunpack.c.l.b16 %v1035
      %v1368 = vunpack.c.h.b16 %v1035
      %v1369 = vunpack.c.l.b16 %v1036
      %v1370 = vunpack.c.h.b16 %v1036
      %v1371 = vunpack.c.l.b16 %v1037
      %v1372 = vunpack.c.h.b16 %v1037
      %v1373 = vunpack.c.l.b16 %v1038
      %v1374 = vunpack.c.h.b16 %v1038
      %v1375 = vunpack.c.l.b16 %v1039
      %v1376 = vunpack.c.h.b16 %v1039
      %v1377 = vunpack.c.l.b16 %v1040
      %v1378 = vunpack.c.h.b16 %v1040
      %v1379 = vunpack.c.l.b16 %v1041
      %v1380 = vunpack.c.h.b16 %v1041
      %v1381 = vunpack.c.l.b16 %v1042
      %v1382 = vunpack.c.h.b16 %v1042
      %v1383 = vunpack.c.l.b16 %v1043
      %v1384 = vunpack.c.h.b16 %v1043
      %v1385 = vunpack.c.l.b16 %v1044
      %v1386 = vunpack.c.h.b16 %v1044
      %v1387 = vunpack.c.l.b16 %v1045
      %v1388 = vunpack.c.h.b16 %v1045
      %v1389 = vunpack.c.l.b16 %v1046
      %v1390 = vunpack.c.h.b16 %v1046
      %v1391 = vunpack.c.l.b16 %v1047
      %v1392 = vunpack.c.h.b16 %v1047
      %v1393 = vunpack.c.l.b16 %v1048
      %v1394 = vunpack.c.h.b16 %v1048
      %v1395 = vunpack.c.l.b16 %v1049
      %v1396 = vunpack.c.h.b16 %v1049
      %v1397 = vunpack.c.l.b16 %v1050
      %v1398 = vunpack.c.h.b16 %v1050
      %v1399 = vunpack.c.l.b16 %v1051
      %v1400 = vunpack.c.h.b16 %v1051
      %v1401 = vunpack.c.l.b16 %v1052
      %v1402 = vunpack.c.h.b16 %v1052
      %v1403 = vunpack.c.l.b16 %v1053
      %v1404 = vunpack.c.h.b16 %v1053
      %v1405 = vunpack.c.l.b16 %v1054
      %v1406 = vunpack.c.h.b16 %v1054
      %v1407 = vunpack.c.l.b16 %v1055
      %v1408 = vunpack.c.h.b16 %v1055
      %v1409 = vunpack.c.l.b16 %v1056
      %v1410 = vunpack.c.h.b16 %v1056
      %v1411 = vunpack.c.l.b16 %v1057
      %v1412 = vunpack.c.h.b16 %v1057
      %v1413 = vunpack.c.l.b16 %v1058
      %v1414 = vunpack.c.h.b16 %v1058
      %v1415 = vunpack.c.l.b16 %v1059
      %v1416 = vunpack.c.h.b16 %v1059
      %v1417 = vunpack.c.l.b16 %v1060
      %v1418 = vunpack.c.h.b16 %v1060
      %v1419 = vunpack.c.l.b16 %v1061
      %v1420 = vunpack.c.h.b16 %v1061
      %v1421 = vunpack.c.l.b16 %v1062
      %v1422 = vunpack.c.h.b16 %v1062
      %v1423 = vunpack.c.l.b16 %v1063
      %v1424 = vunpack.c.h.b16 %v1063
      %v1425 = vunpack.c.l.b16 %v1064
      %v1426 = vunpack.c.h.b16 %v1064
      %v1427 = vunpack.c.l.b16 %v1065
      %v1428 = vunpack.c.h.b16 %v1065
      %v1429 = vunpack.c.l.b16 %v1066
      %v1430 = vunpack.c.h.b16 %v1066
      %v1431 = vunpack.c.l.b16 %v1067
      %v1432 = vunpack.c.h.b16 %v1067
      %v1433 = vunpack.c.l.b16 %v1068
      %v1434 = vunpack.c.h.b16 %v1068
      %v1435 = vunpack.c.l.b16 %v1069
      %v1436 = vunpack.c.h.b16 %v1069
      %v1437 = vunpack.c.l.b16 %v1070
      %v1438 = vunpack.c.h.b16 %v1070
      %v1439 = vunpack.c.l.b16 %v1071
      %v1440 = vunpack.c.h.b16 %v1071
      %v1441 = vunpack.c.l.b16 %v1072
      %v1442 = vunpack.c.h.b16 %v1072
      %v1443 = vunpack.c.l.b16 %v1073
      %v1444 = vunpack.c.h.b16 %v1073
      %v1445 = vunpack.c.l.b16 %v1074
      %v1446 = vunpack.c.h.b16 %v1074
      %v1447 = vunpack.c.l.b16 %v1075
      %v1448 = vunpack.c.h.b16 %v1075
      %v1449 = vunpack.c.l.b16 %v1076
      %v1450 = vunpack.c.h.b16 %v1076
      %v1451 = vunpack.c.l.b16 %v1077
      %v1452 = vunpack.c.h.b16 %v1077
      %v1453 = vunpack.c.l.b16 %v1078
      %v1454 = vunpack.c.h.b16 %v1078
      %v1455 = vunpack.c.l.b16 %v1079
      %v1456 = vunpack.c.h.b16 %v1079
      %v1457 = vunpack.c.l.b16 %v1080
      %v1458 = vunpack.c.h.b16 %v1080
      %v1459 = vunpack.c.l.b16 %v1081
      %v1460 = vunpack.c.h.b16 %v1081
      %v1461 = vunpack.c.l.b16 %v1082
      %v1462 = vunpack.c.h.b16 %v1082
      %v1463 = vunpack.c.l.b16 %v1083
      %v1464 = vunpack.c.h.b16 %v1083
      %v1465 = vunpack.c.l.b16 %v1084
      %v1466 = vunpack.c.h.b16 %v1084
      %v1467 = vunpack.c.l.b16 %v1085
      %v1468 = vunpack.c.h.b16 %v1085
      %v1469 = vunpack.c.l.b16 %v1086
      %v1470 = vunpack.c.h.b16 %v1086
      %v1471 = vunpack.c.l.b16 %v1087
      %v1472 = vunpack.c.h.b16 %v1087
      %v1473 = vunpack.c.l.b16 %v1088
      %v1474 = vunpack.c.h.b16 %v1088
      %v1475 = vunpack.c.l.b16 %v1089
      %v1476 = vunpack.c.h.b16 %v1089
      %v1477 = vunpack.c.l.b16 %v1090
      %v1478 = vunpack.c.h.b16 %v1090
      %v1479 = vunpack.c.l.b16 %v1091
      %v1480 = vunpack.c.h.b16 %v1091
      %v1481 = vunpack.c.l.b16 %v1092
      %v1482 = vunpack.c.h.b16 %v1092
      %v1483 = vunpack.c.l.b16 %v1093
      %v1484 = vunpack.c.h.b16 %v1093
      %v1485 = vunpack.c.l.b16 %v1094
      %v1486 = vunpack.c.h.b16 %v1094
      %v1487 = vunpack.c.l.b16 %v1095
      %v1488 = vunpack.c.h.b16 %v1095
      %v1489 = vunpack.c.l.b16 %v1096
      %v1490 = vunpack.c.h.b16 %v1096
      %v1491 = vunpack.c.l.b16 %v1097
      %v1492 = vunpack.c.h.b16 %v1097
      %v1493 = vunpack.c.l.b16 %v1098
      %v1494 = vunpack.c.h.b16 %v1098
      %v1495 = vunpack.c.l.b16 %v1099
      %v1496 = vunpack.c.h.b16 %v1099
      %v1497 = vunpack.c.l.b16 %v1100
      %v1498 = vunpack.c.h.b16 %v1100
      %v1499 = vunpack.c.l.b16 %v1101
      %v1500 = vunpack.c.h.b16 %v1101
      %v1501 = vunpack.c.l.b16 %v1102
      %v1502 = vunpack.c.h.b16 %v1102
      %v1503 = vunpack.c.l.b16 %v1103
      %v1504 = vunpack.c.h.b16 %v1103
      %v1505 = vunpack.c.l.b16 %v1104
      %v1506 = vunpack.c.h.b16 %v1104
      %v1507 = vunpack.c.l.b16 %v1105
      %v1508 = vunpack.c.h.b16 %v1105
      %v1509 = vunpack.c.l.b16 %v1106
      %v1510 = vunpack.c.h.b16 %v1106
      %v1511 = vunpack.c.l.b16 %v1107
      %v1512 = vunpack.c.h.b16 %v1107
      %v1513 = vunpack.c.l.b16 %v1108
      %v1514 = vunpack.c.h.b16 %v1108
      %v1515 = vunpack.c.l.b16 %v1109
      %v1516 = vunpack.c.h.b16 %v1109
      %v1517 = vunpack.c.l.b16 %v1110
      %v1518 = vunpack.c.h.b16 %v1110
      %v1519 = vunpack.c.l.b16 %v1111
      %v1520 = vunpack.c.h.b16 %v1111
      %v1521 = vunpack.c.l.b16 %v1112
      %v1522 = vunpack.c.h.b16 %v1112
      %v1523 = vunpack.c.l.b16 %v1113
      %v1524 = vunpack.c.h.b16 %v1113
      %v1525 = vunpack.c.l.b16 %v1114
      %v1526 = vunpack.c.h.b16 %v1114
      %v1527 = vunpack.c.l.b16 %v1115
      %v1528 = vunpack.c.h.b16 %v1115
      %v1529 = vunpack.c.l.b16 %v1116
      %v1530 = vunpack.c.h.b16 %v1116
      %v1531 = vunpack.c.l.b16 %v1117
      %v1532 = vunpack.c.h.b16 %v1117
      %v1533 = vunpack.c.l.b16 %v1118
      %v1534 = vunpack.c.h.b16 %v1118
      %v1535 = vunpack.c.l.b16 %v1119
      %v1536 = vunpack.c.h.b16 %v1119
      %v1537 = vunpack.c.l.b16 %v1120
      %v1538 = vunpack.c.h.b16 %v1120
      %v1539 = vunpack.c.l.b16 %v1121
      %v1540 = vunpack.c.h.b16 %v1121
      %v1541 = vunpack.c.l.b16 %v1122
      %v1542 = vunpack.c.h.b16 %v1122
      %v1543 = vunpack.c.l.b16 %v1123
      %v1544 = vunpack.c.h.b16 %v1123
      %v1545 = vunpack.c.l.b16 %v1124
      %v1546 = vunpack.c.h.b16 %v1124
      %v1547 = vunpack.c.l.b16 %v1125
      %v1548 = vunpack.c.h.b16 %v1125
      %v1549 = vunpack.c.l.b16 %v1126
      %v1550 = vunpack.c.h.b16 %v1126
      %v1551 = vunpack.c.l.b16 %v1127
      %v1552 = vunpack.c.h.b16 %v1127
      %v1553 = vunpack.c.l.b16 %v1128
      %v1554 = vunpack.c.h.b16 %v1128
      %v1555 = vunpack.c.l.b16 %v1129
      %v1556 = vunpack.c.h.b16 %v1129
      %v1557 = vunpack.c.l.b16 %v1130
      %v1558 = vunpack.c.h.b16 %v1130
      %v1559 = vunpack.c.l.b16 %v1131
      %v1560 = vunpack.c.h.b16 %v1131
      %v1561 = vunpack.c.l.b16 %v1132
      %v1562 = vunpack.c.h.b16 %v1132
      %v1563 = vunpack.c.l.b16 %v1133
      %v1564 = vunpack.c.h.b16 %v1133
      %v1565 = vunpack.c.l.b16 %v1134
      %v1566 = vunpack.c.h.b16 %v1134
      %v1567 = vunpack.c.l.b16 %v1135
      %v1568 = vunpack.c.h.b16 %v1135
      %v1569 = vunpack.c.l.b16 %v1136
      %v1570 = vunpack.c.h.b16 %v1136
      %v1571 = vunpack.c.l.b16 %v1137
      %v1572 = vunpack.c.h.b16 %v1137
      %v1573 = vunpack.c.l.b16 %v1138
      %v1574 = vunpack.c.h.b16 %v1138
      %v1575 = vunpack.c.l.b16 %v1139
      %v1576 = vunpack.c.h.b16 %v1139
      %v1577 = vunpack.c.l.b16 %v1140
      %v1578 = vunpack.c.h.b16 %v1140
      %v1579 = vunpack.c.l.b16 %v1141
      %v1580 = vunpack.c.h.b16 %v1141
      %v1581 = vunpack.c.l.b16 %v1142
      %v1582 = vunpack.c.h.b16 %v1142
      %v1583 = vunpack.c.l.b16 %v1143
      %v1584 = vunpack.c.h.b16 %v1143
      %v1585 = vunpack.c.l.b16 %v1144
      %v1586 = vunpack.c.h.b16 %v1144
      %v1587 = vunpack.c.l.b16 %v1145
      %v1588 = vunpack.c.h.b16 %v1145
      %v1589 = vunpack.c.l.b16 %v1146
      %v1590 = vunpack.c.h.b16 %v1146
      %v1591 = vunpack.c.l.b16 %v1147
      %v1592 = vunpack.c.h.b16 %v1147
      %v1593 = vunpack.c.l.b16 %v1148
      %v1594 = vunpack.c.h.b16 %v1148
      %v1595 = vunpack.c.l.b16 %v1149
      %v1596 = vunpack.c.h.b16 %v1149
      %v1597 = vunpack.c.l.b16 %v1150
      %v1598 = vunpack.c.h.b16 %v1150
      %v1599 = vunpack.c.l.b16 %v1151
      %v1600 = vunpack.c.h.b16 %v1151
      %v1601 = vunpack.c.l.b16 %v1152
      %v1602 = vunpack.c.h.b16 %v1152
      %v1603 = vpack.c.b16 %v1305, %v1303
      %v1604 = vpack.c.b16 %v1306, %v1304
      %v1605 = vpack.c.b16 %v1309, %v1307
      %v1606 = vpack.c.b16 %v1310, %v1308
      %v1607 = vpack.c.b16 %v1313, %v1311
      %v1608 = vpack.c.b16 %v1314, %v1312
      %v1609 = vpack.c.b16 %v1317, %v1315
      %v1610 = vpack.c.b16 %v1318, %v1316
      %v1611 = vpack.c.b16 %v1321, %v1319
      %v1612 = vpack.c.b16 %v1322, %v1320
      %v1613 = vpack.c.b16 %v1325, %v1323
      %v1614 = vpack.c.b16 %v1326, %v1324
      %v1615 = vpack.c.b16 %v1329, %v1327
      %v1616 = vpack.c.b16 %v1330, %v1328
      %v1617 = vpack.c.b16 %v1333, %v1331
      %v1618 = vpack.c.b16 %v1334, %v1332
      %v1619 = vpack.c.b16 %v1337, %v1335
      %v1620 = vpack.c.b16 %v1338, %v1336
      %v1621 = vpack.c.b16 %v1341, %v1339
      %v1622 = vpack.c.b16 %v1342, %v1340
      %v1623 = vpack.c.b16 %v1345, %v1343
      %v1624 = vpack.c.b16 %v1346, %v1344
      %v1625 = vpack.c.b16 %v1349, %v1347
      %v1626 = vpack.c.b16 %v1350, %v1348
      %v1627 = vpack.c.b16 %v1353, %v1351
      %v1628 = vpack.c.b16 %v1354, %v1352
      %v1629 = vpack.c.b16 %v1357, %v1355
      %v1630 = vpack.c.b16 %v1358, %v1356
      %v1631 = vpack.c.b16 %v1361, %v1359
      %v1632 = vpack.c.b16 %v1362, %v1360
      %v1633 = vpack.c.b16 %v1365, %v1363
      %v1634 = vpack.c.b16 %v1366, %v1364
      %v1635 = vpack.c.b16 %v1369, %v1367
      %v1636 = vpack.c.b16 %v1370, %v1368
      %v1637 = vpack.c.b16 %v1373, %v1371
      %v1638 = vpack.c.b16 %v1374, %v1372
      %v1639 = vpack.c.b16 %v1377, %v1375
      %v1640 = vpack.c.b16 %v1378, %v1376
      %v1641 = vpack.c.b16 %v1381, %v1379
      %v1642 = vpack.c.b16 %v1382, %v1380
      %v1643 = vpack.c.b16 %v1385, %v1383
      %v1644 = vpack.c.b16 %v1386, %v1384
      %v1645 = vpack.c.b16 %v1389, %v1387
      %v1646 = vpack.c.b16 %v1390, %v1388
      %v1647 = vpack.c.b16 %v1393, %v1391
      %v1648 = vpack.c.b16 %v1394, %v1392
      %v1649 = vpack.c.b16 %v1397, %v1395
      %v1650 = vpack.c.b16 %v1398, %v1396
      %v1651 = vpack.c.b16 %v1401, %v1399
      %v1652 = vpack.c.b16 %v1402, %v1400
      %v1653 = vpack.c.b16 %v1405, %v1403
      %v1654 = vpack.c.b16 %v1406, %v1404
      %v1655 = vpack.c.b16 %v1409, %v1407
      %v1656 = vpack.c.b16 %v1410, %v1408
      %v1657 = vpack.c.b16 %v1413, %v1411
      %v1658 = vpack.c.b16 %v1414, %v1412
      %v1659 = vpack.c.b16 %v1417, %v1415
      %v1660 = vpack.c.b16 %v1418, %v1416
      %v1661 = vpack.c.b16 %v1421, %v1419
      %v1662 = vpack.c.b16 %v1422, %v1420
      %v1663 = vpack.c.b16 %v1425, %v1423
      %v1664 = vpack.c.b16 %v1426, %v1424
      %v1665 = vpack.c.b16 %v1429, %v1427
      %v1666 = vpack.c.b16 %v1430, %v1428
      %v1667 = vpack.c.b16 %v1433, %v1431
      %v1668 = vpack.c.b16 %v1434, %v1432
      %v1669 = vpack.c.b16 %v1437, %v1435
      %v1670 = vpack.c.b16 %v1438, %v1436
      %v1671 = vpack.c.b16 %v1441, %v1439
      %v1672 = vpack.c.b16 %v1442, %v1440
      %v1673 = vpack.c.b16 %v1445, %v1443
      %v1674 = vpack.c.b16 %v1446, %v1444
      %v1675 = vpack.c.b16 %v1449, %v1447
      %v1676 = vpack.c.b16 %v1450, %v1448
      %v1677 = vpack.c.b16 %v1453, %v1451
      %v1678 = vpack.c.b16 %v1454, %v1452
      %v1679 = vpack.c.b16 %v1457, %v1455
      %v1680 = vpack.c.b16 %v1458, %v1456
      %v1681 = vpack.c.b16 %v1461, %v1459
      %v1682 = vpack.c.b16 %v1462, %v1460
      %v1683 = vpack.c.b16 %v1465, %v1463
      %v1684 = vpack.c.b16 %v1466, %v1464
      %v1685 = vpack.c.b16 %v1469, %v1467
      %v1686 = vpack.c.b16 %v1470, %v1468
      %v1687 = vpack.c.b16 %v1473, %v1471
      %v1688 = vpack.c.b16 %v1474, %v1472
      %v1689 = vpack.c.b16 %v1477, %v1475
      %v1690 = vpack.c.b16 %v1478, %v1476
      %v1691 = vpack.c.b16 %v1481, %v1479
      %v1692 = vpack.c.b16 %v1482, %v1480
      %v1693 = vpack.c.b16 %v1485, %v1483
      %v1694 = vpack.c.b16 %v1486, %v1484
      %v1695 = vpack.c.b16 %v1489, %v1487
      %v1696 = vpack.c.b16 %v1490, %v1488
      %v1697 = vpack.c.b16 %v1493, %v1491
      %v1698 = vpack.c.b16 %v1494, %v1492
      %v1699 = vpack.c.b16 %v1497, %v1495
      %v1700 = vpack.c.b16 %v1498, %v1496
      %v1701 = vpack.c.b16 %v1501, %v1499
      %v1702 = vpack.c.b16 %v1502, %v1500
      %v1703 = vpack.c.b16 %v1505, %v1503
      %v1704 = vpack.c.b16 %v1506, %v1504
      %v1705 = vpack.c.b16 %v1509, %v1507
      %v1706 = vpack.c.b16 %v1510, %v1508
      %v1707 = vpack.c.b16 %v1513, %v1511
      %v1708 = vpack.c.b16 %v1514, %v1512
      %v1709 = vpack.c.b16 %v1517, %v1515
      %v1710 = vpack.c.b16 %v1518, %v1516
      %v1711 = vpack.c.b16 %v1521, %v1519
      %v1712 = vpack.c.b16 %v1522, %v1520
      %v1713 = vpack.c.b16 %v1525, %v1523
      %v1714 = vpack.c.b16 %v1526, %v1524
      %v1715 = vpack.c.b16 %v1529, %v1527
      %v1716 = vpack.c.b16 %v1530, %v1528
      %v1717 = vpack.c.b16 %v1533, %v1531
      %v1718 = vpack.c.b16 %v1534, %v1532
      %v1719 = vpack.c.b16 %v1537, %v1535
      %v1720 = vpack.c.b16 %v1538, %v1536
      %v1721 = vpack.c.b16 %v1541, %v1539
      %v1722 = vpack.c.b16 %v1542, %v1540
      %v1723 = vpack.c.b16 %v1545, %v1543
      %v1724 = vpack.c.b16 %v1546, %v1544
      %v1725 = vpack.c.b16 %v1549, %v1547
      %v1726 = vpack.c.b16 %v1550, %v1548
      %v1727 = vpack.c.b16 %v1553, %v1551
      %v1728 = vpack.c.b16 %v1554, %v1552
      %v1729 = vpack.c.b16 %v1557, %v1555
      %v1730 = vpack.c.b16 %v1558, %v1556
      %v1731 = vpack.c.b16 %v1561, %v1559
      %v1732 = vpack.c.b16 %v1562, %v1560
      %v1733 = vpack.c.b16 %v1565, %v1563
      %v1734 = vpack.c.b16 %v1566, %v1564
      %v1735 = vpack.c.b16 %v1569, %v1567
      %v1736 = vpack.c.b16 %v1570, %v1568
      %v1737 = vpack.c.b16 %v1573, %v1571
      %v1738 = vpack.c.b16 %v1574, %v1572
      %v1739 = vpack.c.b16 %v1577, %v1575
      %v1740 = vpack.c.b16 %v1578, %v1576
      %v1741 = vpack.c.b16 %v1581, %v1579
      %v1742 = vpack.c.b16 %v1582, %v1580
      %v1743 = vpack.c.b16 %v1585, %v1583
      %v1744 = vpack.c.b16 %v1586, %v1584
      %v1745 = vpack.c.b16 %v1589, %v1587
      %v1746 = vpack.c.b16 %v1590, %v1588
      %v1747 = vpack.c.b16 %v1593, %v1591
      %v1748 = vpack.c.b16 %v1594, %v1592
      %v1749 = vpack.c.b16 %v1597, %v1595
      %v1750 = vpack.c.b16 %v1598, %v1596
      %v1751 = vpack.c.b16 %v1601, %v1599
      %v1752 = vpack.c.b16 %v1602, %v1600
      %1903 = vmatprep.subr.bf16.mxu0 0
      %1904 = vmatpush1.bf16.msra.mxu0 %v987
      %1905 = vmatprep.subr.bf16.mxu0 0
      %1906 = vmatpush1.bf16.msra.mxu0 %v988
      %1907 = vmatprep.subr.bf16.mxu0 0
      %1908 = vmatpush1.bf16.msra.mxu0 %v989
      %1909 = vmatprep.subr.bf16.mxu0 0
      %1910 = vmatpush1.bf16.msra.mxu0 %v990
      %1911 = vmatprep.subr.bf16.mxu0 0
      %1912 = vmatpush1.bf16.msra.mxu0 %v991
      %1913 = vmatprep.subr.bf16.mxu0 0
      %1914 = vmatpush1.bf16.msra.mxu0 %v992
      %1915 = vmatprep.subr.bf16.mxu0 0
      %1916 = vmatpush1.bf16.msra.mxu0 %v993
      %1917 = vmatprep.subr.bf16.mxu0 0
      %1918 = vmatpush1.bf16.msra.mxu0 %v994
      %1919 = vmatprep.subr.bf16.mxu0 0
      %1920 = vmatpush1.bf16.msra.mxu0 %v995
      %1921 = vmatprep.subr.bf16.mxu0 0
      %1922 = vmatpush1.bf16.msra.mxu0 %v996
      %1923 = vmatprep.subr.bf16.mxu0 0
      %1924 = vmatpush1.bf16.msra.mxu0 %v997
      %1925 = vmatprep.subr.bf16.mxu0 0
      %1926 = vmatpush1.bf16.msra.mxu0 %v998
      %1927 = vmatprep.subr.bf16.mxu0 0
      %1928 = vmatpush1.bf16.msra.mxu0 %v999
      %1929 = vmatprep.subr.bf16.mxu0 0
      %1930 = vmatpush1.bf16.msra.mxu0 %v1000
      %1931 = vmatprep.subr.bf16.mxu0 0
      %1932 = vmatpush1.bf16.msra.mxu0 %v1001
      %1933 = vmatprep.subr.bf16.mxu0 0
      %1934 = vmatpush1.bf16.msra.mxu0 %v1002
      %1935 = vmatprep.mubr.bf16.mxu0 %v1604
      %1936 = vmatmul.mubr.bf16.gmra.mrb[0].mxu0 %v1603
      %v1937 = vpop.f32.mrb[0].mxu0
      %v1938 = vadd.f32 0.0, %v1937
      %v1939 = vpop.f32.mrb[0].mxu0
      %v1940 = vpop.f32.mrb[0].mxu0
      %v1941 = vadd.f32 0.0, %v1940
      %v1942 = vpop.f32.mrb[0].mxu0
      %1943 = vmatprep.mubr.bf16.mxu0 %v1606
      %1944 = vmatmul.mubr.bf16.gmra.mrb[0].mxu0 %v1605
      %v1945 = vpop.f32.mrb[0].mxu0
      %v1946 = vadd.f32 0.0, %v1945
      %v1947 = vpop.f32.mrb[0].mxu0
      %v1948 = vpop.f32.mrb[0].mxu0
      %v1949 = vadd.f32 0.0, %v1948
      %v1950 = vpop.f32.mrb[0].mxu0
      %1951 = vmatprep.mubr.bf16.mxu0 %v1608
      %1952 = vmatmul.mubr.bf16.gmra.mrb[0].mxu0 %v1607
      %v1953 = vpop.f32.mrb[0].mxu0
      %v1954 = vadd.f32 0.0, %v1953
      %v1955 = vpop.f32.mrb[0].mxu0
      %v1956 = vpop.f32.mrb[0].mxu0
      %v1957 = vadd.f32 0.0, %v1956
      %v1958 = vpop.f32.mrb[0].mxu0
      %1959 = vmatprep.mubr.bf16.mxu0 %v1610
      %1960 = vmatmul.mubr.bf16.gmra.mrb[0].mxu0 %v1609
      %v1961 = vpop.f32.mrb[0].mxu0
      %v1962 = vadd.f32 0.0, %v1961
      %v1963 = vpop.f32.mrb[0].mxu0
      %v1964 = vpop.f32.mrb[0].mxu0
      %v1965 = vadd.f32 0.0, %v1964
      %v1966 = vpop.f32.mrb[0].mxu0
      %1967 = vmatprep.mubr.bf16.mxu0 %v1612
      %1968 = vmatmul.mubr.bf16.gmra.mrb[0].mxu0 %v1611
      %v1969 = vpop.f32.mrb[0].mxu0
      %v1970 = vadd.f32 0.0, %v1969
      %v1971 = vpop.f32.mrb[0].mxu0
      %v1972 = vpop.f32.mrb[0].mxu0
      %v1973 = vadd.f32 0.0, %v1972
      %v1974 = vpop.f32.mrb[0].mxu0
      %1975 = vmatprep.mubr.bf16.mxu0 %v1614
      %1976 = vmatmul.mubr.bf16.gmra.mrb[0].mxu0 %v1613
      %v1977 = vpop.f32.mrb[0].mxu0
      %v1978 = vadd.f32 0.0, %v1977
      %v1979 = vpop.f32.mrb[0].mxu0
      %v1980 = vpop.f32.mrb[0].mxu0
      %v1981 = vadd.f32 0.0, %v1980
      %v1982 = vpop.f32.mrb[0].mxu0
      %1983 = vmatprep.mubr.bf16.mxu0 %v1616
      %1984 = vmatmul.mubr.bf16.gmra.mrb[0].mxu0 %v1615
      %v1985 = vpop.f32.mrb[0].mxu0
      %v1986 = vadd.f32 0.0, %v1985
      %v1987 = vpop.f32.mrb[0].mxu0
      %v1988 = vpop.f32.mrb[0].mxu0
      %v1989 = vadd.f32 0.0, %v1988
      %v1990 = vpop.f32.mrb[0].mxu0
      %1991 = vmatprep.mubr.bf16.mxu0 %v1618
      %1992 = vmatmul.mubr.bf16.gmra.mrb[0].mxu0 %v1617
      %v1993 = vpop.f32.mrb[0].mxu0
      %v1994 = vadd.f32 0.0, %v1993
      %v1995 = vpop.f32.mrb[0].mxu0
      %v1996 = vpop.f32.mrb[0].mxu0
      %v1997 = vadd.f32 0.0, %v1996
      %v1998 = vpop.f32.mrb[0].mxu0
      %1999 = vmatprep.mubr.bf16.mxu0 %v1620
      %2000 = vmatmul.mubr.bf16.gmra.mrb[0].mxu0 %v1619
      %v2001 = vpop.f32.mrb[0].mxu0
      %v2002 = vadd.f32 0.0, %v2001
      %v2003 = vpop.f32.mrb[0].mxu0
      %v2004 = vpop.f32.mrb[0].mxu0
      %v2005 = vadd.f32 0.0, %v2004
      %v2006 = vpop.f32.mrb[0].mxu0
      %2007 = vmatprep.mubr.bf16.mxu0 %v1622
      %2008 = vmatmul.mubr.bf16.gmra.mrb[0].mxu0 %v1621
      %v2009 = vpop.f32.mrb[0].mxu0
      %v2010 = vadd.f32 0.0, %v2009
      %v2011 = vpop.f32.mrb[0].mxu0
      %v2012 = vpop.f32.mrb[0].mxu0
      %v2013 = vadd.f32 0.0, %v2012
      %v2014 = vpop.f32.mrb[0].mxu0
      %2015 = vmatprep.mubr.bf16.mxu0 %v1624
      %2016 = vmatmul.mubr.bf16.gmra.mrb[0].mxu0 %v1623
      %v2017 = vpop.f32.mrb[0].mxu0
      %v2018 = vadd.f32 0.0, %v2017
      %v2019 = vpop.f32.mrb[0].mxu0
      %v2020 = vpop.f32.mrb[0].mxu0
      %v2021 = vadd.f32 0.0, %v2020
      %v2022 = vpop.f32.mrb[0].mxu0
      %2023 = vmatprep.mubr.bf16.mxu0 %v1626
      %2024 = vmatmul.mubr.bf16.gmra.mrb[0].mxu0 %v1625
      %v2025 = vpop.f32.mrb[0].mxu0
      %v2026 = vadd.f32 0.0, %v2025
      %v2027 = vpop.f32.mrb[0].mxu0
      %v2028 = vpop.f32.mrb[0].mxu0
      %v2029 = vadd.f32 0.0, %v2028
      %v2030 = vpop.f32.mrb[0].mxu0
      %2031 = vmatprep.mubr.bf16.mxu0 %v1628
      %2032 = vmatmul.mubr.bf16.gmra.mrb[0].mxu0 %v1627
      %v2033 = vpop.f32.mrb[0].mxu0
      %v2034 = vadd.f32 0.0, %v2033
      %v2035 = vpop.f32.mrb[0].mxu0
      %v2036 = vpop.f32.mrb[0].mxu0
      %v2037 = vadd.f32 0.0, %v2036
      %v2038 = vpop.f32.mrb[0].mxu0
      %2039 = vmatprep.mubr.bf16.mxu0 %v1630
      %2040 = vmatmul.mubr.bf16.gmra.mrb[0].mxu0 %v1629
      %v2041 = vpop.f32.mrb[0].mxu0
      %v2042 = vadd.f32 0.0, %v2041
      %v2043 = vpop.f32.mrb[0].mxu0
      %v2044 = vpop.f32.mrb[0].mxu0
      %v2045 = vadd.f32 0.0, %v2044
      %v2046 = vpop.f32.mrb[0].mxu0
      %2047 = vmatprep.mubr.bf16.mxu0 %v1632
      %2048 = vmatmul.mubr.bf16.gmra.mrb[0].mxu0 %v1631
      %v2049 = vpop.f32.mrb[0].mxu0
      %v2050 = vadd.f32 0.0, %v2049
      %v2051 = vpop.f32.mrb[0].mxu0
      %v2052 = vpop.f32.mrb[0].mxu0
      %v2053 = vadd.f32 0.0, %v2052
      %v2054 = vpop.f32.mrb[0].mxu0
      %2055 = vmatprep.mubr.bf16.mxu0 %v1634
      %2056 = vmatmul.mubr.bf16.gmra.mrb[0].mxu0 %v1633
      %v2057 = vpop.f32.mrb[0].mxu0
      %v2058 = vadd.f32 0.0, %v2057
      %v2059 = vpop.f32.mrb[0].mxu0
      %v2060 = vpop.f32.mrb[0].mxu0
      %v2061 = vadd.f32 0.0, %v2060
      %v2062 = vpop.f32.mrb[0].mxu0
      %2063 = vmatprep.mubr.bf16.mxu0 %v1636
      %2064 = vmatmul.mubr.bf16.gmra.mrb[0].mxu0 %v1635
      %v2065 = vpop.f32.mrb[0].mxu0
      %v2066 = vadd.f32 0.0, %v2065
      %v2067 = vpop.f32.mrb[0].mxu0
      %v2068 = vpop.f32.mrb[0].mxu0
      %v2069 = vadd.f32 0.0, %v2068
      %v2070 = vpop.f32.mrb[0].mxu0
      %2071 = vmatprep.mubr.bf16.mxu0 %v1638
      %2072 = vmatmul.mubr.bf16.gmra.mrb[0].mxu0 %v1637
      %v2073 = vpop.f32.mrb[0].mxu0
      %v2074 = vadd.f32 0.0, %v2073
      %v2075 = vpop.f32.mrb[0].mxu0
      %v2076 = vpop.f32.mrb[0].mxu0
      %v2077 = vadd.f32 0.0, %v2076
      %v2078 = vpop.f32.mrb[0].mxu0
      %2079 = vmatprep.mubr.bf16.mxu0 %v1640
      %2080 = vmatmul.mubr.bf16.gmra.mrb[0].mxu0 %v1639
      %v2081 = vpop.f32.mrb[0].mxu0
      %v2082 = vadd.f32 0.0, %v2081
      %v2083 = vpop.f32.mrb[0].mxu0
      %v2084 = vpop.f32.mrb[0].mxu0
      %v2085 = vadd.f32 0.0, %v2084
      %v2086 = vpop.f32.mrb[0].mxu0
      %2087 = vmatprep.mubr.bf16.mxu0 %v1642
      %2088 = vmatmul.mubr.bf16.gmra.mrb[0].mxu0 %v1641
      %v2089 = vpop.f32.mrb[0].mxu0
      %v2090 = vadd.f32 0.0, %v2089
      %v2091 = vpop.f32.mrb[0].mxu0
      %v2092 = vpop.f32.mrb[0].mxu0
      %v2093 = vadd.f32 0.0, %v2092
      %v2094 = vpop.f32.mrb[0].mxu0
      %2095 = vmatprep.mubr.bf16.mxu0 %v1644
      %2096 = vmatmul.mubr.bf16.gmra.mrb[0].mxu0 %v1643
      %v2097 = vpop.f32.mrb[0].mxu0
      %v2098 = vadd.f32 0.0, %v2097
      %v2099 = vpop.f32.mrb[0].mxu0
      %v2100 = vpop.f32.mrb[0].mxu0
      %v2101 = vadd.f32 0.0, %v2100
      %v2102 = vpop.f32.mrb[0].mxu0
      %2103 = vmatprep.mubr.bf16.mxu0 %v1646
      %2104 = vmatmul.mubr.bf16.gmra.mrb[0].mxu0 %v1645
      %v2105 = vpop.f32.mrb[0].mxu0
      %v2106 = vadd.f32 0.0, %v2105
      %v2107 = vpop.f32.mrb[0].mxu0
      %v2108 = vpop.f32.mrb[0].mxu0
      %v2109 = vadd.f32 0.0, %v2108
      %v2110 = vpop.f32.mrb[0].mxu0
      %2111 = vmatprep.mubr.bf16.mxu0 %v1648
      %2112 = vmatmul.mubr.bf16.gmra.mrb[0].mxu0 %v1647
      %v2113 = vpop.f32.mrb[0].mxu0
      %v2114 = vadd.f32 0.0, %v2113
      %v2115 = vpop.f32.mrb[0].mxu0
      %v2116 = vpop.f32.mrb[0].mxu0
      %v2117 = vadd.f32 0.0, %v2116
      %v2118 = vpop.f32.mrb[0].mxu0
      %2119 = vmatprep.mubr.bf16.mxu0 %v1650
      %2120 = vmatmul.mubr.bf16.gmra.mrb[0].mxu0 %v1649
      %v2121 = vpop.f32.mrb[0].mxu0
      %v2122 = vadd.f32 0.0, %v2121
      %v2123 = vpop.f32.mrb[0].mxu0
      %v2124 = vpop.f32.mrb[0].mxu0
      %v2125 = vadd.f32 0.0, %v2124
      %v2126 = vpop.f32.mrb[0].mxu0
      %2127 = vmatprep.mubr.bf16.mxu0 %v1652
      %2128 = vmatmul.mubr.bf16.gmra.mrb[0].mxu0 %v1651
      %v2129 = vpop.f32.mrb[0].mxu0
      %v2130 = vadd.f32 0.0, %v2129
      %v2131 = vpop.f32.mrb[0].mxu0
      %v2132 = vpop.f32.mrb[0].mxu0
      %v2133 = vadd.f32 0.0, %v2132
      %v2134 = vpop.f32.mrb[0].mxu0
      %2135 = vmatprep.mubr.bf16.mxu0 %v1654
      %2136 = vmatmul.mubr.bf16.gmra.mrb[0].mxu0 %v1653
      %v2137 = vpop.f32.mrb[0].mxu0
      %v2138 = vadd.f32 0.0, %v2137
      %v2139 = vpop.f32.mrb[0].mxu0
      %v2140 = vpop.f32.mrb[0].mxu0
      %v2141 = vadd.f32 0.0, %v2140
      %v2142 = vpop.f32.mrb[0].mxu0
      %2143 = vmatprep.mubr.bf16.mxu0 %v1656
      %2144 = vmatmul.mubr.bf16.gmra.mrb[0].mxu0 %v1655
      %v2145 = vpop.f32.mrb[0].mxu0
      %v2146 = vadd.f32 0.0, %v2145
      %v2147 = vpop.f32.mrb[0].mxu0
      %v2148 = vpop.f32.mrb[0].mxu0
      %v2149 = vadd.f32 0.0, %v2148
      %v2150 = vpop.f32.mrb[0].mxu0
      %2151 = vmatprep.mubr.bf16.mxu0 %v1658
      %2152 = vmatmul.mubr.bf16.gmra.mrb[0].mxu0 %v1657
      %v2153 = vpop.f32.mrb[0].mxu0
      %v2154 = vadd.f32 0.0, %v2153
      %v2155 = vpop.f32.mrb[0].mxu0
      %v2156 = vpop.f32.mrb[0].mxu0
      %v2157 = vadd.f32 0.0, %v2156
      %v2158 = vpop.f32.mrb[0].mxu0
      %2159 = vmatprep.mubr.bf16.mxu0 %v1660
      %2160 = vmatmul.mubr.bf16.gmra.mrb[0].mxu0 %v1659
      %v2161 = vpop.f32.mrb[0].mxu0
      %v2162 = vadd.f32 0.0, %v2161
      %v2163 = vpop.f32.mrb[0].mxu0
      %v2164 = vpop.f32.mrb[0].mxu0
      %v2165 = vadd.f32 0.0, %v2164
      %v2166 = vpop.f32.mrb[0].mxu0
      %2167 = vmatprep.mubr.bf16.mxu0 %v1662
      %2168 = vmatmul.mubr.bf16.gmra.mrb[0].mxu0 %v1661
      %v2169 = vpop.f32.mrb[0].mxu0
      %v2170 = vadd.f32 0.0, %v2169
      %v2171 = vpop.f32.mrb[0].mxu0
      %v2172 = vpop.f32.mrb[0].mxu0
      %v2173 = vadd.f32 0.0, %v2172
      %v2174 = vpop.f32.mrb[0].mxu0
      %2175 = vmatprep.mubr.bf16.mxu0 %v1664
      %2176 = vmatmul.mubr.bf16.gmra.mrb[0].mxu0 %v1663
      %v2177 = vpop.f32.mrb[0].mxu0
      %v2178 = vadd.f32 0.0, %v2177
      %v2179 = vpop.f32.mrb[0].mxu0
      %v2180 = vpop.f32.mrb[0].mxu0
      %v2181 = vadd.f32 0.0, %v2180
      %v2182 = vpop.f32.mrb[0].mxu0
      %2183 = vmatprep.mubr.bf16.mxu0 %v1666
      %2184 = vmatmul.mubr.bf16.gmra.mrb[0].mxu0 %v1665
      %v2185 = vpop.f32.mrb[0].mxu0
      %v2186 = vadd.f32 0.0, %v2185
      %v2187 = vpop.f32.mrb[0].mxu0
      %v2188 = vpop.f32.mrb[0].mxu0
      %v2189 = vadd.f32 0.0, %v2188
      %v2190 = vpop.f32.mrb[0].mxu0
      %2191 = vmatprep.mubr.bf16.mxu0 %v1668
      %2192 = vmatmul.mubr.bf16.gmra.mrb[0].mxu0 %v1667
      %v2193 = vpop.f32.mrb[0].mxu0
      %v2194 = vadd.f32 0.0, %v2193
      %v2195 = vpop.f32.mrb[0].mxu0
      %v2196 = vpop.f32.mrb[0].mxu0
      %v2197 = vadd.f32 0.0, %v2196
      %v2198 = vpop.f32.mrb[0].mxu0
      %2199 = vmatprep.mubr.bf16.mxu0 %v1670
      %2200 = vmatmul.mubr.bf16.gmra.mrb[0].mxu0 %v1669
      %v2201 = vpop.f32.mrb[0].mxu0
      %v2202 = vadd.f32 0.0, %v2201
      %v2203 = vpop.f32.mrb[0].mxu0
      %v2204 = vpop.f32.mrb[0].mxu0
      %v2205 = vadd.f32 0.0, %v2204
      %v2206 = vpop.f32.mrb[0].mxu0
      %2207 = vmatprep.mubr.bf16.mxu0 %v1672
      %2208 = vmatmul.mubr.bf16.gmra.mrb[0].mxu0 %v1671
      %v2209 = vpop.f32.mrb[0].mxu0
      %v2210 = vadd.f32 0.0, %v2209
      %v2211 = vpop.f32.mrb[0].mxu0
      %v2212 = vpop.f32.mrb[0].mxu0
      %v2213 = vadd.f32 0.0, %v2212
      %v2214 = vpop.f32.mrb[0].mxu0
      %2215 = vmatprep.mubr.bf16.mxu0 %v1674
      %2216 = vmatmul.mubr.bf16.gmra.mrb[0].mxu0 %v1673
      %v2217 = vpop.f32.mrb[0].mxu0
      %v2218 = vadd.f32 0.0, %v2217
      %v2219 = vpop.f32.mrb[0].mxu0
      %v2220 = vpop.f32.mrb[0].mxu0
      %v2221 = vadd.f32 0.0, %v2220
      %v2222 = vpop.f32.mrb[0].mxu0
      %2223 = vmatprep.mubr.bf16.mxu0 %v1676
      %2224 = vmatmul.mubr.bf16.gmra.mrb[0].mxu0 %v1675
      %v2225 = vpop.f32.mrb[0].mxu0
      %v2226 = vadd.f32 0.0, %v2225
      %v2227 = vpop.f32.mrb[0].mxu0
      %v2228 = vpop.f32.mrb[0].mxu0
      %v2229 = vadd.f32 0.0, %v2228
      %v2230 = vpop.f32.mrb[0].mxu0
      %2231 = vmatprep.mubr.bf16.mxu0 %v1678
      %2232 = vmatmul.mubr.bf16.gmra.mrb[0].mxu0 %v1677
      %v2233 = vpop.f32.mrb[0].mxu0
      %v2234 = vadd.f32 0.0, %v2233
      %v2235 = vpop.f32.mrb[0].mxu0
      %v2236 = vpop.f32.mrb[0].mxu0
      %v2237 = vadd.f32 0.0, %v2236
      %v2238 = vpop.f32.mrb[0].mxu0
      %2239 = vmatprep.mubr.bf16.mxu0 %v1680
      %2240 = vmatmul.mubr.bf16.gmra.mrb[0].mxu0 %v1679
      %v2241 = vpop.f32.mrb[0].mxu0
      %v2242 = vadd.f32 0.0, %v2241
      %v2243 = vpop.f32.mrb[0].mxu0
      %v2244 = vpop.f32.mrb[0].mxu0
      %v2245 = vadd.f32 0.0, %v2244
      %v2246 = vpop.f32.mrb[0].mxu0
      %2247 = vmatprep.mubr.bf16.mxu0 %v1682
      %2248 = vmatmul.mubr.bf16.gmra.mrb[0].mxu0 %v1681
      %v2249 = vpop.f32.mrb[0].mxu0
      %v2250 = vadd.f32 0.0, %v2249
      %v2251 = vpop.f32.mrb[0].mxu0
      %v2252 = vpop.f32.mrb[0].mxu0
      %v2253 = vadd.f32 0.0, %v2252
      %v2254 = vpop.f32.mrb[0].mxu0
      %2255 = vmatprep.mubr.bf16.mxu0 %v1684
      %2256 = vmatmul.mubr.bf16.gmra.mrb[0].mxu0 %v1683
      %v2257 = vpop.f32.mrb[0].mxu0
      %v2258 = vadd.f32 0.0, %v2257
      %v2259 = vpop.f32.mrb[0].mxu0
      %v2260 = vpop.f32.mrb[0].mxu0
      %v2261 = vadd.f32 0.0, %v2260
      %v2262 = vpop.f32.mrb[0].mxu0
      %2263 = vmatprep.mubr.bf16.mxu0 %v1686
      %2264 = vmatmul.mubr.bf16.gmra.mrb[0].mxu0 %v1685
      %v2265 = vpop.f32.mrb[0].mxu0
      %v2266 = vadd.f32 0.0, %v2265
      %v2267 = vpop.f32.mrb[0].mxu0
      %v2268 = vpop.f32.mrb[0].mxu0
      %v2269 = vadd.f32 0.0, %v2268
      %v2270 = vpop.f32.mrb[0].mxu0
      %2271 = vmatprep.mubr.bf16.mxu0 %v1688
      %2272 = vmatmul.mubr.bf16.gmra.mrb[0].mxu0 %v1687
      %v2273 = vpop.f32.mrb[0].mxu0
      %v2274 = vadd.f32 0.0, %v2273
      %v2275 = vpop.f32.mrb[0].mxu0
      %v2276 = vpop.f32.mrb[0].mxu0
      %v2277 = vadd.f32 0.0, %v2276
      %v2278 = vpop.f32.mrb[0].mxu0
      %2279 = vmatprep.mubr.bf16.mxu0 %v1690
      %2280 = vmatmul.mubr.bf16.gmra.mrb[0].mxu0 %v1689
      %v2281 = vpop.f32.mrb[0].mxu0
      %v2282 = vadd.f32 0.0, %v2281
      %v2283 = vpop.f32.mrb[0].mxu0
      %v2284 = vpop.f32.mrb[0].mxu0
      %v2285 = vadd.f32 0.0, %v2284
      %v2286 = vpop.f32.mrb[0].mxu0
      %2287 = vmatprep.mubr.bf16.mxu0 %v1692
      %2288 = vmatmul.mubr.bf16.gmra.mrb[0].mxu0 %v1691
      %v2289 = vpop.f32.mrb[0].mxu0
      %v2290 = vadd.f32 0.0, %v2289
      %v2291 = vpop.f32.mrb[0].mxu0
      %v2292 = vpop.f32.mrb[0].mxu0
      %v2293 = vadd.f32 0.0, %v2292
      %v2294 = vpop.f32.mrb[0].mxu0
      %2295 = vmatprep.mubr.bf16.mxu0 %v1694
      %2296 = vmatmul.mubr.bf16.gmra.mrb[0].mxu0 %v1693
      %v2297 = vpop.f32.mrb[0].mxu0
      %v2298 = vadd.f32 0.0, %v2297
      %v2299 = vpop.f32.mrb[0].mxu0
      %v2300 = vpop.f32.mrb[0].mxu0
      %v2301 = vadd.f32 0.0, %v2300
      %v2302 = vpop.f32.mrb[0].mxu0
      %2303 = vmatprep.mubr.bf16.mxu0 %v1696
      %2304 = vmatmul.mubr.bf16.gmra.mrb[0].mxu0 %v1695
      %v2305 = vpop.f32.mrb[0].mxu0
      %v2306 = vadd.f32 0.0, %v2305
      %v2307 = vpop.f32.mrb[0].mxu0
      %v2308 = vpop.f32.mrb[0].mxu0
      %v2309 = vadd.f32 0.0, %v2308
      %v2310 = vpop.f32.mrb[0].mxu0
      %2311 = vmatprep.mubr.bf16.mxu0 %v1698
      %2312 = vmatmul.mubr.bf16.gmra.mrb[0].mxu0 %v1697
      %v2313 = vpop.f32.mrb[0].mxu0
      %v2314 = vadd.f32 0.0, %v2313
      %v2315 = vpop.f32.mrb[0].mxu0
      %v2316 = vpop.f32.mrb[0].mxu0
      %v2317 = vadd.f32 0.0, %v2316
      %v2318 = vpop.f32.mrb[0].mxu0
      %2319 = vmatprep.mubr.bf16.mxu0 %v1700
      %2320 = vmatmul.mubr.bf16.gmra.mrb[0].mxu0 %v1699
      %v2321 = vpop.f32.mrb[0].mxu0
      %v2322 = vadd.f32 0.0, %v2321
      %v2323 = vpop.f32.mrb[0].mxu0
      %v2324 = vpop.f32.mrb[0].mxu0
      %v2325 = vadd.f32 0.0, %v2324
      %v2326 = vpop.f32.mrb[0].mxu0
      %2327 = vmatprep.mubr.bf16.mxu0 %v1702
      %2328 = vmatmul.mubr.bf16.gmra.mrb[0].mxu0 %v1701
      %v2329 = vpop.f32.mrb[0].mxu0
      %v2330 = vadd.f32 0.0, %v2329
      %v2331 = vpop.f32.mrb[0].mxu0
      %v2332 = vpop.f32.mrb[0].mxu0
      %v2333 = vadd.f32 0.0, %v2332
      %v2334 = vpop.f32.mrb[0].mxu0
      %2335 = vmatprep.mubr.bf16.mxu0 %v1704
      %2336 = vmatmul.mubr.bf16.gmra.mrb[0].mxu0 %v1703
      %v2337 = vpop.f32.mrb[0].mxu0
      %v2338 = vadd.f32 0.0, %v2337
      %v2339 = vpop.f32.mrb[0].mxu0
      %v2340 = vpop.f32.mrb[0].mxu0
      %v2341 = vadd.f32 0.0, %v2340
      %v2342 = vpop.f32.mrb[0].mxu0
      %2343 = vmatprep.mubr.bf16.mxu0 %v1706
      %2344 = vmatmul.mubr.bf16.gmra.mrb[0].mxu0 %v1705
      %v2345 = vpop.f32.mrb[0].mxu0
      %v2346 = vadd.f32 0.0, %v2345
      %v2347 = vpop.f32.mrb[0].mxu0
      %v2348 = vpop.f32.mrb[0].mxu0
      %v2349 = vadd.f32 0.0, %v2348
      %v2350 = vpop.f32.mrb[0].mxu0
      %2351 = vmatprep.mubr.bf16.mxu0 %v1708
      %2352 = vmatmul.mubr.bf16.gmra.mrb[0].mxu0 %v1707
      %v2353 = vpop.f32.mrb[0].mxu0
      %v2354 = vadd.f32 0.0, %v2353
      %v2355 = vpop.f32.mrb[0].mxu0
      %v2356 = vpop.f32.mrb[0].mxu0
      %v2357 = vadd.f32 0.0, %v2356
      %v2358 = vpop.f32.mrb[0].mxu0
      %2359 = vmatprep.mubr.bf16.mxu0 %v1710
      %2360 = vmatmul.mubr.bf16.gmra.mrb[0].mxu0 %v1709
      %v2361 = vpop.f32.mrb[0].mxu0
      %v2362 = vadd.f32 0.0, %v2361
      %v2363 = vpop.f32.mrb[0].mxu0
      %v2364 = vpop.f32.mrb[0].mxu0
      %v2365 = vadd.f32 0.0, %v2364
      %v2366 = vpop.f32.mrb[0].mxu0
      %2367 = vmatprep.mubr.bf16.mxu0 %v1712
      %2368 = vmatmul.mubr.bf16.gmra.mrb[0].mxu0 %v1711
      %v2369 = vpop.f32.mrb[0].mxu0
      %v2370 = vadd.f32 0.0, %v2369
      %v2371 = vpop.f32.mrb[0].mxu0
      %v2372 = vpop.f32.mrb[0].mxu0
      %v2373 = vadd.f32 0.0, %v2372
      %v2374 = vpop.f32.mrb[0].mxu0
      %2375 = vmatprep.mubr.bf16.mxu0 %v1714
      %2376 = vmatmul.mubr.bf16.gmra.mrb[0].mxu0 %v1713
      %v2377 = vpop.f32.mrb[0].mxu0
      %v2378 = vadd.f32 0.0, %v2377
      %v2379 = vpop.f32.mrb[0].mxu0
      %v2380 = vpop.f32.mrb[0].mxu0
      %v2381 = vadd.f32 0.0, %v2380
      %v2382 = vpop.f32.mrb[0].mxu0
      %2383 = vmatprep.mubr.bf16.mxu0 %v1716
      %2384 = vmatmul.mubr.bf16.gmra.mrb[0].mxu0 %v1715
      %v2385 = vpop.f32.mrb[0].mxu0
      %v2386 = vadd.f32 0.0, %v2385
      %v2387 = vpop.f32.mrb[0].mxu0
      %v2388 = vpop.f32.mrb[0].mxu0
      %v2389 = vadd.f32 0.0, %v2388
      %v2390 = vpop.f32.mrb[0].mxu0
      %2391 = vmatprep.mubr.bf16.mxu0 %v1718
      %2392 = vmatmul.mubr.bf16.gmra.mrb[0].mxu0 %v1717
      %v2393 = vpop.f32.mrb[0].mxu0
      %v2394 = vadd.f32 0.0, %v2393
      %v2395 = vpop.f32.mrb[0].mxu0
      %v2396 = vpop.f32.mrb[0].mxu0
      %v2397 = vadd.f32 0.0, %v2396
      %v2398 = vpop.f32.mrb[0].mxu0
      %2399 = vmatprep.mubr.bf16.mxu0 %v1720
      %2400 = vmatmul.mubr.bf16.gmra.mrb[0].mxu0 %v1719
      %v2401 = vpop.f32.mrb[0].mxu0
      %v2402 = vadd.f32 0.0, %v2401
      %v2403 = vpop.f32.mrb[0].mxu0
      %v2404 = vpop.f32.mrb[0].mxu0
      %v2405 = vadd.f32 0.0, %v2404
      %v2406 = vpop.f32.mrb[0].mxu0
      %2407 = vmatprep.mubr.bf16.mxu0 %v1722
      %2408 = vmatmul.mubr.bf16.gmra.mrb[0].mxu0 %v1721
      %v2409 = vpop.f32.mrb[0].mxu0
      %v2410 = vadd.f32 0.0, %v2409
      %v2411 = vpop.f32.mrb[0].mxu0
      %v2412 = vpop.f32.mrb[0].mxu0
      %v2413 = vadd.f32 0.0, %v2412
      %v2414 = vpop.f32.mrb[0].mxu0
      %2415 = vmatprep.mubr.bf16.mxu0 %v1724
      %2416 = vmatmul.mubr.bf16.gmra.mrb[0].mxu0 %v1723
      %v2417 = vpop.f32.mrb[0].mxu0
      %v2418 = vadd.f32 0.0, %v2417
      %v2419 = vpop.f32.mrb[0].mxu0
      %v2420 = vpop.f32.mrb[0].mxu0
      %v2421 = vadd.f32 0.0, %v2420
      %v2422 = vpop.f32.mrb[0].mxu0
      %2423 = vmatprep.mubr.bf16.mxu0 %v1726
      %2424 = vmatmul.mubr.bf16.gmra.mrb[0].mxu0 %v1725
      %v2425 = vpop.f32.mrb[0].mxu0
      %v2426 = vadd.f32 0.0, %v2425
      %v2427 = vpop.f32.mrb[0].mxu0
      %v2428 = vpop.f32.mrb[0].mxu0
      %v2429 = vadd.f32 0.0, %v2428
      %v2430 = vpop.f32.mrb[0].mxu0
      %2431 = vmatprep.mubr.bf16.mxu0 %v1728
      %2432 = vmatmul.mubr.bf16.gmra.mrb[0].mxu0 %v1727
      %v2433 = vpop.f32.mrb[0].mxu0
      %v2434 = vadd.f32 0.0, %v2433
      %v2435 = vpop.f32.mrb[0].mxu0
      %v2436 = vpop.f32.mrb[0].mxu0
      %v2437 = vadd.f32 0.0, %v2436
      %v2438 = vpop.f32.mrb[0].mxu0
      %2439 = vmatprep.mubr.bf16.mxu0 %v1730
      %2440 = vmatmul.mubr.bf16.gmra.mrb[0].mxu0 %v1729
      %v2441 = vpop.f32.mrb[0].mxu0
      %v2442 = vadd.f32 0.0, %v2441
      %v2443 = vpop.f32.mrb[0].mxu0
      %v2444 = vpop.f32.mrb[0].mxu0
      %v2445 = vadd.f32 0.0, %v2444
      %v2446 = vpop.f32.mrb[0].mxu0
      %2447 = vmatprep.mubr.bf16.mxu0 %v1732
      %2448 = vmatmul.mubr.bf16.gmra.mrb[0].mxu0 %v1731
      %v2449 = vpop.f32.mrb[0].mxu0
      %v2450 = vadd.f32 0.0, %v2449
      %v2451 = vpop.f32.mrb[0].mxu0
      %v2452 = vpop.f32.mrb[0].mxu0
      %v2453 = vadd.f32 0.0, %v2452
      %v2454 = vpop.f32.mrb[0].mxu0
      %2455 = vmatprep.mubr.bf16.mxu0 %v1734
      %2456 = vmatmul.mubr.bf16.gmra.mrb[0].mxu0 %v1733
      %v2457 = vpop.f32.mrb[0].mxu0
      %v2458 = vadd.f32 0.0, %v2457
      %v2459 = vpop.f32.mrb[0].mxu0
      %v2460 = vpop.f32.mrb[0].mxu0
      %v2461 = vadd.f32 0.0, %v2460
      %v2462 = vpop.f32.mrb[0].mxu0
      %2463 = vmatprep.mubr.bf16.mxu0 %v1736
      %2464 = vmatmul.mubr.bf16.gmra.mrb[0].mxu0 %v1735
      %v2465 = vpop.f32.mrb[0].mxu0
      %v2466 = vadd.f32 0.0, %v2465
      %v2467 = vpop.f32.mrb[0].mxu0
      %v2468 = vpop.f32.mrb[0].mxu0
      %v2469 = vadd.f32 0.0, %v2468
      %v2470 = vpop.f32.mrb[0].mxu0
      %2471 = vmatprep.mubr.bf16.mxu0 %v1738
      %2472 = vmatmul.mubr.bf16.gmra.mrb[0].mxu0 %v1737
      %v2473 = vpop.f32.mrb[0].mxu0
      %v2474 = vadd.f32 0.0, %v2473
      %v2475 = vpop.f32.mrb[0].mxu0
      %v2476 = vpop.f32.mrb[0].mxu0
      %v2477 = vadd.f32 0.0, %v2476
      %v2478 = vpop.f32.mrb[0].mxu0
      %2479 = vmatprep.mubr.bf16.mxu0 %v1740
      %2480 = vmatmul.mubr.bf16.gmra.mrb[0].mxu0 %v1739
      %v2481 = vpop.f32.mrb[0].mxu0
      %v2482 = vadd.f32 0.0, %v2481
      %v2483 = vpop.f32.mrb[0].mxu0
      %v2484 = vpop.f32.mrb[0].mxu0
      %v2485 = vadd.f32 0.0, %v2484
      %v2486 = vpop.f32.mrb[0].mxu0
      %2487 = vmatprep.mubr.bf16.mxu0 %v1742
      %2488 = vmatmul.mubr.bf16.gmra.mrb[0].mxu0 %v1741
      %v2489 = vpop.f32.mrb[0].mxu0
      %v2490 = vadd.f32 0.0, %v2489
      %v2491 = vpop.f32.mrb[0].mxu0
      %v2492 = vpop.f32.mrb[0].mxu0
      %v2493 = vadd.f32 0.0, %v2492
      %v2494 = vpop.f32.mrb[0].mxu0
      %2495 = vmatprep.mubr.bf16.mxu0 %v1744
      %2496 = vmatmul.mubr.bf16.gmra.mrb[0].mxu0 %v1743
      %v2497 = vpop.f32.mrb[0].mxu0
      %v2498 = vadd.f32 0.0, %v2497
      %v2499 = vpop.f32.mrb[0].mxu0
      %v2500 = vpop.f32.mrb[0].mxu0
      %v2501 = vadd.f32 0.0, %v2500
      %v2502 = vpop.f32.mrb[0].mxu0
      %2503 = vmatprep.mubr.bf16.mxu0 %v1746
      %2504 = vmatmul.mubr.bf16.gmra.mrb[0].mxu0 %v1745
      %v2505 = vpop.f32.mrb[0].mxu0
      %v2506 = vadd.f32 0.0, %v2505
      %v2507 = vpop.f32.mrb[0].mxu0
      %v2508 = vpop.f32.mrb[0].mxu0
      %v2509 = vadd.f32 0.0, %v2508
      %v2510 = vpop.f32.mrb[0].mxu0
      %2511 = vmatprep.mubr.bf16.mxu0 %v1748
      %2512 = vmatmul.mubr.bf16.gmra.mrb[0].mxu0 %v1747
      %v2513 = vpop.f32.mrb[0].mxu0
      %v2514 = vadd.f32 0.0, %v2513
      %v2515 = vpop.f32.mrb[0].mxu0
      %v2516 = vpop.f32.mrb[0].mxu0
      %v2517 = vadd.f32 0.0, %v2516
      %v2518 = vpop.f32.mrb[0].mxu0
      %2519 = vmatprep.mubr.bf16.mxu0 %v1750
      %2520 = vmatmul.mubr.bf16.gmra.mrb[0].mxu0 %v1749
      %v2521 = vpop.f32.mrb[0].mxu0
      %v2522 = vadd.f32 0.0, %v2521
      %v2523 = vpop.f32.mrb[0].mxu0
      %v2524 = vpop.f32.mrb[0].mxu0
      %v2525 = vadd.f32 0.0, %v2524
      %v2526 = vpop.f32.mrb[0].mxu0
      %2527 = vmatprep.mubr.bf16.mxu0 %v1752
      %2528 = vmatmul.mubr.bf16.gmra.mrb[0].mxu0 %v1751
      %v2529 = vpop.f32.mrb[0].mxu0
      %v2530 = vadd.f32 0.0, %v2529
      %v2531 = vpop.f32.mrb[0].mxu0
      %v2532 = vpop.f32.mrb[0].mxu0
      %v2533 = vadd.f32 0.0, %v2532
      %v2534 = vpop.f32.mrb[0].mxu0
      %2535 = vdwg.mxu0
      %v2536 = vpack.c.bf16 %v1941, %v1938
      %v2537 = vpack.c.bf16 %v1949, %v1946
      %v2538 = vpack.c.bf16 %v1957, %v1954
      %v2539 = vpack.c.bf16 %v1965, %v1962
      %v2540 = vpack.c.bf16 %v1973, %v1970
      %v2541 = vpack.c.bf16 %v1981, %v1978
      %v2542 = vpack.c.bf16 %v1989, %v1986
      %v2543 = vpack.c.bf16 %v1997, %v1994
      %v2544 = vpack.c.bf16 %v2005, %v2002
      %v2545 = vpack.c.bf16 %v2013, %v2010
      %v2546 = vpack.c.bf16 %v2021, %v2018
      %v2547 = vpack.c.bf16 %v2029, %v2026
      %v2548 = vpack.c.bf16 %v2037, %v2034
      %v2549 = vpack.c.bf16 %v2045, %v2042
      %v2550 = vpack.c.bf16 %v2053, %v2050
      %v2551 = vpack.c.bf16 %v2061, %v2058
      %v2552 = vpack.c.bf16 %v2069, %v2066
      %v2553 = vpack.c.bf16 %v2077, %v2074
      %v2554 = vpack.c.bf16 %v2085, %v2082
      %v2555 = vpack.c.bf16 %v2093, %v2090
      %v2556 = vpack.c.bf16 %v2101, %v2098
      %v2557 = vpack.c.bf16 %v2109, %v2106
      %v2558 = vpack.c.bf16 %v2117, %v2114
      %v2559 = vpack.c.bf16 %v2125, %v2122
      %v2560 = vpack.c.bf16 %v2133, %v2130
      %v2561 = vpack.c.bf16 %v2141, %v2138
      %v2562 = vpack.c.bf16 %v2149, %v2146
      %v2563 = vpack.c.bf16 %v2157, %v2154
      %v2564 = vpack.c.bf16 %v2165, %v2162
      %v2565 = vpack.c.bf16 %v2173, %v2170
      %v2566 = vpack.c.bf16 %v2181, %v2178
      %v2567 = vpack.c.bf16 %v2189, %v2186
      %v2568 = vpack.c.bf16 %v2197, %v2194
      %v2569 = vpack.c.bf16 %v2205, %v2202
      %v2570 = vpack.c.bf16 %v2213, %v2210
      %v2571 = vpack.c.bf16 %v2221, %v2218
      %v2572 = vpack.c.bf16 %v2229, %v2226
      %v2573 = vpack.c.bf16 %v2237, %v2234
      %v2574 = vpack.c.bf16 %v2245, %v2242
      %v2575 = vpack.c.bf16 %v2253, %v2250
      %v2576 = vpack.c.bf16 %v2261, %v2258
      %v2577 = vpack.c.bf16 %v2269, %v2266
      %v2578 = vpack.c.bf16 %v2277, %v2274
      %v2579 = vpack.c.bf16 %v2285, %v2282
      %v2580 = vpack.c.bf16 %v2293, %v2290
      %v2581 = vpack.c.bf16 %v2301, %v2298
      %v2582 = vpack.c.bf16 %v2309, %v2306
      %v2583 = vpack.c.bf16 %v2317, %v2314
      %v2584 = vpack.c.bf16 %v2325, %v2322
      %v2585 = vpack.c.bf16 %v2333, %v2330
      %v2586 = vpack.c.bf16 %v2341, %v2338
      %v2587 = vpack.c.bf16 %v2349, %v2346
      %v2588 = vpack.c.bf16 %v2357, %v2354
      %v2589 = vpack.c.bf16 %v2365, %v2362
      %v2590 = vpack.c.bf16 %v2373, %v2370
      %v2591 = vpack.c.bf16 %v2381, %v2378
      %v2592 = vpack.c.bf16 %v2389, %v2386
      %v2593 = vpack.c.bf16 %v2397, %v2394
      %v2594 = vpack.c.bf16 %v2405, %v2402
      %v2595 = vpack.c.bf16 %v2413, %v2410
      %v2596 = vpack.c.bf16 %v2421, %v2418
      %v2597 = vpack.c.bf16 %v2429, %v2426
      %v2598 = vpack.c.bf16 %v2437, %v2434
      %v2599 = vpack.c.bf16 %v2445, %v2442
      %v2600 = vpack.c.bf16 %v2453, %v2450
      %v2601 = vpack.c.bf16 %v2461, %v2458
      %v2602 = vpack.c.bf16 %v2469, %v2466
      %v2603 = vpack.c.bf16 %v2477, %v2474
      %v2604 = vpack.c.bf16 %v2485, %v2482
      %v2605 = vpack.c.bf16 %v2493, %v2490
      %v2606 = vpack.c.bf16 %v2501, %v2498
      %v2607 = vpack.c.bf16 %v2509, %v2506
      %v2608 = vpack.c.bf16 %v2517, %v2514
      %v2609 = vpack.c.bf16 %v2525, %v2522
      %v2610 = vpack.c.bf16 %v2533, %v2530
      %2614 = vrot.lane.b32.xlu0 %v2539, 32
      %v2615 = vpop.permute.xlu0 %2614
      %2616 = vrot.lane.b32.xlu0 %v2540, 32
      %v2617 = vpop.permute.xlu0 %2616
      %2618 = vrot.lane.b32.xlu0 %v2541, 32
      %v2619 = vpop.permute.xlu0 %2618
      %2623 = vrot.lane.b32.xlu0 %v2542, 64
      %v2624 = vpop.permute.xlu0 %2623
      %2625 = vrot.lane.b32.xlu0 %v2543, 64
      %v2626 = vpop.permute.xlu0 %2625
      %2627 = vrot.lane.b32.xlu0 %v2544, 64
      %v2628 = vpop.permute.xlu0 %2627
      %2632 = vrot.lane.b32.xlu0 %v2545, 96
      %v2633 = vpop.permute.xlu0 %2632
      %2634 = vrot.lane.b32.xlu0 %v2546, 96
      %v2635 = vpop.permute.xlu0 %2634
      %2636 = vrot.lane.b32.xlu0 %v2547, 96
      %v2637 = vpop.permute.xlu0 %2636
      %2641 = vrot.lane.b32.xlu0 %v2551, 32
      %v2642 = vpop.permute.xlu0 %2641
      %2643 = vrot.lane.b32.xlu0 %v2552, 32
      %v2644 = vpop.permute.xlu0 %2643
      %2645 = vrot.lane.b32.xlu0 %v2553, 32
      %v2646 = vpop.permute.xlu0 %2645
      %2650 = vrot.lane.b32.xlu0 %v2554, 64
      %v2651 = vpop.permute.xlu0 %2650
      %2652 = vrot.lane.b32.xlu0 %v2555, 64
      %v2653 = vpop.permute.xlu0 %2652
      %2654 = vrot.lane.b32.xlu0 %v2556, 64
      %v2655 = vpop.permute.xlu0 %2654
      %2659 = vrot.lane.b32.xlu0 %v2557, 96
      %v2660 = vpop.permute.xlu0 %2659
      %2661 = vrot.lane.b32.xlu0 %v2558, 96
      %v2662 = vpop.permute.xlu0 %2661
      %2663 = vrot.lane.b32.xlu0 %v2559, 96
      %v2664 = vpop.permute.xlu0 %2663
      %2668 = vrot.lane.b32.xlu0 %v2563, 32
      %v2669 = vpop.permute.xlu0 %2668
      %2670 = vrot.lane.b32.xlu0 %v2564, 32
      %v2671 = vpop.permute.xlu0 %2670
      %2672 = vrot.lane.b32.xlu0 %v2565, 32
      %v2673 = vpop.permute.xlu0 %2672
      %2677 = vrot.lane.b32.xlu0 %v2566, 64
      %v2678 = vpop.permute.xlu0 %2677
      %2679 = vrot.lane.b32.xlu0 %v2567, 64
      %v2680 = vpop.permute.xlu0 %2679
      %2681 = vrot.lane.b32.xlu0 %v2568, 64
      %v2682 = vpop.permute.xlu0 %2681
      %2686 = vrot.lane.b32.xlu0 %v2569, 96
      %v2687 = vpop.permute.xlu0 %2686
      %2688 = vrot.lane.b32.xlu0 %v2570, 96
      %v2689 = vpop.permute.xlu0 %2688
      %2690 = vrot.lane.b32.xlu0 %v2571, 96
      %v2691 = vpop.permute.xlu0 %2690
      %2695 = vrot.lane.b32.xlu0 %v2575, 32
      %v2696 = vpop.permute.xlu0 %2695
      %2697 = vrot.lane.b32.xlu0 %v2576, 32
      %v2698 = vpop.permute.xlu0 %2697
      %2699 = vrot.lane.b32.xlu0 %v2577, 32
      %v2700 = vpop.permute.xlu0 %2699
      %2704 = vrot.lane.b32.xlu0 %v2578, 64
      %v2705 = vpop.permute.xlu0 %2704
      %2706 = vrot.lane.b32.xlu0 %v2579, 64
      %v2707 = vpop.permute.xlu0 %2706
      %2708 = vrot.lane.b32.xlu0 %v2580, 64
      %v2709 = vpop.permute.xlu0 %2708
      %2713 = vrot.lane.b32.xlu0 %v2581, 96
      %v2714 = vpop.permute.xlu0 %2713
      %2715 = vrot.lane.b32.xlu0 %v2582, 96
      %v2716 = vpop.permute.xlu0 %2715
      %2717 = vrot.lane.b32.xlu0 %v2583, 96
      %v2718 = vpop.permute.xlu0 %2717
      %vm2719 = vcmask 261120
      %v2722 = vsel %vm2719, %v2536, %v2615
      %v2725 = vsel %vm2719, %v2537, %v2617
      %v2728 = vsel %vm2719, %v2538, %v2619
      %vm2729 = vcmask 523264
      %v2731 = vsel %vm2729, %v2722, %v2624
      %v2733 = vsel %vm2729, %v2725, %v2626
      %v2735 = vsel %vm2729, %v2728, %v2628
      %vm2736 = vcmask 785408
      %v2738 = vsel %vm2736, %v2731, %v2633
      %v2741 = vsel %vm2736, %v2733, %v2635
      %v2744 = vsel %vm2736, %v2735, %v2637
      %v2748 = vsel %vm2719, %v2548, %v2642
      %v2751 = vsel %vm2719, %v2549, %v2644
      %v2754 = vsel %vm2719, %v2550, %v2646
      %v2756 = vsel %vm2729, %v2748, %v2651
      %v2758 = vsel %vm2729, %v2751, %v2653
      %v2760 = vsel %vm2729, %v2754, %v2655
      %v2762 = vsel %vm2736, %v2756, %v2660
      %v2765 = vsel %vm2736, %v2758, %v2662
      %v2768 = vsel %vm2736, %v2760, %v2664
      %v2772 = vsel %vm2719, %v2560, %v2669
      %v2775 = vsel %vm2719, %v2561, %v2671
      %v2778 = vsel %vm2719, %v2562, %v2673
      %v2780 = vsel %vm2729, %v2772, %v2678
      %v2782 = vsel %vm2729, %v2775, %v2680
      %v2784 = vsel %vm2729, %v2778, %v2682
      %v2786 = vsel %vm2736, %v2780, %v2687
      %v2789 = vsel %vm2736, %v2782, %v2689
      %v2792 = vsel %vm2736, %v2784, %v2691
      %v2796 = vsel %vm2719, %v2572, %v2696
      %v2799 = vsel %vm2719, %v2573, %v2698
      %v2802 = vsel %vm2719, %v2574, %v2700
      %v2804 = vsel %vm2729, %v2796, %v2705
      %v2806 = vsel %vm2729, %v2799, %v2707
      %v2808 = vsel %vm2729, %v2802, %v2709
      %v2810 = vsel %vm2736, %v2804, %v2714
      %v2813 = vsel %vm2736, %v2806, %v2716
      %v2816 = vsel %vm2736, %v2808, %v2718
      %2821 = vrot.lane.b32.xlu0 %v2587, 32
      %v2822 = vpop.permute.xlu0 %2821
      %2823 = vrot.lane.b32.xlu0 %v2588, 32
      %v2824 = vpop.permute.xlu0 %2823
      %2825 = vrot.lane.b32.xlu0 %v2589, 32
      %v2826 = vpop.permute.xlu0 %2825
      %2830 = vrot.lane.b32.xlu0 %v2590, 64
      %v2831 = vpop.permute.xlu0 %2830
      %2832 = vrot.lane.b32.xlu0 %v2591, 64
      %v2833 = vpop.permute.xlu0 %2832
      %2834 = vrot.lane.b32.xlu0 %v2592, 64
      %v2835 = vpop.permute.xlu0 %2834
      %2839 = vrot.lane.b32.xlu0 %v2593, 96
      %v2840 = vpop.permute.xlu0 %2839
      %2841 = vrot.lane.b32.xlu0 %v2594, 96
      %v2842 = vpop.permute.xlu0 %2841
      %2843 = vrot.lane.b32.xlu0 %v2595, 96
      %v2844 = vpop.permute.xlu0 %2843
      %2848 = vrot.lane.b32.xlu0 %v2599, 32
      %v2849 = vpop.permute.xlu0 %2848
      %2850 = vrot.lane.b32.xlu0 %v2600, 32
      %v2851 = vpop.permute.xlu0 %2850
      %2852 = vrot.lane.b32.xlu0 %v2601, 32
      %v2853 = vpop.permute.xlu0 %2852
      %2857 = vrot.lane.b32.xlu0 %v2602, 64
      %v2858 = vpop.permute.xlu0 %2857
      %2859 = vrot.lane.b32.xlu0 %v2603, 64
      %v2860 = vpop.permute.xlu0 %2859
      %2861 = vrot.lane.b32.xlu0 %v2604, 64
      %v2862 = vpop.permute.xlu0 %2861
      %2866 = vrot.lane.b32.xlu0 %v2605, 96
      %v2867 = vpop.permute.xlu0 %2866
      %2868 = vrot.lane.b32.xlu0 %v2606, 96
      %v2869 = vpop.permute.xlu0 %2868
      %2870 = vrot.lane.b32.xlu0 %v2607, 96
      %v2871 = vpop.permute.xlu0 %2870
      %v2874 = vsel %vm2719, %v2584, %v2822
      %v2877 = vsel %vm2719, %v2585, %v2824
      %v2880 = vsel %vm2719, %v2586, %v2826
      %v2882 = vsel %vm2729, %v2874, %v2831
      %v2884 = vsel %vm2729, %v2877, %v2833
      %v2886 = vsel %vm2729, %v2880, %v2835
      %v2888 = vsel %vm2736, %v2882, %v2840
      %v2891 = vsel %vm2736, %v2884, %v2842
      %v2894 = vsel %vm2736, %v2886, %v2844
      %v2898 = vsel %vm2719, %v2596, %v2849
      %v2901 = vsel %vm2719, %v2597, %v2851
      %v2904 = vsel %vm2719, %v2598, %v2853
      %v2906 = vsel %vm2729, %v2898, %v2858
      %v2908 = vsel %vm2729, %v2901, %v2860
      %v2910 = vsel %vm2729, %v2904, %v2862
      %v2912 = vsel %vm2736, %v2906, %v2867
      %v2915 = vsel %vm2736, %v2908, %v2869
      %v2918 = vsel %vm2736, %v2910, %v2871
      %v2920 = vld [vmem:[%s4] sm:$0xf]
      %v2921 = vld [vmem:[%s4 + $0x4] sm:$0xf]
      %v2922 = vld [vmem:[%s4 + $0x8] sm:$0xf]
      %v2923 = vld [vmem:[%s4 + $0xc] sm:$0xf]
      %v2924 = vld [vmem:[%s4 + $0x10] sm:$0xf]
      %v2925 = vld [vmem:[%s4 + $0x14] sm:$0xf]
      %v2926 = vld [vmem:[%s4 + $0x18] sm:$0xf]
      %v2927 = vld [vmem:[%s4 + $0x1c] sm:$0xf]
      %v2928 = vld [vmem:[%s4 + $0x20] sm:$0xf]
      %v2929 = vld [vmem:[%s4 + $0x24] sm:$0xf]
      %v2930 = vld [vmem:[%s4 + $0x28] sm:$0xf]
      %v2931 = vld [vmem:[%s4 + $0x2c] sm:$0xf]
      %v2932 = vld [vmem:[%s4 + $0x30] sm:$0xf]
      %v2933 = vld [vmem:[%s4 + $0x34] sm:$0xf]
      %v2934 = vld [vmem:[%s4 + $0x38] sm:$0xf]
      %v2935 = vld [vmem:[%s4 + $0x3c] sm:$0xf]
      %v2936 = vld [vmem:[%s4 + $0x40] sm:$0xf]
      %v2937 = vld [vmem:[%s4 + $0x44] sm:$0xf]
      %v2938 = vld [vmem:[%s4 + $0x48] sm:$0xf]
      %v2939 = vld [vmem:[%s4 + $0x4c] sm:$0xf]
      %v2940 = vld [vmem:[%s4 + $0x50] sm:$0xf]
      %v2941 = vld [vmem:[%s4 + $0x54] sm:$0xf]
      %v2942 = vld [vmem:[%s4 + $0x58] sm:$0xf]
      %v2943 = vld [vmem:[%s4 + $0x5c] sm:$0xf]
      %v2944 = vld [vmem:[%s4 + $0x60] sm:$0xf]
      %v2945 = vld [vmem:[%s4 + $0x64] sm:$0xf]
      %v2946 = vld [vmem:[%s4 + $0x68] sm:$0xf]
      %v2947 = vld [vmem:[%s4 + $0x6c] sm:$0xf]
      %v2948 = vld [vmem:[%s4 + $0x70] sm:$0xf]
      %v2949 = vld [vmem:[%s4 + $0x74] sm:$0xf]
      %v2950 = vld [vmem:[%s4 + $0x78] sm:$0xf]
      %v2951 = vld [vmem:[%s4 + $0x7c] sm:$0xf]
      %v2952 = vld [vmem:[%s4 + $0x80] sm:$0xf]
      %v2953 = vld [vmem:[%s4 + $0x84] sm:$0xf]
      %v2954 = vld [vmem:[%s4 + $0x88] sm:$0xf]
      %v2955 = vld [vmem:[%s4 + $0x8c] sm:$0xf]
      %v2956 = vld [vmem:[%s4 + $0x90] sm:$0xf]
      %v2957 = vld [vmem:[%s4 + $0x94] sm:$0xf]
      %v2958 = vld [vmem:[%s4 + $0x98] sm:$0xf]
      %v2959 = vld [vmem:[%s4 + $0x9c] sm:$0xf]
      %v2960 = vld [vmem:[%s4 + $0xa0] sm:$0xf]
      %v2961 = vld [vmem:[%s4 + $0xa4] sm:$0xf]
      %v2962 = vld [vmem:[%s4 + $0xa8] sm:$0xf]
      %v2963 = vld [vmem:[%s4 + $0xac] sm:$0xf]
      %v2964 = vld [vmem:[%s4 + $0xb0] sm:$0xf]
      %v2965 = vld [vmem:[%s4 + $0xb4] sm:$0xf]
      %v2966 = vld [vmem:[%s4 + $0xb8] sm:$0xf]
      %v2967 = vld [vmem:[%s4 + $0xbc] sm:$0xf]
      %v2968 = vld [vmem:[%s4 + $0xc0] sm:$0xf]
      %v2969 = vld [vmem:[%s4 + $0xc4] sm:$0xf]
      %v2970 = vld [vmem:[%s4 + $0xc8] sm:$0xf]
      %v2971 = vld [vmem:[%s4 + $0xcc] sm:$0xf]
      %v2972 = vld [vmem:[%s4 + $0xd0] sm:$0xf]
      %v2973 = vld [vmem:[%s4 + $0xd4] sm:$0xf]
      %v2974 = vld [vmem:[%s4 + $0xd8] sm:$0xf]
      %v2975 = vld [vmem:[%s4 + $0xdc] sm:$0xf]
      %v2976 = vld [vmem:[%s4 + $0xe0] sm:$0xf]
      %v2977 = vld [vmem:[%s4 + $0xe4] sm:$0xf]
      %v2978 = vld [vmem:[%s4 + $0xe8] sm:$0xf]
      %v2979 = vld [vmem:[%s4 + $0xec] sm:$0xf]
      %v2980 = vld [vmem:[%s4 + $0xf0] sm:$0xf]
      %v2981 = vld [vmem:[%s4 + $0xf4] sm:$0xf]
      %v2982 = vld [vmem:[%s4 + $0xf8] sm:$0xf]
      %v2983 = vld [vmem:[%s4 + $0xfc] sm:$0xf]
      %v2984 = vld [vmem:[%s4 + $0x100] sm:$0xf]
      %v2985 = vld [vmem:[%s4 + $0x104] sm:$0xf]
      %v2986 = vld [vmem:[%s4 + $0x108] sm:$0xf]
      %v2987 = vld [vmem:[%s4 + $0x10c] sm:$0xf]
      %v2988 = vld [vmem:[%s4 + $0x110] sm:$0xf]
      %v2989 = vld [vmem:[%s4 + $0x114] sm:$0xf]
      %v2990 = vld [vmem:[%s4 + $0x118] sm:$0xf]
      %v2991 = vld [vmem:[%s4 + $0x11c] sm:$0xf]
      %v2992 = vld [vmem:[%s4 + $0x120] sm:$0xf]
      %v2993 = vld [vmem:[%s4 + $0x124] sm:$0xf]
      %v2994 = vld [vmem:[%s4 + $0x128] sm:$0xf]
      %v2995 = vld [vmem:[%s4 + $0x12c] sm:$0xf]
      %v2996 = vld [vmem:[%s4 + $0x130] sm:$0xf]
      %v2997 = vld [vmem:[%s4 + $0x134] sm:$0xf]
      %v2998 = vld [vmem:[%s4 + $0x138] sm:$0xf]
      %v2999 = vld [vmem:[%s4 + $0x13c] sm:$0xf]
      %v3000 = vld [vmem:[%s4 + $0x140] sm:$0xf]
      %v3001 = vld [vmem:[%s4 + $0x144] sm:$0xf]
      %v3002 = vld [vmem:[%s4 + $0x148] sm:$0xf]
      %v3003 = vld [vmem:[%s4 + $0x14c] sm:$0xf]
      %v3004 = vld [vmem:[%s4 + $0x150] sm:$0xf]
      %v3005 = vld [vmem:[%s4 + $0x154] sm:$0xf]
      %v3006 = vld [vmem:[%s4 + $0x158] sm:$0xf]
      %v3007 = vld [vmem:[%s4 + $0x15c] sm:$0xf]
      %v3008 = vld [vmem:[%s4 + $0x160] sm:$0xf]
      %v3009 = vld [vmem:[%s4 + $0x164] sm:$0xf]
      %v3010 = vld [vmem:[%s4 + $0x168] sm:$0xf]
      %v3011 = vld [vmem:[%s4 + $0x16c] sm:$0xf]
      %v3012 = vld [vmem:[%s4 + $0x170] sm:$0xf]
      %v3013 = vld [vmem:[%s4 + $0x174] sm:$0xf]
      %v3014 = vld [vmem:[%s4 + $0x178] sm:$0xf]
      %v3015 = vld [vmem:[%s4 + $0x17c] sm:$0xf]
      %v3016 = vld [vmem:[%s4 + $0x180] sm:$0xf]
      %v3017 = vld [vmem:[%s4 + $0x184] sm:$0xf]
      %v3018 = vld [vmem:[%s4 + $0x188] sm:$0xf]
      %v3019 = vld [vmem:[%s4 + $0x18c] sm:$0xf]
      %v3020 = vld [vmem:[%s5] sm:$0x1]
      %v3022 = vlaneseq
      %v3023 = vshrl.u32 %v3022, 7
      %v3024 = vsub.s32 0, %v3023
      %v3025 = vrot.slane %v3020, %v3024
      %v3127 = vunpack.c.l.b16 %v2920
      %v3128 = vunpack.c.l.b16 %v2921
      %v3129 = vunpack.c.l.b16 %v2922
      %v3130 = vunpack.c.l.b16 %v2923
      %v3131 = vunpack.c.l.b16 %v2924
      %v3132 = vunpack.c.l.b16 %v2925
      %v3133 = vunpack.c.l.b16 %v2926
      %v3134 = vunpack.c.l.b16 %v2927
      %v3135 = vunpack.c.l.b16 %v2928
      %v3136 = vunpack.c.l.b16 %v2929
      %v3137 = vunpack.c.l.b16 %v2930
      %v3138 = vunpack.c.l.b16 %v2931
      %v3139 = vunpack.c.l.b16 %v2932
      %v3140 = vunpack.c.l.b16 %v2933
      %v3141 = vunpack.c.l.b16 %v2934
      %v3142 = vunpack.c.l.b16 %v2935
      %v3143 = vunpack.c.l.b16 %v2936
      %v3144 = vunpack.c.l.b16 %v2937
      %v3145 = vunpack.c.l.b16 %v2938
      %v3146 = vunpack.c.l.b16 %v2939
      %v3147 = vunpack.c.l.b16 %v2940
      %v3148 = vunpack.c.l.b16 %v2941
      %v3149 = vunpack.c.l.b16 %v2942
      %v3150 = vunpack.c.l.b16 %v2943
      %v3151 = vunpack.c.l.b16 %v2944
      %v3152 = vunpack.c.l.b16 %v2945
      %v3153 = vunpack.c.l.b16 %v2946
      %v3154 = vunpack.c.l.b16 %v2947
      %v3155 = vunpack.c.l.b16 %v2948
      %v3156 = vunpack.c.l.b16 %v2949
      %v3157 = vunpack.c.l.b16 %v2950
      %v3158 = vunpack.c.l.b16 %v2951
      %v3159 = vunpack.c.l.b16 %v2952
      %v3160 = vunpack.c.l.b16 %v2953
      %v3161 = vunpack.c.l.b16 %v2954
      %v3162 = vunpack.c.l.b16 %v2955
      %v3163 = vunpack.c.l.b16 %v2956
      %v3164 = vunpack.c.l.b16 %v2957
      %v3165 = vunpack.c.l.b16 %v2958
      %v3166 = vunpack.c.l.b16 %v2959
      %v3167 = vunpack.c.l.b16 %v2960
      %v3168 = vunpack.c.l.b16 %v2961
      %v3169 = vunpack.c.l.b16 %v2962
      %v3170 = vunpack.c.l.b16 %v2963
      %v3171 = vunpack.c.l.b16 %v2964
      %v3172 = vunpack.c.l.b16 %v2965
      %v3173 = vunpack.c.l.b16 %v2966
      %v3174 = vunpack.c.l.b16 %v2967
      %v3175 = vunpack.c.l.b16 %v2968
      %v3176 = vunpack.c.l.b16 %v2969
      %v3177 = vunpack.c.l.b16 %v2970
      %v3178 = vunpack.c.l.b16 %v2971
      %v3179 = vunpack.c.l.b16 %v2972
      %v3180 = vunpack.c.l.b16 %v2973
      %v3181 = vunpack.c.l.b16 %v2974
      %v3182 = vunpack.c.l.b16 %v2975
      %v3183 = vunpack.c.l.b16 %v2976
      %v3184 = vunpack.c.l.b16 %v2977
      %v3185 = vunpack.c.l.b16 %v2978
      %v3186 = vunpack.c.l.b16 %v2979
      %v3187 = vunpack.c.l.b16 %v2980
      %v3188 = vunpack.c.l.b16 %v2981
      %v3189 = vunpack.c.l.b16 %v2982
      %v3190 = vunpack.c.l.b16 %v2983
      %v3191 = vunpack.c.l.b16 %v2984
      %v3192 = vunpack.c.l.b16 %v2985
      %v3193 = vunpack.c.l.b16 %v2986
      %v3194 = vunpack.c.l.b16 %v2987
      %v3195 = vunpack.c.l.b16 %v2988
      %v3196 = vunpack.c.l.b16 %v2989
      %v3197 = vunpack.c.l.b16 %v2990
      %v3198 = vunpack.c.l.b16 %v2991
      %v3199 = vunpack.c.l.b16 %v2992
      %v3200 = vunpack.c.l.b16 %v2993
      %v3201 = vunpack.c.l.b16 %v2994
      %v3202 = vunpack.c.l.b16 %v2995
      %v3203 = vunpack.c.l.b16 %v2996
      %v3204 = vunpack.c.l.b16 %v2997
      %v3205 = vunpack.c.l.b16 %v2998
      %v3206 = vunpack.c.l.b16 %v2999
      %v3207 = vunpack.c.l.b16 %v3000
      %v3208 = vunpack.c.l.b16 %v3001
      %v3209 = vunpack.c.l.b16 %v3002
      %v3210 = vunpack.c.l.b16 %v3003
      %v3211 = vunpack.c.l.b16 %v3004
      %v3212 = vunpack.c.l.b16 %v3005
      %v3213 = vunpack.c.l.b16 %v3006
      %v3214 = vunpack.c.l.b16 %v3007
      %v3215 = vunpack.c.l.b16 %v3008
      %v3216 = vunpack.c.l.b16 %v3009
      %v3217 = vunpack.c.l.b16 %v3010
      %v3218 = vunpack.c.l.b16 %v3011
      %v3219 = vunpack.c.l.b16 %v3012
      %v3220 = vunpack.c.l.b16 %v3013
      %v3221 = vunpack.c.l.b16 %v3014
      %v3222 = vunpack.c.l.b16 %v3015
      %v3223 = vunpack.c.l.b16 %v3016
      %v3224 = vunpack.c.l.b16 %v3017
      %v3225 = vunpack.c.l.b16 %v3018
      %v3226 = vunpack.c.l.b16 %v3019
      %v3227 = vpack.c.b16 %v3128, %v3127
      %v3228 = vpack.c.b16 %v3130, %v3129
      %v3229 = vpack.c.b16 %v3132, %v3131
      %v3230 = vpack.c.b16 %v3134, %v3133
      %v3231 = vpack.c.b16 %v3136, %v3135
      %v3232 = vpack.c.b16 %v3138, %v3137
      %v3233 = vpack.c.b16 %v3140, %v3139
      %v3234 = vpack.c.b16 %v3142, %v3141
      %v3235 = vpack.c.b16 %v3144, %v3143
      %v3236 = vpack.c.b16 %v3146, %v3145
      %v3237 = vpack.c.b16 %v3148, %v3147
      %v3238 = vpack.c.b16 %v3150, %v3149
      %v3239 = vpack.c.b16 %v3152, %v3151
      %v3240 = vpack.c.b16 %v3154, %v3153
      %v3241 = vpack.c.b16 %v3156, %v3155
      %v3242 = vpack.c.b16 %v3158, %v3157
      %v3243 = vpack.c.b16 %v3160, %v3159
      %v3244 = vpack.c.b16 %v3162, %v3161
      %v3245 = vpack.c.b16 %v3164, %v3163
      %v3246 = vpack.c.b16 %v3166, %v3165
      %v3247 = vpack.c.b16 %v3168, %v3167
      %v3248 = vpack.c.b16 %v3170, %v3169
      %v3249 = vpack.c.b16 %v3172, %v3171
      %v3250 = vpack.c.b16 %v3174, %v3173
      %v3251 = vpack.c.b16 %v3176, %v3175
      %v3252 = vpack.c.b16 %v3178, %v3177
      %v3253 = vpack.c.b16 %v3180, %v3179
      %v3254 = vpack.c.b16 %v3182, %v3181
      %v3255 = vpack.c.b16 %v3184, %v3183
      %v3256 = vpack.c.b16 %v3186, %v3185
      %v3257 = vpack.c.b16 %v3188, %v3187
      %v3258 = vpack.c.b16 %v3190, %v3189
      %v3259 = vpack.c.b16 %v3192, %v3191
      %v3260 = vpack.c.b16 %v3194, %v3193
      %v3261 = vpack.c.b16 %v3196, %v3195
      %v3262 = vpack.c.b16 %v3198, %v3197
      %v3263 = vpack.c.b16 %v3200, %v3199
      %v3264 = vpack.c.b16 %v3202, %v3201
      %v3265 = vpack.c.b16 %v3204, %v3203
      %v3266 = vpack.c.b16 %v3206, %v3205
      %v3267 = vpack.c.b16 %v3208, %v3207
      %v3268 = vpack.c.b16 %v3210, %v3209
      %v3269 = vpack.c.b16 %v3212, %v3211
      %v3270 = vpack.c.b16 %v3214, %v3213
      %v3271 = vpack.c.b16 %v3216, %v3215
      %v3272 = vpack.c.b16 %v3218, %v3217
      %v3273 = vpack.c.b16 %v3220, %v3219
      %v3274 = vpack.c.b16 %v3222, %v3221
      %v3275 = vpack.c.b16 %v3224, %v3223
      %v3276 = vpack.c.b16 %v3226, %v3225
      %v3328 = vsel %vm2719, %v2608, 0
      %v3331 = vsel %vm2719, %v2609, 0
      %v3334 = vsel %vm2719, %v2610, 0
      %3336 = vmatprep.subr.bf16.mxu0 0
      %3337 = vmatpush1.bf16.msra.mxu0 %v3227
      %3338 = vmatprep.subr.bf16.mxu0 0
      %3339 = vmatpush1.bf16.msra.mxu0 %v3228
      %3340 = vmatprep.subr.bf16.mxu0 0
      %3341 = vmatpush1.bf16.msra.mxu0 %v3229
      %3342 = vmatprep.subr.bf16.mxu0 0
      %3343 = vmatpush1.bf16.msra.mxu0 %v3230
      %3344 = vmatprep.subr.bf16.mxu0 0
      %3345 = vmatpush1.bf16.msra.mxu0 %v3231
      %3346 = vmatprep.subr.bf16.mxu0 0
      %3347 = vmatpush1.bf16.msra.mxu0 %v3232
      %3348 = vmatprep.subr.bf16.mxu0 0
      %3349 = vmatpush1.bf16.msra.mxu0 %v3233
      %3350 = vmatprep.subr.bf16.mxu0 0
      %3351 = vmatpush1.bf16.msra.mxu0 %v3234
      %3352 = vmatprep.subr.bf16.mxu0 0
      %3353 = vmatpush1.bf16.msra.mxu0 %v3235
      %3354 = vmatprep.subr.bf16.mxu0 0
      %3355 = vmatpush1.bf16.msra.mxu0 %v3236
      %3356 = vmatprep.subr.bf16.mxu0 0
      %3357 = vmatpush1.bf16.msra.mxu0 %v3237
      %3358 = vmatprep.subr.bf16.mxu0 0
      %3359 = vmatpush1.bf16.msra.mxu0 %v3238
      %3360 = vmatprep.subr.bf16.mxu0 0
      %3361 = vmatpush1.bf16.msra.mxu0 %v3239
      %3362 = vmatprep.subr.bf16.mxu0 0
      %3363 = vmatpush1.bf16.msra.mxu0 %v3240
      %3364 = vmatprep.subr.bf16.mxu0 0
      %3365 = vmatpush1.bf16.msra.mxu0 %v3241
      %3366 = vmatprep.subr.bf16.mxu0 0
      %3367 = vmatpush1.bf16.msra.mxu0 %v3242
      %3368 = vmatprep.mubr.bf16.mxu0 %v2762
      %3369 = vmatmul.mubr.bf16.gmra.mrb[0].mxu0 %v2738
      %v3370 = vpop.f32.mrb[0].mxu0
      %v3371 = vadd.f32 %v3025, %v3370
      %v3372 = vpop.f32.mrb[0].mxu0
      %v3373 = vpop.f32.mrb[0].mxu0
      %v3374 = vadd.f32 %v3025, %v3373
      %v3375 = vpop.f32.mrb[0].mxu0
      %3376 = vmatprep.mubr.bf16.mxu0 %v2765
      %3377 = vmatmul.mubr.bf16.gmra.mrb[0].mxu0 %v2741
      %v3378 = vpop.f32.mrb[0].mxu0
      %v3379 = vadd.f32 %v3025, %v3378
      %v3380 = vpop.f32.mrb[0].mxu0
      %v3381 = vpop.f32.mrb[0].mxu0
      %v3382 = vadd.f32 %v3025, %v3381
      %v3383 = vpop.f32.mrb[0].mxu0
      %3384 = vmatprep.mubr.bf16.mxu0 %v2768
      %3385 = vmatmul.mubr.bf16.gmra.mrb[0].mxu0 %v2744
      %v3386 = vpop.f32.mrb[0].mxu0
      %v3387 = vadd.f32 %v3025, %v3386
      %v3388 = vpop.f32.mrb[0].mxu0
      %v3389 = vpop.f32.mrb[0].mxu0
      %v3390 = vadd.f32 %v3025, %v3389
      %v3391 = vpop.f32.mrb[0].mxu0
      %3392 = vdwg.mxu0
      %3393 = vmatprep.subr.bf16.mxu0 0
      %3394 = vmatpush1.bf16.msra.mxu0 %v3243
      %3395 = vmatprep.subr.bf16.mxu0 0
      %3396 = vmatpush1.bf16.msra.mxu0 %v3244
      %3397 = vmatprep.subr.bf16.mxu0 0
      %3398 = vmatpush1.bf16.msra.mxu0 %v3245
      %3399 = vmatprep.subr.bf16.mxu0 0
      %3400 = vmatpush1.bf16.msra.mxu0 %v3246
      %3401 = vmatprep.subr.bf16.mxu0 0
      %3402 = vmatpush1.bf16.msra.mxu0 %v3247
      %3403 = vmatprep.subr.bf16.mxu0 0
      %3404 = vmatpush1.bf16.msra.mxu0 %v3248
      %3405 = vmatprep.subr.bf16.mxu0 0
      %3406 = vmatpush1.bf16.msra.mxu0 %v3249
      %3407 = vmatprep.subr.bf16.mxu0 0
      %3408 = vmatpush1.bf16.msra.mxu0 %v3250
      %3409 = vmatprep.subr.bf16.mxu0 0
      %3410 = vmatpush1.bf16.msra.mxu0 %v3251
      %3411 = vmatprep.subr.bf16.mxu0 0
      %3412 = vmatpush1.bf16.msra.mxu0 %v3252
      %3413 = vmatprep.subr.bf16.mxu0 0
      %3414 = vmatpush1.bf16.msra.mxu0 %v3253
      %3415 = vmatprep.subr.bf16.mxu0 0
      %3416 = vmatpush1.bf16.msra.mxu0 %v3254
      %3417 = vmatprep.subr.bf16.mxu0 0
      %3418 = vmatpush1.bf16.msra.mxu0 %v3255
      %3419 = vmatprep.subr.bf16.mxu0 0
      %3420 = vmatpush1.bf16.msra.mxu0 %v3256
      %3421 = vmatprep.subr.bf16.mxu0 0
      %3422 = vmatpush1.bf16.msra.mxu0 %v3257
      %3423 = vmatprep.subr.bf16.mxu0 0
      %3424 = vmatpush1.bf16.msra.mxu0 %v3258
      %3425 = vmatprep.mubr.bf16.mxu0 %v2810
      %3426 = vmatmul.mubr.bf16.gmra.mrb[0].mxu0 %v2786
      %v3427 = vpop.f32.mrb[0].mxu0
      %v3428 = vadd.f32 %v3371, %v3427
      %v3429 = vpop.f32.mrb[0].mxu0
      %v3430 = vpop.f32.mrb[0].mxu0
      %v3431 = vadd.f32 %v3374, %v3430
      %v3432 = vpop.f32.mrb[0].mxu0
      %3433 = vmatprep.mubr.bf16.mxu0 %v2813
      %3434 = vmatmul.mubr.bf16.gmra.mrb[0].mxu0 %v2789
      %v3435 = vpop.f32.mrb[0].mxu0
      %v3436 = vadd.f32 %v3379, %v3435
      %v3437 = vpop.f32.mrb[0].mxu0
      %v3438 = vpop.f32.mrb[0].mxu0
      %v3439 = vadd.f32 %v3382, %v3438
      %v3440 = vpop.f32.mrb[0].mxu0
      %3441 = vmatprep.mubr.bf16.mxu0 %v2816
      %3442 = vmatmul.mubr.bf16.gmra.mrb[0].mxu0 %v2792
      %v3443 = vpop.f32.mrb[0].mxu0
      %v3444 = vadd.f32 %v3387, %v3443
      %v3445 = vpop.f32.mrb[0].mxu0
      %v3446 = vpop.f32.mrb[0].mxu0
      %v3447 = vadd.f32 %v3390, %v3446
      %v3448 = vpop.f32.mrb[0].mxu0
      %3449 = vdwg.mxu0
      %3450 = vmatprep.subr.bf16.mxu0 0
      %3451 = vmatpush1.bf16.msra.mxu0 %v3259
      %3452 = vmatprep.subr.bf16.mxu0 0
      %3453 = vmatpush1.bf16.msra.mxu0 %v3260
      %3454 = vmatprep.subr.bf16.mxu0 0
      %3455 = vmatpush1.bf16.msra.mxu0 %v3261
      %3456 = vmatprep.subr.bf16.mxu0 0
      %3457 = vmatpush1.bf16.msra.mxu0 %v3262
      %3458 = vmatprep.subr.bf16.mxu0 0
      %3459 = vmatpush1.bf16.msra.mxu0 %v3263
      %3460 = vmatprep.subr.bf16.mxu0 0
      %3461 = vmatpush1.bf16.msra.mxu0 %v3264
      %3462 = vmatprep.subr.bf16.mxu0 0
      %3463 = vmatpush1.bf16.msra.mxu0 %v3265
      %3464 = vmatprep.subr.bf16.mxu0 0
      %3465 = vmatpush1.bf16.msra.mxu0 %v3266
      %3466 = vmatprep.subr.bf16.mxu0 0
      %3467 = vmatpush1.bf16.msra.mxu0 %v3267
      %3468 = vmatprep.subr.bf16.mxu0 0
      %3469 = vmatpush1.bf16.msra.mxu0 %v3268
      %3470 = vmatprep.subr.bf16.mxu0 0
      %3471 = vmatpush1.bf16.msra.mxu0 %v3269
      %3472 = vmatprep.subr.bf16.mxu0 0
      %3473 = vmatpush1.bf16.msra.mxu0 %v3270
      %3474 = vmatprep.subr.bf16.mxu0 0
      %3475 = vmatpush1.bf16.msra.mxu0 %v3271
      %3476 = vmatprep.subr.bf16.mxu0 0
      %3477 = vmatpush1.bf16.msra.mxu0 %v3272
      %3478 = vmatprep.subr.bf16.mxu0 0
      %3479 = vmatpush1.bf16.msra.mxu0 %v3273
      %3480 = vmatprep.subr.bf16.mxu0 0
      %3481 = vmatpush1.bf16.msra.mxu0 %v3274
      %3482 = vmatprep.mubr.bf16.mxu0 %v2912
      %3483 = vmatmul.mubr.bf16.gmra.mrb[0].mxu0 %v2888
      %v3484 = vpop.f32.mrb[0].mxu0
      %v3485 = vadd.f32 %v3428, %v3484
      %v3486 = vpop.f32.mrb[0].mxu0
      %v3487 = vpop.f32.mrb[0].mxu0
      %v3488 = vadd.f32 %v3431, %v3487
      %v3489 = vpop.f32.mrb[0].mxu0
      %3490 = vmatprep.mubr.bf16.mxu0 %v2915
      %3491 = vmatmul.mubr.bf16.gmra.mrb[0].mxu0 %v2891
      %v3492 = vpop.f32.mrb[0].mxu0
      %v3493 = vadd.f32 %v3436, %v3492
      %v3494 = vpop.f32.mrb[0].mxu0
      %v3495 = vpop.f32.mrb[0].mxu0
      %v3496 = vadd.f32 %v3439, %v3495
      %v3497 = vpop.f32.mrb[0].mxu0
      %3498 = vmatprep.mubr.bf16.mxu0 %v2918
      %3499 = vmatmul.mubr.bf16.gmra.mrb[0].mxu0 %v2894
      %v3500 = vpop.f32.mrb[0].mxu0
      %v3501 = vadd.f32 %v3444, %v3500
      %v3502 = vpop.f32.mrb[0].mxu0
      %v3503 = vpop.f32.mrb[0].mxu0
      %v3504 = vadd.f32 %v3447, %v3503
      %v3505 = vpop.f32.mrb[0].mxu0
      %3506 = vdwg.mxu0
      %3507 = vmatprep.subr.bf16.mxu0 0
      %3508 = vmatpush1.bf16.msra.mxu0 %v3275
      %3509 = vmatprep.subr.bf16.mxu0 0
      %3510 = vmatpush1.bf16.msra.mxu0 %v3276
      %3511 = vmatprep.subr.bf16.mxu0 0
      %3512 = vmatpush1.bf16.msra.mxu0 0
      %3513 = vmatprep.subr.bf16.mxu0 0
      %3514 = vmatpush1.bf16.msra.mxu0 0
      %3515 = vmatprep.subr.bf16.mxu0 0
      %3516 = vmatpush1.bf16.msra.mxu0 0
      %3517 = vmatprep.subr.bf16.mxu0 0
      %3518 = vmatpush1.bf16.msra.mxu0 0
      %3519 = vmatprep.subr.bf16.mxu0 0
      %3520 = vmatpush1.bf16.msra.mxu0 0
      %3521 = vmatprep.subr.bf16.mxu0 0
      %3522 = vmatpush1.bf16.msra.mxu0 0
      %3523 = vmatprep.subr.bf16.mxu0 0
      %3524 = vmatpush1.bf16.msra.mxu0 0
      %3525 = vmatprep.subr.bf16.mxu0 0
      %3526 = vmatpush1.bf16.msra.mxu0 0
      %3527 = vmatprep.subr.bf16.mxu0 0
      %3528 = vmatpush1.bf16.msra.mxu0 0
      %3529 = vmatprep.subr.bf16.mxu0 0
      %3530 = vmatpush1.bf16.msra.mxu0 0
      %3531 = vmatprep.subr.bf16.mxu0 0
      %3532 = vmatpush1.bf16.msra.mxu0 0
      %3533 = vmatprep.subr.bf16.mxu0 0
      %3534 = vmatpush1.bf16.msra.mxu0 0
      %3535 = vmatprep.subr.bf16.mxu0 0
      %3536 = vmatpush1.bf16.msra.mxu0 0
      %3537 = vmatprep.subr.bf16.mxu0 0
      %3538 = vmatpush1.bf16.msra.mxu0 0
      %3539 = vmatprep.mubr.bf16.mxu0 0
      %3540 = vmatmul.mubr.bf16.gmra.mrb[0].mxu0 %v3328
      %v3541 = vpop.f32.mrb[0].mxu0
      %v3542 = vadd.f32 %v3485, %v3541
      %v3543 = vpop.f32.mrb[0].mxu0
      %v3544 = vpop.f32.mrb[0].mxu0
      %v3545 = vadd.f32 %v3488, %v3544
      %v3546 = vpop.f32.mrb[0].mxu0
      %3547 = vmatprep.mubr.bf16.mxu0 0
      %3548 = vmatmul.mubr.bf16.gmra.mrb[0].mxu0 %v3331
      %v3549 = vpop.f32.mrb[0].mxu0
      %v3550 = vadd.f32 %v3493, %v3549
      %v3551 = vpop.f32.mrb[0].mxu0
      %v3552 = vpop.f32.mrb[0].mxu0
      %v3553 = vadd.f32 %v3496, %v3552
      %v3554 = vpop.f32.mrb[0].mxu0
      %3555 = vmatprep.mubr.bf16.mxu0 0
      %3556 = vmatmul.mubr.bf16.gmra.mrb[0].mxu0 %v3334
      %v3557 = vpop.f32.mrb[0].mxu0
      %v3558 = vadd.f32 %v3501, %v3557
      %v3559 = vpop.f32.mrb[0].mxu0
      %v3560 = vpop.f32.mrb[0].mxu0
      %v3561 = vadd.f32 %v3504, %v3560
      %v3562 = vpop.f32.mrb[0].mxu0
      %3563 = vdwg.mxu0
      %v3564 = vmax.f32 %v3542, 0.0
      %v3565 = vmax.f32 %v3545, 0.0
      %v3566 = vmax.f32 %v3550, 0.0
      %v3567 = vmax.f32 %v3553, 0.0
      %v3568 = vmax.f32 %v3558, 0.0
      %v3569 = vmax.f32 %v3561, 0.0
      %v3570 = vpack.c.bf16 %v3565, %v3564
      %v3571 = vpack.c.bf16 %v3567, %v3566
      %v3572 = vpack.c.bf16 %v3569, %v3568
      %v3573 = vld [vmem:[%s6] sm:$0xf]
      %v3574 = vld [vmem:[%s6 + $0x4] sm:$0xf]
      %v3575 = vld [vmem:[%s6 + $0x8] sm:$0xf]
      %v3576 = vld [vmem:[%s6 + $0xc] sm:$0xf]
      %v3577 = vld [vmem:[%s6 + $0x10] sm:$0xf]
      %v3578 = vld [vmem:[%s6 + $0x14] sm:$0xf]
      %v3579 = vld [vmem:[%s6 + $0x18] sm:$0xf]
      %v3580 = vld [vmem:[%s6 + $0x1c] sm:$0xf]
      %v3581 = vld [vmem:[%s6 + $0x20] sm:$0xf]
      %v3582 = vld [vmem:[%s6 + $0x24] sm:$0xf]
      %v3583 = vld [vmem:[%s6 + $0x28] sm:$0xf]
      %v3584 = vld [vmem:[%s6 + $0x2c] sm:$0xf]
      %v3585 = vld [vmem:[%s6 + $0x30] sm:$0xf]
      %v3586 = vld [vmem:[%s6 + $0x34] sm:$0xf]
      %v3587 = vld [vmem:[%s6 + $0x38] sm:$0xf]
      %v3588 = vld [vmem:[%s6 + $0x3c] sm:$0xf]
      %v3589 = vld [vmem:[%s6 + $0x40] sm:$0xf]
      %v3590 = vld [vmem:[%s6 + $0x44] sm:$0xf]
      %v3609 = vunpack.c.l.b16 %v3573
      %v3610 = vunpack.c.l.b16 %v3574
      %v3611 = vunpack.c.l.b16 %v3575
      %v3612 = vunpack.c.l.b16 %v3576
      %v3613 = vunpack.c.l.b16 %v3577
      %v3614 = vunpack.c.l.b16 %v3578
      %v3615 = vunpack.c.l.b16 %v3579
      %v3616 = vunpack.c.l.b16 %v3580
      %v3617 = vunpack.c.l.b16 %v3581
      %v3618 = vunpack.c.l.b16 %v3582
      %v3619 = vunpack.c.l.b16 %v3583
      %v3620 = vunpack.c.l.b16 %v3584
      %v3621 = vunpack.c.l.b16 %v3585
      %v3622 = vunpack.c.l.b16 %v3586
      %v3623 = vunpack.c.l.b16 %v3587
      %v3624 = vunpack.c.l.b16 %v3588
      %v3625 = vunpack.c.l.b16 %v3589
      %v3626 = vunpack.c.l.b16 %v3590
      %v3627 = vpack.c.b16 %v3610, %v3609
      %v3628 = vpack.c.b16 %v3612, %v3611
      %v3629 = vpack.c.b16 %v3614, %v3613
      %v3630 = vpack.c.b16 %v3616, %v3615
      %v3631 = vpack.c.b16 %v3618, %v3617
      %v3632 = vpack.c.b16 %v3620, %v3619
      %v3633 = vpack.c.b16 %v3622, %v3621
      %v3634 = vpack.c.b16 %v3624, %v3623
      %v3635 = vpack.c.b16 %v3626, %v3625
      %vm3636 = vcmask 392192
      %v3638 = vsel %vm3636, %v3627, 0
      %v3641 = vsel %vm3636, %v3628, 0
      %v3644 = vsel %vm3636, %v3629, 0
      %v3647 = vsel %vm3636, %v3630, 0
      %v3650 = vsel %vm3636, %v3631, 0
      %v3653 = vsel %vm3636, %v3632, 0
      %v3656 = vsel %vm3636, %v3633, 0
      %v3659 = vsel %vm3636, %v3634, 0
      %v3662 = vsel %vm3636, %v3635, 0
      %3664 = vmatprep.subr.bf16.mxu0 0
      %3665 = vmatpush1.bf16.msra.mxu0 %v3570
      %3666 = vmatprep.subr.bf16.mxu0 0
      %3667 = vmatpush1.bf16.msra.mxu0 %v3571
      %3668 = vmatprep.subr.bf16.mxu0 0
      %3669 = vmatpush1.bf16.msra.mxu0 %v3572
      %3670 = vmatprep.subr.bf16.mxu0 0
      %3671 = vmatpush1.bf16.msra.mxu0 0
      %3672 = vmatprep.subr.bf16.mxu0 0
      %3673 = vmatpush1.bf16.msra.mxu0 0
      %3674 = vmatprep.subr.bf16.mxu0 0
      %3675 = vmatpush1.bf16.msra.mxu0 0
      %3676 = vmatprep.subr.bf16.mxu0 0
      %3677 = vmatpush1.bf16.msra.mxu0 0
      %3678 = vmatprep.subr.bf16.mxu0 0
      %3679 = vmatpush1.bf16.msra.mxu0 0
      %3680 = vmatprep.subr.bf16.mxu0 0
      %3681 = vmatpush1.bf16.msra.mxu0 0
      %3682 = vmatprep.subr.bf16.mxu0 0
      %3683 = vmatpush1.bf16.msra.mxu0 0
      %3684 = vmatprep.subr.bf16.mxu0 0
      %3685 = vmatpush1.bf16.msra.mxu0 0
      %3686 = vmatprep.subr.bf16.mxu0 0
      %3687 = vmatpush1.bf16.msra.mxu0 0
      %3688 = vmatprep.subr.bf16.mxu0 0
      %3689 = vmatpush1.bf16.msra.mxu0 0
      %3690 = vmatprep.subr.bf16.mxu0 0
      %3691 = vmatpush1.bf16.msra.mxu0 0
      %3692 = vmatprep.subr.bf16.mxu0 0
      %3693 = vmatpush1.bf16.msra.mxu0 0
      %3694 = vmatprep.subr.bf16.mxu0 0
      %3695 = vmatpush1.bf16.msra.mxu0 0
      %3696 = vmatprep.mubr.bf16.mxu0 0
      %3697 = vmatmul.mubr.bf16.gmra.mrb[0].mxu0 %v3638
      %v3698 = vpop.f32.mrb[0].mxu0
      %v3699 = vadd.f32 0.0, %v3698
      %v3700 = vpop.f32.mrb[0].mxu0
      %v3701 = vpop.f32.mrb[0].mxu0
      %v3702 = vadd.f32 0.0, %v3701
      %v3703 = vpop.f32.mrb[0].mxu0
      %3704 = vmatprep.mubr.bf16.mxu0 0
      %3705 = vmatmul.mubr.bf16.gmra.mrb[0].mxu0 %v3641
      %v3706 = vpop.f32.mrb[0].mxu0
      %v3707 = vadd.f32 0.0, %v3706
      %v3708 = vpop.f32.mrb[0].mxu0
      %v3709 = vpop.f32.mrb[0].mxu0
      %v3710 = vadd.f32 0.0, %v3709
      %v3711 = vpop.f32.mrb[0].mxu0
      %3712 = vmatprep.mubr.bf16.mxu0 0
      %3713 = vmatmul.mubr.bf16.gmra.mrb[0].mxu0 %v3644
      %v3714 = vpop.f32.mrb[0].mxu0
      %v3715 = vadd.f32 0.0, %v3714
      %v3716 = vpop.f32.mrb[0].mxu0
      %v3717 = vpop.f32.mrb[0].mxu0
      %v3718 = vadd.f32 0.0, %v3717
      %v3719 = vpop.f32.mrb[0].mxu0
      %3720 = vmatprep.mubr.bf16.mxu0 0
      %3721 = vmatmul.mubr.bf16.gmra.mrb[0].mxu0 %v3647
      %v3722 = vpop.f32.mrb[0].mxu0
      %v3723 = vadd.f32 0.0, %v3722
      %v3724 = vpop.f32.mrb[0].mxu0
      %v3725 = vpop.f32.mrb[0].mxu0
      %v3726 = vadd.f32 0.0, %v3725
      %v3727 = vpop.f32.mrb[0].mxu0
      %3728 = vmatprep.mubr.bf16.mxu0 0
      %3729 = vmatmul.mubr.bf16.gmra.mrb[0].mxu0 %v3650
      %v3730 = vpop.f32.mrb[0].mxu0
      %v3731 = vadd.f32 0.0, %v3730
      %v3732 = vpop.f32.mrb[0].mxu0
      %v3733 = vpop.f32.mrb[0].mxu0
      %v3734 = vadd.f32 0.0, %v3733
      %v3735 = vpop.f32.mrb[0].mxu0
      %3736 = vmatprep.mubr.bf16.mxu0 0
      %3737 = vmatmul.mubr.bf16.gmra.mrb[0].mxu0 %v3653
      %v3738 = vpop.f32.mrb[0].mxu0
      %v3739 = vadd.f32 0.0, %v3738
      %v3740 = vpop.f32.mrb[0].mxu0
      %v3741 = vpop.f32.mrb[0].mxu0
      %v3742 = vadd.f32 0.0, %v3741
      %v3743 = vpop.f32.mrb[0].mxu0
      %3744 = vmatprep.mubr.bf16.mxu0 0
      %3745 = vmatmul.mubr.bf16.gmra.mrb[0].mxu0 %v3656
      %v3746 = vpop.f32.mrb[0].mxu0
      %v3747 = vadd.f32 0.0, %v3746
      %v3748 = vpop.f32.mrb[0].mxu0
      %v3749 = vpop.f32.mrb[0].mxu0
      %v3750 = vadd.f32 0.0, %v3749
      %v3751 = vpop.f32.mrb[0].mxu0
      %3752 = vmatprep.mubr.bf16.mxu0 0
      %3753 = vmatmul.mubr.bf16.gmra.mrb[0].mxu0 %v3659
      %v3754 = vpop.f32.mrb[0].mxu0
      %v3755 = vadd.f32 0.0, %v3754
      %v3756 = vpop.f32.mrb[0].mxu0
      %v3757 = vpop.f32.mrb[0].mxu0
      %v3758 = vadd.f32 0.0, %v3757
      %v3759 = vpop.f32.mrb[0].mxu0
      %3760 = vmatprep.mubr.bf16.mxu0 0
      %3761 = vmatmul.mubr.bf16.gmra.mrb[0].mxu0 %v3662
      %v3762 = vpop.f32.mrb[0].mxu0
      %v3763 = vadd.f32 0.0, %v3762
      %v3764 = vpop.f32.mrb[0].mxu0
      %v3765 = vpop.f32.mrb[0].mxu0
      %v3766 = vadd.f32 0.0, %v3765
      %v3767 = vpop.f32.mrb[0].mxu0
      %3768 = vdwg.mxu0
      %v3769 = vpack.c.bf16 %v3702, %v3699
      %v3770 = vpack.c.bf16 %v3710, %v3707
      %v3771 = vpack.c.bf16 %v3718, %v3715
      %v3772 = vpack.c.bf16 %v3726, %v3723
      %v3773 = vpack.c.bf16 %v3734, %v3731
      %v3774 = vpack.c.bf16 %v3742, %v3739
      %v3775 = vpack.c.bf16 %v3750, %v3747
      %v3776 = vpack.c.bf16 %v3758, %v3755
      %v3777 = vpack.c.bf16 %v3766, %v3763
      %3779 = vrot.lane.b32.xlu0 %v3770, 64
      %v3780 = vpop.permute.xlu0 %3779
      %3782 = vrot.lane.b32.xlu0 %v3772, 64
      %v3783 = vpop.permute.xlu0 %3782
      %3785 = vrot.lane.b32.xlu0 %v3774, 64
      %v3786 = vpop.permute.xlu0 %3785
      %3788 = vrot.lane.b32.xlu0 %v3776, 64
      %v3789 = vpop.permute.xlu0 %3788
      %v3792 = vsel %vm2729, %v3769, %v3780
      %v3796 = vsel %vm2729, %v3771, %v3783
      %v3800 = vsel %vm2729, %v3773, %v3786
      %v3804 = vsel %vm2729, %v3775, %v3789
      %v3806 = vld [vmem:[%s7] sm:$0xf]
      %v3807 = vld [vmem:[%s7 + $0x4] sm:$0xf]
      %v3808 = vld [vmem:[%s7 + $0x8] sm:$0xf]
      %v3809 = vld [vmem:[%s7 + $0xc] sm:$0xf]
      %v3810 = vld [vmem:[%s7 + $0x10] sm:$0xf]
      %v3811 = vld [vmem:[%s7 + $0x14] sm:$0xf]
      %v3812 = vld [vmem:[%s7 + $0x18] sm:$0xf]
      %v3813 = vld [vmem:[%s7 + $0x1c] sm:$0xf]
      %v3814 = vld [vmem:[%s7 + $0x20] sm:$0xf]
      %v3815 = vld [vmem:[%s7 + $0x24] sm:$0xf]
      %v3816 = vld [vmem:[%s7 + $0x28] sm:$0xf]
      %v3817 = vld [vmem:[%s7 + $0x2c] sm:$0xf]
      %v3818 = vld [vmem:[%s7 + $0x30] sm:$0xf]
      %v3819 = vld [vmem:[%s7 + $0x34] sm:$0xf]
      %v3820 = vld [vmem:[%s7 + $0x38] sm:$0xf]
      %v3821 = vld [vmem:[%s7 + $0x3c] sm:$0xf]
      %v3822 = vld [vmem:[%s7 + $0x40] sm:$0xf]
      %v3823 = vld [vmem:[%s7 + $0x44] sm:$0xf]
      %v3824 = vld [vmem:[%s7 + $0x48] sm:$0xf]
      %v3825 = vld [vmem:[%s7 + $0x4c] sm:$0xf]
      %v3826 = vld [vmem:[%s7 + $0x50] sm:$0xf]
      %v3827 = vld [vmem:[%s7 + $0x54] sm:$0xf]
      %v3828 = vld [vmem:[%s7 + $0x58] sm:$0xf]
      %v3829 = vld [vmem:[%s7 + $0x5c] sm:$0xf]
      %v3830 = vld [vmem:[%s7 + $0x60] sm:$0xf]
      %v3831 = vld [vmem:[%s7 + $0x64] sm:$0xf]
      %v3832 = vld [vmem:[%s7 + $0x68] sm:$0xf]
      %v3833 = vld [vmem:[%s7 + $0x6c] sm:$0xf]
      %v3834 = vld [vmem:[%s7 + $0x70] sm:$0xf]
      %v3835 = vld [vmem:[%s7 + $0x74] sm:$0xf]
      %v3836 = vld [vmem:[%s7 + $0x78] sm:$0xf]
      %v3837 = vld [vmem:[%s7 + $0x7c] sm:$0xf]
      %v3838 = vld [vmem:[%s7 + $0x80] sm:$0xf]
      %v3839 = vld [vmem:[%s7 + $0x84] sm:$0xf]
      %v3840 = vld [vmem:[%s7 + $0x88] sm:$0xf]
      %v3841 = vld [vmem:[%s7 + $0x8c] sm:$0xf]
      %v3842 = vld [vmem:[%s7 + $0x90] sm:$0xf]
      %v3843 = vld [vmem:[%s7 + $0x94] sm:$0xf]
      %v3844 = vld [vmem:[%s7 + $0x98] sm:$0xf]
      %v3845 = vld [vmem:[%s7 + $0x9c] sm:$0xf]
      %v3846 = vld [vmem:[%s7 + $0xa0] sm:$0xf]
      %v3847 = vld [vmem:[%s7 + $0xa4] sm:$0xf]
      %v3848 = vld [vmem:[%s7 + $0xa8] sm:$0xf]
      %v3849 = vld [vmem:[%s7 + $0xac] sm:$0xf]
      %v3850 = vld [vmem:[%s7 + $0xb0] sm:$0xf]
      %v3851 = vld [vmem:[%s7 + $0xb4] sm:$0xf]
      %v3852 = vld [vmem:[%s7 + $0xb8] sm:$0xf]
      %v3853 = vld [vmem:[%s7 + $0xbc] sm:$0xf]
      %v3854 = vld [vmem:[%s7 + $0xc0] sm:$0xf]
      %v3855 = vld [vmem:[%s7 + $0xc4] sm:$0xf]
      %v3856 = vld [vmem:[%s7 + $0xc8] sm:$0xf]
      %v3857 = vld [vmem:[%s7 + $0xcc] sm:$0xf]
      %v3858 = vld [vmem:[%s7 + $0xd0] sm:$0xf]
      %v3859 = vld [vmem:[%s7 + $0xd4] sm:$0xf]
      %v3860 = vld [vmem:[%s7 + $0xd8] sm:$0xf]
      %v3861 = vld [vmem:[%s7 + $0xdc] sm:$0xf]
      %v3862 = vld [vmem:[%s7 + $0xe0] sm:$0xf]
      %v3863 = vld [vmem:[%s7 + $0xe4] sm:$0xf]
      %v3864 = vld [vmem:[%s7 + $0xe8] sm:$0xf]
      %v3865 = vld [vmem:[%s7 + $0xec] sm:$0xf]
      %v3866 = vld [vmem:[%s7 + $0xf0] sm:$0xf]
      %v3867 = vld [vmem:[%s7 + $0xf4] sm:$0xf]
      %v3868 = vld [vmem:[%s7 + $0xf8] sm:$0xf]
      %v3869 = vld [vmem:[%s7 + $0xfc] sm:$0xf]
      %v3870 = vld [vmem:[%s7 + $0x100] sm:$0xf]
      %v3871 = vld [vmem:[%s7 + $0x104] sm:$0xf]
      %v3872 = vld [vmem:[%s7 + $0x108] sm:$0xf]
      %v3873 = vld [vmem:[%s7 + $0x10c] sm:$0xf]
      %v3874 = vld [vmem:[%s7 + $0x110] sm:$0xf]
      %v3875 = vld [vmem:[%s7 + $0x114] sm:$0xf]
      %v3876 = vld [vmem:[%s7 + $0x118] sm:$0xf]
      %v3877 = vld [vmem:[%s7 + $0x11c] sm:$0xf]
      %v3878 = vld [vmem:[%s8] sm:$0x1]
      %v3880 = vlaneseq
      %v3881 = vshrl.u32 %v3880, 7
      %v3882 = vsub.s32 0, %v3881
      %v3883 = vrot.slane %v3878, %v3882
      %v3957 = vunpack.c.l.b16 %v3806
      %v3958 = vunpack.c.l.b16 %v3807
      %v3959 = vunpack.c.l.b16 %v3808
      %v3960 = vunpack.c.l.b16 %v3809
      %v3961 = vunpack.c.l.b16 %v3810
      %v3962 = vunpack.c.l.b16 %v3811
      %v3963 = vunpack.c.l.b16 %v3812
      %v3964 = vunpack.c.l.b16 %v3813
      %v3965 = vunpack.c.l.b16 %v3814
      %v3966 = vunpack.c.l.b16 %v3815
      %v3967 = vunpack.c.l.b16 %v3816
      %v3968 = vunpack.c.l.b16 %v3817
      %v3969 = vunpack.c.l.b16 %v3818
      %v3970 = vunpack.c.l.b16 %v3819
      %v3971 = vunpack.c.l.b16 %v3820
      %v3972 = vunpack.c.l.b16 %v3821
      %v3973 = vunpack.c.l.b16 %v3822
      %v3974 = vunpack.c.l.b16 %v3823
      %v3975 = vunpack.c.l.b16 %v3824
      %v3976 = vunpack.c.l.b16 %v3825
      %v3977 = vunpack.c.l.b16 %v3826
      %v3978 = vunpack.c.l.b16 %v3827
      %v3979 = vunpack.c.l.b16 %v3828
      %v3980 = vunpack.c.l.b16 %v3829
      %v3981 = vunpack.c.l.b16 %v3830
      %v3982 = vunpack.c.l.b16 %v3831
      %v3983 = vunpack.c.l.b16 %v3832
      %v3984 = vunpack.c.l.b16 %v3833
      %v3985 = vunpack.c.l.b16 %v3834
      %v3986 = vunpack.c.l.b16 %v3835
      %v3987 = vunpack.c.l.b16 %v3836
      %v3988 = vunpack.c.l.b16 %v3837
      %v3989 = vunpack.c.l.b16 %v3838
      %v3990 = vunpack.c.l.b16 %v3839
      %v3991 = vunpack.c.l.b16 %v3840
      %v3992 = vunpack.c.l.b16 %v3841
      %v3993 = vunpack.c.l.b16 %v3842
      %v3994 = vunpack.c.l.b16 %v3843
      %v3995 = vunpack.c.l.b16 %v3844
      %v3996 = vunpack.c.l.b16 %v3845
      %v3997 = vunpack.c.l.b16 %v3846
      %v3998 = vunpack.c.l.b16 %v3847
      %v3999 = vunpack.c.l.b16 %v3848
      %v4000 = vunpack.c.l.b16 %v3849
      %v4001 = vunpack.c.l.b16 %v3850
      %v4002 = vunpack.c.l.b16 %v3851
      %v4003 = vunpack.c.l.b16 %v3852
      %v4004 = vunpack.c.l.b16 %v3853
      %v4005 = vunpack.c.l.b16 %v3854
      %v4006 = vunpack.c.l.b16 %v3855
      %v4007 = vunpack.c.l.b16 %v3856
      %v4008 = vunpack.c.l.b16 %v3857
      %v4009 = vunpack.c.l.b16 %v3858
      %v4010 = vunpack.c.l.b16 %v3859
      %v4011 = vunpack.c.l.b16 %v3860
      %v4012 = vunpack.c.l.b16 %v3861
      %v4013 = vunpack.c.l.b16 %v3862
      %v4014 = vunpack.c.l.b16 %v3863
      %v4015 = vunpack.c.l.b16 %v3864
      %v4016 = vunpack.c.l.b16 %v3865
      %v4017 = vunpack.c.l.b16 %v3866
      %v4018 = vunpack.c.l.b16 %v3867
      %v4019 = vunpack.c.l.b16 %v3868
      %v4020 = vunpack.c.l.b16 %v3869
      %v4021 = vunpack.c.l.b16 %v3870
      %v4022 = vunpack.c.l.b16 %v3871
      %v4023 = vunpack.c.l.b16 %v3872
      %v4024 = vunpack.c.l.b16 %v3873
      %v4025 = vunpack.c.l.b16 %v3874
      %v4026 = vunpack.c.l.b16 %v3875
      %v4027 = vunpack.c.l.b16 %v3876
      %v4028 = vunpack.c.l.b16 %v3877
      %v4029 = vpack.c.b16 %v3958, %v3957
      %v4030 = vpack.c.b16 %v3960, %v3959
      %v4031 = vpack.c.b16 %v3962, %v3961
      %v4032 = vpack.c.b16 %v3964, %v3963
      %v4033 = vpack.c.b16 %v3966, %v3965
      %v4034 = vpack.c.b16 %v3968, %v3967
      %v4035 = vpack.c.b16 %v3970, %v3969
      %v4036 = vpack.c.b16 %v3972, %v3971
      %v4037 = vpack.c.b16 %v3974, %v3973
      %v4038 = vpack.c.b16 %v3976, %v3975
      %v4039 = vpack.c.b16 %v3978, %v3977
      %v4040 = vpack.c.b16 %v3980, %v3979
      %v4041 = vpack.c.b16 %v3982, %v3981
      %v4042 = vpack.c.b16 %v3984, %v3983
      %v4043 = vpack.c.b16 %v3986, %v3985
      %v4044 = vpack.c.b16 %v3988, %v3987
      %v4045 = vpack.c.b16 %v3990, %v3989
      %v4046 = vpack.c.b16 %v3992, %v3991
      %v4047 = vpack.c.b16 %v3994, %v3993
      %v4048 = vpack.c.b16 %v3996, %v3995
      %v4049 = vpack.c.b16 %v3998, %v3997
      %v4050 = vpack.c.b16 %v4000, %v3999
      %v4051 = vpack.c.b16 %v4002, %v4001
      %v4052 = vpack.c.b16 %v4004, %v4003
      %v4053 = vpack.c.b16 %v4006, %v4005
      %v4054 = vpack.c.b16 %v4008, %v4007
      %v4055 = vpack.c.b16 %v4010, %v4009
      %v4056 = vpack.c.b16 %v4012, %v4011
      %v4057 = vpack.c.b16 %v4014, %v4013
      %v4058 = vpack.c.b16 %v4016, %v4015
      %v4059 = vpack.c.b16 %v4018, %v4017
      %v4060 = vpack.c.b16 %v4020, %v4019
      %v4061 = vpack.c.b16 %v4022, %v4021
      %v4062 = vpack.c.b16 %v4024, %v4023
      %v4063 = vpack.c.b16 %v4026, %v4025
      %v4064 = vpack.c.b16 %v4028, %v4027
      %v4102 = vsel %vm2729, %v3777, 0
      %4104 = vmatprep.subr.bf16.mxu0 0
      %4105 = vmatpush1.bf16.msra.mxu0 %v4029
      %4106 = vmatprep.subr.bf16.mxu0 0
      %4107 = vmatpush1.bf16.msra.mxu0 %v4030
      %4108 = vmatprep.subr.bf16.mxu0 0
      %4109 = vmatpush1.bf16.msra.mxu0 %v4031
      %4110 = vmatprep.subr.bf16.mxu0 0
      %4111 = vmatpush1.bf16.msra.mxu0 %v4032
      %4112 = vmatprep.subr.bf16.mxu0 0
      %4113 = vmatpush1.bf16.msra.mxu0 %v4033
      %4114 = vmatprep.subr.bf16.mxu0 0
      %4115 = vmatpush1.bf16.msra.mxu0 %v4034
      %4116 = vmatprep.subr.bf16.mxu0 0
      %4117 = vmatpush1.bf16.msra.mxu0 %v4035
      %4118 = vmatprep.subr.bf16.mxu0 0
      %4119 = vmatpush1.bf16.msra.mxu0 %v4036
      %4120 = vmatprep.subr.bf16.mxu0 0
      %4121 = vmatpush1.bf16.msra.mxu0 %v4037
      %4122 = vmatprep.subr.bf16.mxu0 0
      %4123 = vmatpush1.bf16.msra.mxu0 %v4038
      %4124 = vmatprep.subr.bf16.mxu0 0
      %4125 = vmatpush1.bf16.msra.mxu0 %v4039
      %4126 = vmatprep.subr.bf16.mxu0 0
      %4127 = vmatpush1.bf16.msra.mxu0 %v4040
      %4128 = vmatprep.subr.bf16.mxu0 0
      %4129 = vmatpush1.bf16.msra.mxu0 %v4041
      %4130 = vmatprep.subr.bf16.mxu0 0
      %4131 = vmatpush1.bf16.msra.mxu0 %v4042
      %4132 = vmatprep.subr.bf16.mxu0 0
      %4133 = vmatpush1.bf16.msra.mxu0 %v4043
      %4134 = vmatprep.subr.bf16.mxu0 0
      %4135 = vmatpush1.bf16.msra.mxu0 %v4044
      %4136 = vmatprep.mubr.bf16.mxu0 %v3796
      %4137 = vmatmul.mubr.bf16.gmra.mrb[0].mxu0 %v3792
      %v4138 = vpop.f32.mrb[0].mxu0
      %v4139 = vadd.f32 %v3883, %v4138
      %v4140 = vpop.f32.mrb[0].mxu0
      %v4141 = vpop.f32.mrb[0].mxu0
      %v4142 = vadd.f32 %v3883, %v4141
      %v4143 = vpop.f32.mrb[0].mxu0
      %4144 = vdwg.mxu0
      %4145 = vmatprep.subr.bf16.mxu0 0
      %4146 = vmatpush1.bf16.msra.mxu0 %v4045
      %4147 = vmatprep.subr.bf16.mxu0 0
      %4148 = vmatpush1.bf16.msra.mxu0 %v4046
      %4149 = vmatprep.subr.bf16.mxu0 0
      %4150 = vmatpush1.bf16.msra.mxu0 %v4047
      %4151 = vmatprep.subr.bf16.mxu0 0
      %4152 = vmatpush1.bf16.msra.mxu0 %v4048
      %4153 = vmatprep.subr.bf16.mxu0 0
      %4154 = vmatpush1.bf16.msra.mxu0 %v4049
      %4155 = vmatprep.subr.bf16.mxu0 0
      %4156 = vmatpush1.bf16.msra.mxu0 %v4050
      %4157 = vmatprep.subr.bf16.mxu0 0
      %4158 = vmatpush1.bf16.msra.mxu0 %v4051
      %4159 = vmatprep.subr.bf16.mxu0 0
      %4160 = vmatpush1.bf16.msra.mxu0 %v4052
      %4161 = vmatprep.subr.bf16.mxu0 0
      %4162 = vmatpush1.bf16.msra.mxu0 %v4053
      %4163 = vmatprep.subr.bf16.mxu0 0
      %4164 = vmatpush1.bf16.msra.mxu0 %v4054
      %4165 = vmatprep.subr.bf16.mxu0 0
      %4166 = vmatpush1.bf16.msra.mxu0 %v4055
      %4167 = vmatprep.subr.bf16.mxu0 0
      %4168 = vmatpush1.bf16.msra.mxu0 %v4056
      %4169 = vmatprep.subr.bf16.mxu0 0
      %4170 = vmatpush1.bf16.msra.mxu0 %v4057
      %4171 = vmatprep.subr.bf16.mxu0 0
      %4172 = vmatpush1.bf16.msra.mxu0 %v4058
      %4173 = vmatprep.subr.bf16.mxu0 0
      %4174 = vmatpush1.bf16.msra.mxu0 %v4059
      %4175 = vmatprep.subr.bf16.mxu0 0
      %4176 = vmatpush1.bf16.msra.mxu0 %v4060
      %4177 = vmatprep.mubr.bf16.mxu0 %v3804
      %4178 = vmatmul.mubr.bf16.gmra.mrb[0].mxu0 %v3800
      %v4179 = vpop.f32.mrb[0].mxu0
      %v4180 = vadd.f32 %v4139, %v4179
      %v4181 = vpop.f32.mrb[0].mxu0
      %v4182 = vpop.f32.mrb[0].mxu0
      %v4183 = vadd.f32 %v4142, %v4182
      %v4184 = vpop.f32.mrb[0].mxu0
      %4185 = vdwg.mxu0
      %4186 = vmatprep.subr.bf16.mxu0 0
      %4187 = vmatpush1.bf16.msra.mxu0 %v4061
      %4188 = vmatprep.subr.bf16.mxu0 0
      %4189 = vmatpush1.bf16.msra.mxu0 %v4062
      %4190 = vmatprep.subr.bf16.mxu0 0
      %4191 = vmatpush1.bf16.msra.mxu0 %v4063
      %4192 = vmatprep.subr.bf16.mxu0 0
      %4193 = vmatpush1.bf16.msra.mxu0 %v4064
      %4194 = vmatprep.subr.bf16.mxu0 0
      %4195 = vmatpush1.bf16.msra.mxu0 0
      %4196 = vmatprep.subr.bf16.mxu0 0
      %4197 = vmatpush1.bf16.msra.mxu0 0
      %4198 = vmatprep.subr.bf16.mxu0 0
      %4199 = vmatpush1.bf16.msra.mxu0 0
      %4200 = vmatprep.subr.bf16.mxu0 0
      %4201 = vmatpush1.bf16.msra.mxu0 0
      %4202 = vmatprep.subr.bf16.mxu0 0
      %4203 = vmatpush1.bf16.msra.mxu0 0
      %4204 = vmatprep.subr.bf16.mxu0 0
      %4205 = vmatpush1.bf16.msra.mxu0 0
      %4206 = vmatprep.subr.bf16.mxu0 0
      %4207 = vmatpush1.bf16.msra.mxu0 0
      %4208 = vmatprep.subr.bf16.mxu0 0
      %4209 = vmatpush1.bf16.msra.mxu0 0
      %4210 = vmatprep.subr.bf16.mxu0 0
      %4211 = vmatpush1.bf16.msra.mxu0 0
      %4212 = vmatprep.subr.bf16.mxu0 0
      %4213 = vmatpush1.bf16.msra.mxu0 0
      %4214 = vmatprep.subr.bf16.mxu0 0
      %4215 = vmatpush1.bf16.msra.mxu0 0
      %4216 = vmatprep.subr.bf16.mxu0 0
      %4217 = vmatpush1.bf16.msra.mxu0 0
      %4218 = vmatprep.mubr.bf16.mxu0 0
      %4219 = vmatmul.mubr.bf16.gmra.mrb[0].mxu0 %v4102
      %v4220 = vpop.f32.mrb[0].mxu0
      %v4221 = vadd.f32 %v4180, %v4220
      %v4222 = vpop.f32.mrb[0].mxu0
      %v4223 = vpop.f32.mrb[0].mxu0
      %v4224 = vadd.f32 %v4183, %v4223
      %v4225 = vpop.f32.mrb[0].mxu0
      %4226 = vdwg.mxu0
      %v4227 = vmax.f32 %v4221, 0.0
      %v4228 = vmax.f32 %v4224, 0.0
      %4231 = vrot.lane.b32.xlu0 %v4227, 64
      %v4232 = vpop.permute.xlu0 %4231
      %4233 = vrot.lane.b32.xlu0 %v4228, 64
      %v4234 = vpop.permute.xlu0 %4233
      %v4237 = vsel %vm2729, %v4227, %v4232
      %v4238 = vsel %vm2729, %v4228, %v4234
      %v4239 = vld [vmem:[%s9] sm:$0xff]
      %v4240 = vld [vmem:[%s9 + $0x8] sm:$0xff]
      %v4241 = vld [vmem:[%s9 + $0x10] sm:$0xff]
      %v4242 = vld [vmem:[%s9 + $0x18] sm:$0xff]
      %v4243 = vld [vmem:[%s9 + $0x20] sm:$0xff]
      %v4244 = vld [vmem:[%s9 + $0x28] sm:$0xff]
      %v4245 = vld [vmem:[%s9 + $0x30] sm:$0xff]
      %v4246 = vld [vmem:[%s9 + $0x38] sm:$0xff]
      %v4247 = vld [vmem:[%s9 + $0x40] sm:$0xff]
      %v4248 = vld [vmem:[%s9 + $0x48] sm:$0xff]
      %v4249 = vld [vmem:[%s9 + $0x50] sm:$0xff]
      %v4250 = vld [vmem:[%s9 + $0x58] sm:$0xff]
      %v4251 = vld [vmem:[%s9 + $0x60] sm:$0xff]
      %v4252 = vld [vmem:[%s9 + $0x68] sm:$0xff]
      %v4253 = vld [vmem:[%s9 + $0x70] sm:$0xff]
      %v4254 = vld [vmem:[%s9 + $0x78] sm:$0xff]
      %v4255 = vmul.f32 %v4237, %v4239
      %v4256 = vmul.f32 %v4237, %v4240
      %v4257 = vmul.f32 %v4237, %v4241
      %v4258 = vmul.f32 %v4237, %v4242
      %v4259 = vmul.f32 %v4237, %v4243
      %v4260 = vmul.f32 %v4237, %v4244
      %v4261 = vmul.f32 %v4237, %v4245
      %v4262 = vmul.f32 %v4237, %v4246
      %v4263 = vmul.f32 %v4238, %v4247
      %v4264 = vmul.f32 %v4238, %v4248
      %v4265 = vmul.f32 %v4238, %v4249
      %v4266 = vmul.f32 %v4238, %v4250
      %v4267 = vmul.f32 %v4238, %v4251
      %v4268 = vmul.f32 %v4238, %v4252
      %v4269 = vmul.f32 %v4238, %v4253
      %v4270 = vmul.f32 %v4238, %v4254
      %v4271 = vadd.f32 %v4255, %v4263
      %v4272 = vrot.slane %v4271, 4
      %v4273 = vadd.f32 %v4271, %v4272
      %v4274 = vrot.slane %v4273, 2
      %v4275 = vadd.f32 %v4273, %v4274
      %v4276 = vrot.slane %v4275, 1
      %v4277 = vadd.f32 %v4275, %v4276
      %v4278 = vadd.f32 %v4256, %v4264
      %v4279 = vrot.slane %v4278, 4
      %v4280 = vadd.f32 %v4278, %v4279
      %v4281 = vrot.slane %v4280, 2
      %v4282 = vadd.f32 %v4280, %v4281
      %v4283 = vrot.slane %v4282, 1
      %v4284 = vadd.f32 %v4282, %v4283
      %v4285 = vadd.f32 %v4257, %v4265
      %v4286 = vrot.slane %v4285, 4
      %v4287 = vadd.f32 %v4285, %v4286
      %v4288 = vrot.slane %v4287, 2
      %v4289 = vadd.f32 %v4287, %v4288
      %v4290 = vrot.slane %v4289, 1
      %v4291 = vadd.f32 %v4289, %v4290
      %v4292 = vadd.f32 %v4258, %v4266
      %v4293 = vrot.slane %v4292, 4
      %v4294 = vadd.f32 %v4292, %v4293
      %v4295 = vrot.slane %v4294, 2
      %v4296 = vadd.f32 %v4294, %v4295
      %v4297 = vrot.slane %v4296, 1
      %v4298 = vadd.f32 %v4296, %v4297
      %v4299 = vadd.f32 %v4259, %v4267
      %v4300 = vrot.slane %v4299, 4
      %v4301 = vadd.f32 %v4299, %v4300
      %v4302 = vrot.slane %v4301, 2
      %v4303 = vadd.f32 %v4301, %v4302
      %v4304 = vrot.slane %v4303, 1
      %v4305 = vadd.f32 %v4303, %v4304
      %v4306 = vadd.f32 %v4260, %v4268
      %v4307 = vrot.slane %v4306, 4
      %v4308 = vadd.f32 %v4306, %v4307
      %v4309 = vrot.slane %v4308, 2
      %v4310 = vadd.f32 %v4308, %v4309
      %v4311 = vrot.slane %v4310, 1
      %v4312 = vadd.f32 %v4310, %v4311
      %v4313 = vadd.f32 %v4261, %v4269
      %v4314 = vrot.slane %v4313, 4
      %v4315 = vadd.f32 %v4313, %v4314
      %v4316 = vrot.slane %v4315, 2
      %v4317 = vadd.f32 %v4315, %v4316
      %v4318 = vrot.slane %v4317, 1
      %v4319 = vadd.f32 %v4317, %v4318
      %v4320 = vadd.f32 %v4262, %v4270
      %v4321 = vrot.slane %v4320, 4
      %v4322 = vadd.f32 %v4320, %v4321
      %v4323 = vrot.slane %v4322, 2
      %v4324 = vadd.f32 %v4322, %v4323
      %v4325 = vrot.slane %v4324, 1
      %v4326 = vadd.f32 %v4324, %v4325
      %v4327 = vpack.c.bf16 %v4277, %v4277
      %v4328 = vpack.c.bf16 %v4284, %v4284
      %v4329 = vpack.c.bf16 %v4291, %v4291
      %v4330 = vpack.c.bf16 %v4298, %v4298
      %v4331 = vpack.c.bf16 %v4305, %v4305
      %v4332 = vpack.c.bf16 %v4312, %v4312
      %v4333 = vpack.c.bf16 %v4319, %v4319
      %v4334 = vpack.c.bf16 %v4326, %v4326
      %v4335 = vld [vmem:[%s10] sm:$0xff]
      %v4336 = vld [vmem:[%s10 + $0x8] sm:$0xff]
      %v4337 = vld [vmem:[%s10 + $0x10] sm:$0xff]
      %v4338 = vld [vmem:[%s10 + $0x18] sm:$0xff]
      %v4339 = vld [vmem:[%s10 + $0x20] sm:$0xff]
      %v4340 = vld [vmem:[%s10 + $0x28] sm:$0xff]
      %v4341 = vld [vmem:[%s10 + $0x30] sm:$0xff]
      %v4342 = vld [vmem:[%s10 + $0x38] sm:$0xff]
      %v4343 = vld [vmem:[%s10 + $0x40] sm:$0xff]
      %v4344 = vld [vmem:[%s10 + $0x48] sm:$0xff]
      %v4345 = vld [vmem:[%s10 + $0x50] sm:$0xff]
      %v4346 = vld [vmem:[%s10 + $0x58] sm:$0xff]
      %v4347 = vld [vmem:[%s10 + $0x60] sm:$0xff]
      %v4348 = vld [vmem:[%s10 + $0x68] sm:$0xff]
      %v4349 = vld [vmem:[%s10 + $0x70] sm:$0xff]
      %v4350 = vld [vmem:[%s10 + $0x78] sm:$0xff]
      %v4351 = vld [vmem:[%s10 + $0x80] sm:$0xff]
      %v4352 = vld [vmem:[%s10 + $0x88] sm:$0xff]
      %v4353 = vld [vmem:[%s10 + $0x90] sm:$0xff]
      %v4354 = vld [vmem:[%s10 + $0x98] sm:$0xff]
      %v4355 = vld [vmem:[%s10 + $0xa0] sm:$0xff]
      %v4356 = vld [vmem:[%s10 + $0xa8] sm:$0xff]
      %v4357 = vld [vmem:[%s10 + $0xb0] sm:$0xff]
      %v4358 = vld [vmem:[%s10 + $0xb8] sm:$0xff]
      %v4359 = vld [vmem:[%s10 + $0xc0] sm:$0xff]
      %v4360 = vld [vmem:[%s10 + $0xc8] sm:$0xff]
      %v4361 = vld [vmem:[%s10 + $0xd0] sm:$0xff]
      %v4362 = vld [vmem:[%s10 + $0xd8] sm:$0xff]
      %v4363 = vld [vmem:[%s10 + $0xe0] sm:$0xff]
      %v4364 = vld [vmem:[%s10 + $0xe8] sm:$0xff]
      %v4365 = vld [vmem:[%s10 + $0xf0] sm:$0xff]
      %v4366 = vld [vmem:[%s10 + $0xf8] sm:$0xff]
      %v4367 = vld [vmem:[%s10 + $0x100] sm:$0xff]
      %v4368 = vld [vmem:[%s10 + $0x108] sm:$0xff]
      %v4369 = vld [vmem:[%s10 + $0x110] sm:$0xff]
      %v4370 = vld [vmem:[%s10 + $0x118] sm:$0xff]
      %v4371 = vld [vmem:[%s10 + $0x120] sm:$0xff]
      %v4372 = vld [vmem:[%s10 + $0x128] sm:$0xff]
      %v4373 = vld [vmem:[%s10 + $0x130] sm:$0xff]
      %v4374 = vld [vmem:[%s10 + $0x138] sm:$0xff]
      %v4375 = vld [vmem:[%s10 + $0x140] sm:$0xff]
      %v4376 = vld [vmem:[%s10 + $0x148] sm:$0xff]
      %v4377 = vld [vmem:[%s10 + $0x150] sm:$0xff]
      %v4378 = vld [vmem:[%s10 + $0x158] sm:$0xff]
      %v4379 = vld [vmem:[%s10 + $0x160] sm:$0xff]
      %v4380 = vld [vmem:[%s10 + $0x168] sm:$0xff]
      %v4381 = vld [vmem:[%s10 + $0x170] sm:$0xff]
      %v4382 = vld [vmem:[%s10 + $0x178] sm:$0xff]
      %v4383 = vld [vmem:[%s10 + $0x180] sm:$0xff]
      %v4384 = vld [vmem:[%s10 + $0x188] sm:$0xff]
      %v4385 = vld [vmem:[%s10 + $0x190] sm:$0xff]
      %v4386 = vld [vmem:[%s10 + $0x198] sm:$0xff]
      %v4387 = vld [vmem:[%s10 + $0x1a0] sm:$0xff]
      %v4388 = vld [vmem:[%s10 + $0x1a8] sm:$0xff]
      %v4389 = vld [vmem:[%s10 + $0x1b0] sm:$0xff]
      %v4390 = vld [vmem:[%s10 + $0x1b8] sm:$0xff]
      %v4391 = vld [vmem:[%s10 + $0x1c0] sm:$0xff]
      %v4392 = vld [vmem:[%s10 + $0x1c8] sm:$0xff]
      %v4393 = vld [vmem:[%s10 + $0x1d0] sm:$0xff]
      %v4394 = vld [vmem:[%s10 + $0x1d8] sm:$0xff]
      %v4395 = vld [vmem:[%s10 + $0x1e0] sm:$0xff]
      %v4396 = vld [vmem:[%s10 + $0x1e8] sm:$0xff]
      %v4397 = vld [vmem:[%s10 + $0x1f0] sm:$0xff]
      %v4398 = vld [vmem:[%s10 + $0x1f8] sm:$0xff]
      %v4399 = vld [vmem:[%s10 + $0x200] sm:$0xff]
      %v4400 = vld [vmem:[%s10 + $0x208] sm:$0xff]
      %v4401 = vld [vmem:[%s10 + $0x210] sm:$0xff]
      %v4402 = vld [vmem:[%s10 + $0x218] sm:$0xff]
      %v4403 = vld [vmem:[%s10 + $0x220] sm:$0xff]
      %v4404 = vld [vmem:[%s10 + $0x228] sm:$0xff]
      %v4405 = vld [vmem:[%s10 + $0x230] sm:$0xff]
      %v4406 = vld [vmem:[%s10 + $0x238] sm:$0xff]
      %v4407 = vld [vmem:[%s10 + $0x240] sm:$0xff]
      %v4408 = vld [vmem:[%s10 + $0x248] sm:$0xff]
      %v4409 = vld [vmem:[%s10 + $0x250] sm:$0xff]
      %v4410 = vld [vmem:[%s10 + $0x258] sm:$0xff]
      %v4411 = vld [vmem:[%s10 + $0x260] sm:$0xff]
      %v4412 = vld [vmem:[%s10 + $0x268] sm:$0xff]
      %v4413 = vld [vmem:[%s10 + $0x270] sm:$0xff]
      %v4414 = vld [vmem:[%s10 + $0x278] sm:$0xff]
      %v4415 = vld [vmem:[%s10 + $0x280] sm:$0xff]
      %v4416 = vld [vmem:[%s10 + $0x288] sm:$0xff]
      %v4417 = vld [vmem:[%s10 + $0x290] sm:$0xff]
      %v4418 = vld [vmem:[%s10 + $0x298] sm:$0xff]
      %v4419 = vld [vmem:[%s10 + $0x2a0] sm:$0xff]
      %v4420 = vld [vmem:[%s10 + $0x2a8] sm:$0xff]
      %v4421 = vld [vmem:[%s10 + $0x2b0] sm:$0xff]
      %v4422 = vld [vmem:[%s10 + $0x2b8] sm:$0xff]
      %v4423 = vld [vmem:[%s10 + $0x2c0] sm:$0xff]
      %v4424 = vld [vmem:[%s10 + $0x2c8] sm:$0xff]
      %v4425 = vld [vmem:[%s10 + $0x2d0] sm:$0xff]
      %v4426 = vld [vmem:[%s10 + $0x2d8] sm:$0xff]
      %v4427 = vld [vmem:[%s10 + $0x2e0] sm:$0xff]
      %v4428 = vld [vmem:[%s10 + $0x2e8] sm:$0xff]
      %v4429 = vld [vmem:[%s10 + $0x2f0] sm:$0xff]
      %v4430 = vld [vmem:[%s10 + $0x2f8] sm:$0xff]
      %v4431 = vld [vmem:[%s10 + $0x300] sm:$0xff]
      %v4432 = vld [vmem:[%s10 + $0x308] sm:$0xff]
      %v4433 = vld [vmem:[%s10 + $0x310] sm:$0xff]
      %v4434 = vld [vmem:[%s10 + $0x318] sm:$0xff]
      %v4435 = vld [vmem:[%s10 + $0x320] sm:$0xff]
      %v4436 = vld [vmem:[%s10 + $0x328] sm:$0xff]
      %v4437 = vld [vmem:[%s10 + $0x330] sm:$0xff]
      %v4438 = vld [vmem:[%s10 + $0x338] sm:$0xff]
      %v4439 = vld [vmem:[%s10 + $0x340] sm:$0xff]
      %v4440 = vld [vmem:[%s10 + $0x348] sm:$0xff]
      %v4441 = vld [vmem:[%s10 + $0x350] sm:$0xff]
      %v4442 = vld [vmem:[%s10 + $0x358] sm:$0xff]
      %v4443 = vld [vmem:[%s10 + $0x360] sm:$0xff]
      %v4444 = vld [vmem:[%s10 + $0x368] sm:$0xff]
      %v4445 = vld [vmem:[%s10 + $0x370] sm:$0xff]
      %v4446 = vld [vmem:[%s10 + $0x378] sm:$0xff]
      %v4447 = vld [vmem:[%s10 + $0x380] sm:$0xff]
      %v4448 = vld [vmem:[%s10 + $0x388] sm:$0xff]
      %v4449 = vld [vmem:[%s10 + $0x390] sm:$0xff]
      %v4450 = vld [vmem:[%s10 + $0x398] sm:$0xff]
      %v4451 = vld [vmem:[%s10 + $0x3a0] sm:$0xff]
      %v4452 = vld [vmem:[%s10 + $0x3a8] sm:$0xff]
      %v4453 = vld [vmem:[%s10 + $0x3b0] sm:$0xff]
      %v4454 = vld [vmem:[%s10 + $0x3b8] sm:$0xff]
      %v4455 = vld [vmem:[%s10 + $0x3c0] sm:$0xff]
      %v4456 = vld [vmem:[%s10 + $0x3c8] sm:$0xff]
      %v4457 = vld [vmem:[%s10 + $0x3d0] sm:$0xff]
      %v4458 = vld [vmem:[%s10 + $0x3d8] sm:$0xff]
      %v4459 = vld [vmem:[%s10 + $0x3e0] sm:$0xff]
      %v4460 = vld [vmem:[%s10 + $0x3e8] sm:$0xff]
      %v4461 = vld [vmem:[%s10 + $0x3f0] sm:$0xff]
      %v4462 = vld [vmem:[%s10 + $0x3f8] sm:$0xff]
      %v4463 = vld [vmem:[%s10 + $0x400] sm:$0xff]
      %v4464 = vld [vmem:[%s10 + $0x408] sm:$0xff]
      %v4465 = vld [vmem:[%s10 + $0x410] sm:$0xff]
      %v4466 = vld [vmem:[%s10 + $0x418] sm:$0xff]
      %v4467 = vld [vmem:[%s10 + $0x420] sm:$0xff]
      %v4468 = vld [vmem:[%s10 + $0x428] sm:$0xff]
      %v4469 = vld [vmem:[%s10 + $0x430] sm:$0xff]
      %v4470 = vld [vmem:[%s10 + $0x438] sm:$0xff]
      %v4471 = vld [vmem:[%s10 + $0x440] sm:$0xff]
      %v4472 = vld [vmem:[%s10 + $0x448] sm:$0xff]
      %v4473 = vld [vmem:[%s10 + $0x450] sm:$0xff]
      %v4474 = vld [vmem:[%s10 + $0x458] sm:$0xff]
      %v4475 = vld [vmem:[%s10 + $0x460] sm:$0xff]
      %v4476 = vld [vmem:[%s10 + $0x468] sm:$0xff]
      %v4477 = vld [vmem:[%s10 + $0x470] sm:$0xff]
      %v4478 = vld [vmem:[%s10 + $0x478] sm:$0xff]
      %v4479 = vld [vmem:[%s10 + $0x480] sm:$0xff]
      %v4480 = vld [vmem:[%s10 + $0x488] sm:$0xff]
      %v4481 = vld [vmem:[%s10 + $0x490] sm:$0xff]
      %v4482 = vld [vmem:[%s10 + $0x498] sm:$0xff]
      %v4483 = vld [vmem:[%s10 + $0x4a0] sm:$0xff]
      %v4484 = vld [vmem:[%s10 + $0x4a8] sm:$0xff]
      %v4485 = vld [vmem:[%s10 + $0x4b0] sm:$0xff]
      %v4486 = vld [vmem:[%s10 + $0x4b8] sm:$0xff]
      %v4487 = vld [vmem:[%s10 + $0x4c0] sm:$0xff]
      %v4488 = vld [vmem:[%s10 + $0x4c8] sm:$0xff]
      %v4489 = vld [vmem:[%s10 + $0x4d0] sm:$0xff]
      %v4490 = vld [vmem:[%s10 + $0x4d8] sm:$0xff]
      %v4491 = vld [vmem:[%s10 + $0x4e0] sm:$0xff]
      %v4492 = vld [vmem:[%s10 + $0x4e8] sm:$0xff]
      %v4493 = vld [vmem:[%s10 + $0x4f0] sm:$0xff]
      %v4494 = vld [vmem:[%s10 + $0x4f8] sm:$0xff]
      %v4495 = vld [vmem:[%s10 + $0x500] sm:$0xff]
      %v4496 = vld [vmem:[%s10 + $0x508] sm:$0xff]
      %v4497 = vld [vmem:[%s10 + $0x510] sm:$0xff]
      %v4498 = vld [vmem:[%s10 + $0x518] sm:$0xff]
      %v4499 = vld [vmem:[%s10 + $0x520] sm:$0xff]
      %v4500 = vld [vmem:[%s10 + $0x528] sm:$0xff]
      %v4501 = vld [vmem:[%s10 + $0x530] sm:$0xff]
      %v4502 = vld [vmem:[%s10 + $0x538] sm:$0xff]
      %v4503 = vld [vmem:[%s10 + $0x540] sm:$0xff]
      %v4504 = vld [vmem:[%s10 + $0x548] sm:$0xff]
      %v4505 = vld [vmem:[%s10 + $0x550] sm:$0xff]
      %v4506 = vld [vmem:[%s10 + $0x558] sm:$0xff]
      %v4507 = vld [vmem:[%s10 + $0x560] sm:$0xff]
      %v4508 = vld [vmem:[%s10 + $0x568] sm:$0xff]
      %v4509 = vld [vmem:[%s10 + $0x570] sm:$0xff]
      %v4510 = vld [vmem:[%s10 + $0x578] sm:$0xff]
      %v4511 = vld [vmem:[%s10 + $0x580] sm:$0xff]
      %v4512 = vld [vmem:[%s10 + $0x588] sm:$0xff]
      %v4513 = vld [vmem:[%s10 + $0x590] sm:$0xff]
      %v4514 = vld [vmem:[%s10 + $0x598] sm:$0xff]
      %v4515 = vld [vmem:[%s10 + $0x5a0] sm:$0xff]
      %v4516 = vld [vmem:[%s10 + $0x5a8] sm:$0xff]
      %v4517 = vld [vmem:[%s10 + $0x5b0] sm:$0xff]
      %v4518 = vld [vmem:[%s10 + $0x5b8] sm:$0xff]
      %v4519 = vld [vmem:[%s10 + $0x5c0] sm:$0xff]
      %v4520 = vld [vmem:[%s10 + $0x5c8] sm:$0xff]
      %v4521 = vld [vmem:[%s10 + $0x5d0] sm:$0xff]
      %v4522 = vld [vmem:[%s10 + $0x5d8] sm:$0xff]
      %v4523 = vld [vmem:[%s10 + $0x5e0] sm:$0xff]
      %v4524 = vld [vmem:[%s10 + $0x5e8] sm:$0xff]
      %v4525 = vld [vmem:[%s10 + $0x5f0] sm:$0xff]
      %v4526 = vld [vmem:[%s10 + $0x5f8] sm:$0xff]
      %v4527 = vld [vmem:[%s10 + $0x600] sm:$0xff]
      %v4528 = vld [vmem:[%s10 + $0x608] sm:$0xff]
      %v4529 = vld [vmem:[%s10 + $0x610] sm:$0xff]
      %v4530 = vld [vmem:[%s10 + $0x618] sm:$0xff]
      %v4531 = vld [vmem:[%s10 + $0x620] sm:$0xff]
      %v4532 = vld [vmem:[%s10 + $0x628] sm:$0xff]
      %v4533 = vld [vmem:[%s10 + $0x630] sm:$0xff]
      %v4534 = vld [vmem:[%s10 + $0x638] sm:$0xff]
      %v4535 = vld [vmem:[%s10 + $0x640] sm:$0xff]
      %v4536 = vld [vmem:[%s10 + $0x648] sm:$0xff]
      %v4537 = vld [vmem:[%s10 + $0x650] sm:$0xff]
      %v4538 = vld [vmem:[%s10 + $0x658] sm:$0xff]
      %v4539 = vld [vmem:[%s10 + $0x660] sm:$0xff]
      %v4540 = vld [vmem:[%s10 + $0x668] sm:$0xff]
      %v4541 = vld [vmem:[%s10 + $0x670] sm:$0xff]
      %v4542 = vld [vmem:[%s10 + $0x678] sm:$0xff]
      %v4543 = vld [vmem:[%s10 + $0x680] sm:$0xff]
      %v4544 = vld [vmem:[%s10 + $0x688] sm:$0xff]
      %v4545 = vld [vmem:[%s10 + $0x690] sm:$0xff]
      %v4546 = vld [vmem:[%s10 + $0x698] sm:$0xff]
      %v4547 = vld [vmem:[%s10 + $0x6a0] sm:$0xff]
      %v4548 = vld [vmem:[%s10 + $0x6a8] sm:$0xff]
      %v4549 = vld [vmem:[%s10 + $0x6b0] sm:$0xff]
      %v4550 = vld [vmem:[%s10 + $0x6b8] sm:$0xff]
      %v4551 = vld [vmem:[%s10 + $0x6c0] sm:$0xff]
      %v4552 = vld [vmem:[%s10 + $0x6c8] sm:$0xff]
      %v4553 = vld [vmem:[%s10 + $0x6d0] sm:$0xff]
      %v4554 = vld [vmem:[%s10 + $0x6d8] sm:$0xff]
      %v4555 = vld [vmem:[%s10 + $0x6e0] sm:$0xff]
      %v4556 = vld [vmem:[%s10 + $0x6e8] sm:$0xff]
      %v4557 = vld [vmem:[%s10 + $0x6f0] sm:$0xff]
      %v4558 = vld [vmem:[%s10 + $0x6f8] sm:$0xff]
      %v4559 = vld [vmem:[%s10 + $0x700] sm:$0xff]
      %v4560 = vld [vmem:[%s10 + $0x708] sm:$0xff]
      %v4561 = vld [vmem:[%s10 + $0x710] sm:$0xff]
      %v4562 = vld [vmem:[%s10 + $0x718] sm:$0xff]
      %v4563 = vld [vmem:[%s10 + $0x720] sm:$0xff]
      %v4564 = vld [vmem:[%s10 + $0x728] sm:$0xff]
      %v4565 = vld [vmem:[%s10 + $0x730] sm:$0xff]
      %v4566 = vld [vmem:[%s10 + $0x738] sm:$0xff]
      %v4567 = vld [vmem:[%s10 + $0x740] sm:$0xff]
      %v4568 = vld [vmem:[%s10 + $0x748] sm:$0xff]
      %v4569 = vld [vmem:[%s10 + $0x750] sm:$0xff]
      %v4570 = vld [vmem:[%s10 + $0x758] sm:$0xff]
      %v4571 = vld [vmem:[%s10 + $0x760] sm:$0xff]
      %v4572 = vld [vmem:[%s10 + $0x768] sm:$0xff]
      %v4573 = vld [vmem:[%s10 + $0x770] sm:$0xff]
      %v4574 = vld [vmem:[%s10 + $0x778] sm:$0xff]
      %v4575 = vld [vmem:[%s10 + $0x780] sm:$0xff]
      %v4576 = vld [vmem:[%s10 + $0x788] sm:$0xff]
      %v4577 = vld [vmem:[%s10 + $0x790] sm:$0xff]
      %v4578 = vld [vmem:[%s10 + $0x798] sm:$0xff]
      %v4579 = vld [vmem:[%s10 + $0x7a0] sm:$0xff]
      %v4580 = vld [vmem:[%s10 + $0x7a8] sm:$0xff]
      %v4581 = vld [vmem:[%s10 + $0x7b0] sm:$0xff]
      %v4582 = vld [vmem:[%s10 + $0x7b8] sm:$0xff]
      %v4583 = vld [vmem:[%s10 + $0x7c0] sm:$0xff]
      %v4584 = vld [vmem:[%s10 + $0x7c8] sm:$0xff]
      %v4585 = vld [vmem:[%s10 + $0x7d0] sm:$0xff]
      %v4586 = vld [vmem:[%s10 + $0x7d8] sm:$0xff]
      %v4587 = vld [vmem:[%s10 + $0x7e0] sm:$0xff]
      %v4588 = vld [vmem:[%s10 + $0x7e8] sm:$0xff]
      %v4589 = vld [vmem:[%s10 + $0x7f0] sm:$0xff]
      %v4590 = vld [vmem:[%s10 + $0x7f8] sm:$0xff]
      %v4591 = vld [vmem:[%s11] sm:$0xf]
      %v4848 = vunpack.c.l.b16 %v4335
      %v4849 = vunpack.c.h.b16 %v4335
      %v4850 = vunpack.c.l.b16 %v4336
      %v4851 = vunpack.c.h.b16 %v4336
      %v4852 = vunpack.c.l.b16 %v4337
      %v4853 = vunpack.c.h.b16 %v4337
      %v4854 = vunpack.c.l.b16 %v4338
      %v4855 = vunpack.c.h.b16 %v4338
      %v4856 = vunpack.c.l.b16 %v4339
      %v4857 = vunpack.c.h.b16 %v4339
      %v4858 = vunpack.c.l.b16 %v4340
      %v4859 = vunpack.c.h.b16 %v4340
      %v4860 = vunpack.c.l.b16 %v4341
      %v4861 = vunpack.c.h.b16 %v4341
      %v4862 = vunpack.c.l.b16 %v4342
      %v4863 = vunpack.c.h.b16 %v4342
      %v4864 = vunpack.c.l.b16 %v4343
      %v4865 = vunpack.c.h.b16 %v4343
      %v4866 = vunpack.c.l.b16 %v4344
      %v4867 = vunpack.c.h.b16 %v4344
      %v4868 = vunpack.c.l.b16 %v4345
      %v4869 = vunpack.c.h.b16 %v4345
      %v4870 = vunpack.c.l.b16 %v4346
      %v4871 = vunpack.c.h.b16 %v4346
      %v4872 = vunpack.c.l.b16 %v4347
      %v4873 = vunpack.c.h.b16 %v4347
      %v4874 = vunpack.c.l.b16 %v4348
      %v4875 = vunpack.c.h.b16 %v4348
      %v4876 = vunpack.c.l.b16 %v4349
      %v4877 = vunpack.c.h.b16 %v4349
      %v4878 = vunpack.c.l.b16 %v4350
      %v4879 = vunpack.c.h.b16 %v4350
      %v4880 = vunpack.c.l.b16 %v4351
      %v4881 = vunpack.c.h.b16 %v4351
      %v4882 = vunpack.c.l.b16 %v4352
      %v4883 = vunpack.c.h.b16 %v4352
      %v4884 = vunpack.c.l.b16 %v4353
      %v4885 = vunpack.c.h.b16 %v4353
      %v4886 = vunpack.c.l.b16 %v4354
      %v4887 = vunpack.c.h.b16 %v4354
      %v4888 = vunpack.c.l.b16 %v4355
      %v4889 = vunpack.c.h.b16 %v4355
      %v4890 = vunpack.c.l.b16 %v4356
      %v4891 = vunpack.c.h.b16 %v4356
      %v4892 = vunpack.c.l.b16 %v4357
      %v4893 = vunpack.c.h.b16 %v4357
      %v4894 = vunpack.c.l.b16 %v4358
      %v4895 = vunpack.c.h.b16 %v4358
      %v4896 = vunpack.c.l.b16 %v4359
      %v4897 = vunpack.c.h.b16 %v4359
      %v4898 = vunpack.c.l.b16 %v4360
      %v4899 = vunpack.c.h.b16 %v4360
      %v4900 = vunpack.c.l.b16 %v4361
      %v4901 = vunpack.c.h.b16 %v4361
      %v4902 = vunpack.c.l.b16 %v4362
      %v4903 = vunpack.c.h.b16 %v4362
      %v4904 = vunpack.c.l.b16 %v4363
      %v4905 = vunpack.c.h.b16 %v4363
      %v4906 = vunpack.c.l.b16 %v4364
      %v4907 = vunpack.c.h.b16 %v4364
      %v4908 = vunpack.c.l.b16 %v4365
      %v4909 = vunpack.c.h.b16 %v4365
      %v4910 = vunpack.c.l.b16 %v4366
      %v4911 = vunpack.c.h.b16 %v4366
      %v4912 = vunpack.c.l.b16 %v4367
      %v4913 = vunpack.c.h.b16 %v4367
      %v4914 = vunpack.c.l.b16 %v4368
      %v4915 = vunpack.c.h.b16 %v4368
      %v4916 = vunpack.c.l.b16 %v4369
      %v4917 = vunpack.c.h.b16 %v4369
      %v4918 = vunpack.c.l.b16 %v4370
      %v4919 = vunpack.c.h.b16 %v4370
      %v4920 = vunpack.c.l.b16 %v4371
      %v4921 = vunpack.c.h.b16 %v4371
      %v4922 = vunpack.c.l.b16 %v4372
      %v4923 = vunpack.c.h.b16 %v4372
      %v4924 = vunpack.c.l.b16 %v4373
      %v4925 = vunpack.c.h.b16 %v4373
      %v4926 = vunpack.c.l.b16 %v4374
      %v4927 = vunpack.c.h.b16 %v4374
      %v4928 = vunpack.c.l.b16 %v4375
      %v4929 = vunpack.c.h.b16 %v4375
      %v4930 = vunpack.c.l.b16 %v4376
      %v4931 = vunpack.c.h.b16 %v4376
      %v4932 = vunpack.c.l.b16 %v4377
      %v4933 = vunpack.c.h.b16 %v4377
      %v4934 = vunpack.c.l.b16 %v4378
      %v4935 = vunpack.c.h.b16 %v4378
      %v4936 = vunpack.c.l.b16 %v4379
      %v4937 = vunpack.c.h.b16 %v4379
      %v4938 = vunpack.c.l.b16 %v4380
      %v4939 = vunpack.c.h.b16 %v4380
      %v4940 = vunpack.c.l.b16 %v4381
      %v4941 = vunpack.c.h.b16 %v4381
      %v4942 = vunpack.c.l.b16 %v4382
      %v4943 = vunpack.c.h.b16 %v4382
      %v4944 = vunpack.c.l.b16 %v4383
      %v4945 = vunpack.c.h.b16 %v4383
      %v4946 = vunpack.c.l.b16 %v4384
      %v4947 = vunpack.c.h.b16 %v4384
      %v4948 = vunpack.c.l.b16 %v4385
      %v4949 = vunpack.c.h.b16 %v4385
      %v4950 = vunpack.c.l.b16 %v4386
      %v4951 = vunpack.c.h.b16 %v4386
      %v4952 = vunpack.c.l.b16 %v4387
      %v4953 = vunpack.c.h.b16 %v4387
      %v4954 = vunpack.c.l.b16 %v4388
      %v4955 = vunpack.c.h.b16 %v4388
      %v4956 = vunpack.c.l.b16 %v4389
      %v4957 = vunpack.c.h.b16 %v4389
      %v4958 = vunpack.c.l.b16 %v4390
      %v4959 = vunpack.c.h.b16 %v4390
      %v4960 = vunpack.c.l.b16 %v4391
      %v4961 = vunpack.c.h.b16 %v4391
      %v4962 = vunpack.c.l.b16 %v4392
      %v4963 = vunpack.c.h.b16 %v4392
      %v4964 = vunpack.c.l.b16 %v4393
      %v4965 = vunpack.c.h.b16 %v4393
      %v4966 = vunpack.c.l.b16 %v4394
      %v4967 = vunpack.c.h.b16 %v4394
      %v4968 = vunpack.c.l.b16 %v4395
      %v4969 = vunpack.c.h.b16 %v4395
      %v4970 = vunpack.c.l.b16 %v4396
      %v4971 = vunpack.c.h.b16 %v4396
      %v4972 = vunpack.c.l.b16 %v4397
      %v4973 = vunpack.c.h.b16 %v4397
      %v4974 = vunpack.c.l.b16 %v4398
      %v4975 = vunpack.c.h.b16 %v4398
      %v4976 = vunpack.c.l.b16 %v4399
      %v4977 = vunpack.c.h.b16 %v4399
      %v4978 = vunpack.c.l.b16 %v4400
      %v4979 = vunpack.c.h.b16 %v4400
      %v4980 = vunpack.c.l.b16 %v4401
      %v4981 = vunpack.c.h.b16 %v4401
      %v4982 = vunpack.c.l.b16 %v4402
      %v4983 = vunpack.c.h.b16 %v4402
      %v4984 = vunpack.c.l.b16 %v4403
      %v4985 = vunpack.c.h.b16 %v4403
      %v4986 = vunpack.c.l.b16 %v4404
      %v4987 = vunpack.c.h.b16 %v4404
      %v4988 = vunpack.c.l.b16 %v4405
      %v4989 = vunpack.c.h.b16 %v4405
      %v4990 = vunpack.c.l.b16 %v4406
      %v4991 = vunpack.c.h.b16 %v4406
      %v4992 = vunpack.c.l.b16 %v4407
      %v4993 = vunpack.c.h.b16 %v4407
      %v4994 = vunpack.c.l.b16 %v4408
      %v4995 = vunpack.c.h.b16 %v4408
      %v4996 = vunpack.c.l.b16 %v4409
      %v4997 = vunpack.c.h.b16 %v4409
      %v4998 = vunpack.c.l.b16 %v4410
      %v4999 = vunpack.c.h.b16 %v4410
      %v5000 = vunpack.c.l.b16 %v4411
      %v5001 = vunpack.c.h.b16 %v4411
      %v5002 = vunpack.c.l.b16 %v4412
      %v5003 = vunpack.c.h.b16 %v4412
      %v5004 = vunpack.c.l.b16 %v4413
      %v5005 = vunpack.c.h.b16 %v4413
      %v5006 = vunpack.c.l.b16 %v4414
      %v5007 = vunpack.c.h.b16 %v4414
      %v5008 = vunpack.c.l.b16 %v4415
      %v5009 = vunpack.c.h.b16 %v4415
      %v5010 = vunpack.c.l.b16 %v4416
      %v5011 = vunpack.c.h.b16 %v4416
      %v5012 = vunpack.c.l.b16 %v4417
      %v5013 = vunpack.c.h.b16 %v4417
      %v5014 = vunpack.c.l.b16 %v4418
      %v5015 = vunpack.c.h.b16 %v4418
      %v5016 = vunpack.c.l.b16 %v4419
      %v5017 = vunpack.c.h.b16 %v4419
      %v5018 = vunpack.c.l.b16 %v4420
      %v5019 = vunpack.c.h.b16 %v4420
      %v5020 = vunpack.c.l.b16 %v4421
      %v5021 = vunpack.c.h.b16 %v4421
      %v5022 = vunpack.c.l.b16 %v4422
      %v5023 = vunpack.c.h.b16 %v4422
      %v5024 = vunpack.c.l.b16 %v4423
      %v5025 = vunpack.c.h.b16 %v4423
      %v5026 = vunpack.c.l.b16 %v4424
      %v5027 = vunpack.c.h.b16 %v4424
      %v5028 = vunpack.c.l.b16 %v4425
      %v5029 = vunpack.c.h.b16 %v4425
      %v5030 = vunpack.c.l.b16 %v4426
      %v5031 = vunpack.c.h.b16 %v4426
      %v5032 = vunpack.c.l.b16 %v4427
      %v5033 = vunpack.c.h.b16 %v4427
      %v5034 = vunpack.c.l.b16 %v4428
      %v5035 = vunpack.c.h.b16 %v4428
      %v5036 = vunpack.c.l.b16 %v4429
      %v5037 = vunpack.c.h.b16 %v4429
      %v5038 = vunpack.c.l.b16 %v4430
      %v5039 = vunpack.c.h.b16 %v4430
      %v5040 = vunpack.c.l.b16 %v4431
      %v5041 = vunpack.c.h.b16 %v4431
      %v5042 = vunpack.c.l.b16 %v4432
      %v5043 = vunpack.c.h.b16 %v4432
      %v5044 = vunpack.c.l.b16 %v4433
      %v5045 = vunpack.c.h.b16 %v4433
      %v5046 = vunpack.c.l.b16 %v4434
      %v5047 = vunpack.c.h.b16 %v4434
      %v5048 = vunpack.c.l.b16 %v4435
      %v5049 = vunpack.c.h.b16 %v4435
      %v5050 = vunpack.c.l.b16 %v4436
      %v5051 = vunpack.c.h.b16 %v4436
      %v5052 = vunpack.c.l.b16 %v4437
      %v5053 = vunpack.c.h.b16 %v4437
      %v5054 = vunpack.c.l.b16 %v4438
      %v5055 = vunpack.c.h.b16 %v4438
      %v5056 = vunpack.c.l.b16 %v4439
      %v5057 = vunpack.c.h.b16 %v4439
      %v5058 = vunpack.c.l.b16 %v4440
      %v5059 = vunpack.c.h.b16 %v4440
      %v5060 = vunpack.c.l.b16 %v4441
      %v5061 = vunpack.c.h.b16 %v4441
      %v5062 = vunpack.c.l.b16 %v4442
      %v5063 = vunpack.c.h.b16 %v4442
      %v5064 = vunpack.c.l.b16 %v4443
      %v5065 = vunpack.c.h.b16 %v4443
      %v5066 = vunpack.c.l.b16 %v4444
      %v5067 = vunpack.c.h.b16 %v4444
      %v5068 = vunpack.c.l.b16 %v4445
      %v5069 = vunpack.c.h.b16 %v4445
      %v5070 = vunpack.c.l.b16 %v4446
      %v5071 = vunpack.c.h.b16 %v4446
      %v5072 = vunpack.c.l.b16 %v4447
      %v5073 = vunpack.c.h.b16 %v4447
      %v5074 = vunpack.c.l.b16 %v4448
      %v5075 = vunpack.c.h.b16 %v4448
      %v5076 = vunpack.c.l.b16 %v4449
      %v5077 = vunpack.c.h.b16 %v4449
      %v5078 = vunpack.c.l.b16 %v4450
      %v5079 = vunpack.c.h.b16 %v4450
      %v5080 = vunpack.c.l.b16 %v4451
      %v5081 = vunpack.c.h.b16 %v4451
      %v5082 = vunpack.c.l.b16 %v4452
      %v5083 = vunpack.c.h.b16 %v4452
      %v5084 = vunpack.c.l.b16 %v4453
      %v5085 = vunpack.c.h.b16 %v4453
      %v5086 = vunpack.c.l.b16 %v4454
      %v5087 = vunpack.c.h.b16 %v4454
      %v5088 = vunpack.c.l.b16 %v4455
      %v5089 = vunpack.c.h.b16 %v4455
      %v5090 = vunpack.c.l.b16 %v4456
      %v5091 = vunpack.c.h.b16 %v4456
      %v5092 = vunpack.c.l.b16 %v4457
      %v5093 = vunpack.c.h.b16 %v4457
      %v5094 = vunpack.c.l.b16 %v4458
      %v5095 = vunpack.c.h.b16 %v4458
      %v5096 = vunpack.c.l.b16 %v4459
      %v5097 = vunpack.c.h.b16 %v4459
      %v5098 = vunpack.c.l.b16 %v4460
      %v5099 = vunpack.c.h.b16 %v4460
      %v5100 = vunpack.c.l.b16 %v4461
      %v5101 = vunpack.c.h.b16 %v4461
      %v5102 = vunpack.c.l.b16 %v4462
      %v5103 = vunpack.c.h.b16 %v4462
      %v5104 = vunpack.c.l.b16 %v4463
      %v5105 = vunpack.c.h.b16 %v4463
      %v5106 = vunpack.c.l.b16 %v4464
      %v5107 = vunpack.c.h.b16 %v4464
      %v5108 = vunpack.c.l.b16 %v4465
      %v5109 = vunpack.c.h.b16 %v4465
      %v5110 = vunpack.c.l.b16 %v4466
      %v5111 = vunpack.c.h.b16 %v4466
      %v5112 = vunpack.c.l.b16 %v4467
      %v5113 = vunpack.c.h.b16 %v4467
      %v5114 = vunpack.c.l.b16 %v4468
      %v5115 = vunpack.c.h.b16 %v4468
      %v5116 = vunpack.c.l.b16 %v4469
      %v5117 = vunpack.c.h.b16 %v4469
      %v5118 = vunpack.c.l.b16 %v4470
      %v5119 = vunpack.c.h.b16 %v4470
      %v5120 = vunpack.c.l.b16 %v4471
      %v5121 = vunpack.c.h.b16 %v4471
      %v5122 = vunpack.c.l.b16 %v4472
      %v5123 = vunpack.c.h.b16 %v4472
      %v5124 = vunpack.c.l.b16 %v4473
      %v5125 = vunpack.c.h.b16 %v4473
      %v5126 = vunpack.c.l.b16 %v4474
      %v5127 = vunpack.c.h.b16 %v4474
      %v5128 = vunpack.c.l.b16 %v4475
      %v5129 = vunpack.c.h.b16 %v4475
      %v5130 = vunpack.c.l.b16 %v4476
      %v5131 = vunpack.c.h.b16 %v4476
      %v5132 = vunpack.c.l.b16 %v4477
      %v5133 = vunpack.c.h.b16 %v4477
      %v5134 = vunpack.c.l.b16 %v4478
      %v5135 = vunpack.c.h.b16 %v4478
      %v5136 = vunpack.c.l.b16 %v4479
      %v5137 = vunpack.c.h.b16 %v4479
      %v5138 = vunpack.c.l.b16 %v4480
      %v5139 = vunpack.c.h.b16 %v4480
      %v5140 = vunpack.c.l.b16 %v4481
      %v5141 = vunpack.c.h.b16 %v4481
      %v5142 = vunpack.c.l.b16 %v4482
      %v5143 = vunpack.c.h.b16 %v4482
      %v5144 = vunpack.c.l.b16 %v4483
      %v5145 = vunpack.c.h.b16 %v4483
      %v5146 = vunpack.c.l.b16 %v4484
      %v5147 = vunpack.c.h.b16 %v4484
      %v5148 = vunpack.c.l.b16 %v4485
      %v5149 = vunpack.c.h.b16 %v4485
      %v5150 = vunpack.c.l.b16 %v4486
      %v5151 = vunpack.c.h.b16 %v4486
      %v5152 = vunpack.c.l.b16 %v4487
      %v5153 = vunpack.c.h.b16 %v4487
      %v5154 = vunpack.c.l.b16 %v4488
      %v5155 = vunpack.c.h.b16 %v4488
      %v5156 = vunpack.c.l.b16 %v4489
      %v5157 = vunpack.c.h.b16 %v4489
      %v5158 = vunpack.c.l.b16 %v4490
      %v5159 = vunpack.c.h.b16 %v4490
      %v5160 = vunpack.c.l.b16 %v4491
      %v5161 = vunpack.c.h.b16 %v4491
      %v5162 = vunpack.c.l.b16 %v4492
      %v5163 = vunpack.c.h.b16 %v4492
      %v5164 = vunpack.c.l.b16 %v4493
      %v5165 = vunpack.c.h.b16 %v4493
      %v5166 = vunpack.c.l.b16 %v4494
      %v5167 = vunpack.c.h.b16 %v4494
      %v5168 = vunpack.c.l.b16 %v4495
      %v5169 = vunpack.c.h.b16 %v4495
      %v5170 = vunpack.c.l.b16 %v4496
      %v5171 = vunpack.c.h.b16 %v4496
      %v5172 = vunpack.c.l.b16 %v4497
      %v5173 = vunpack.c.h.b16 %v4497
      %v5174 = vunpack.c.l.b16 %v4498
      %v5175 = vunpack.c.h.b16 %v4498
      %v5176 = vunpack.c.l.b16 %v4499
      %v5177 = vunpack.c.h.b16 %v4499
      %v5178 = vunpack.c.l.b16 %v4500
      %v5179 = vunpack.c.h.b16 %v4500
      %v5180 = vunpack.c.l.b16 %v4501
      %v5181 = vunpack.c.h.b16 %v4501
      %v5182 = vunpack.c.l.b16 %v4502
      %v5183 = vunpack.c.h.b16 %v4502
      %v5184 = vunpack.c.l.b16 %v4503
      %v5185 = vunpack.c.h.b16 %v4503
      %v5186 = vunpack.c.l.b16 %v4504
      %v5187 = vunpack.c.h.b16 %v4504
      %v5188 = vunpack.c.l.b16 %v4505
      %v5189 = vunpack.c.h.b16 %v4505
      %v5190 = vunpack.c.l.b16 %v4506
      %v5191 = vunpack.c.h.b16 %v4506
      %v5192 = vunpack.c.l.b16 %v4507
      %v5193 = vunpack.c.h.b16 %v4507
      %v5194 = vunpack.c.l.b16 %v4508
      %v5195 = vunpack.c.h.b16 %v4508
      %v5196 = vunpack.c.l.b16 %v4509
      %v5197 = vunpack.c.h.b16 %v4509
      %v5198 = vunpack.c.l.b16 %v4510
      %v5199 = vunpack.c.h.b16 %v4510
      %v5200 = vunpack.c.l.b16 %v4511
      %v5201 = vunpack.c.h.b16 %v4511
      %v5202 = vunpack.c.l.b16 %v4512
      %v5203 = vunpack.c.h.b16 %v4512
      %v5204 = vunpack.c.l.b16 %v4513
      %v5205 = vunpack.c.h.b16 %v4513
      %v5206 = vunpack.c.l.b16 %v4514
      %v5207 = vunpack.c.h.b16 %v4514
      %v5208 = vunpack.c.l.b16 %v4515
      %v5209 = vunpack.c.h.b16 %v4515
      %v5210 = vunpack.c.l.b16 %v4516
      %v5211 = vunpack.c.h.b16 %v4516
      %v5212 = vunpack.c.l.b16 %v4517
      %v5213 = vunpack.c.h.b16 %v4517
      %v5214 = vunpack.c.l.b16 %v4518
      %v5215 = vunpack.c.h.b16 %v4518
      %v5216 = vunpack.c.l.b16 %v4519
      %v5217 = vunpack.c.h.b16 %v4519
      %v5218 = vunpack.c.l.b16 %v4520
      %v5219 = vunpack.c.h.b16 %v4520
      %v5220 = vunpack.c.l.b16 %v4521
      %v5221 = vunpack.c.h.b16 %v4521
      %v5222 = vunpack.c.l.b16 %v4522
      %v5223 = vunpack.c.h.b16 %v4522
      %v5224 = vunpack.c.l.b16 %v4523
      %v5225 = vunpack.c.h.b16 %v4523
      %v5226 = vunpack.c.l.b16 %v4524
      %v5227 = vunpack.c.h.b16 %v4524
      %v5228 = vunpack.c.l.b16 %v4525
      %v5229 = vunpack.c.h.b16 %v4525
      %v5230 = vunpack.c.l.b16 %v4526
      %v5231 = vunpack.c.h.b16 %v4526
      %v5232 = vunpack.c.l.b16 %v4527
      %v5233 = vunpack.c.h.b16 %v4527
      %v5234 = vunpack.c.l.b16 %v4528
      %v5235 = vunpack.c.h.b16 %v4528
      %v5236 = vunpack.c.l.b16 %v4529
      %v5237 = vunpack.c.h.b16 %v4529
      %v5238 = vunpack.c.l.b16 %v4530
      %v5239 = vunpack.c.h.b16 %v4530
      %v5240 = vunpack.c.l.b16 %v4531
      %v5241 = vunpack.c.h.b16 %v4531
      %v5242 = vunpack.c.l.b16 %v4532
      %v5243 = vunpack.c.h.b16 %v4532
      %v5244 = vunpack.c.l.b16 %v4533
      %v5245 = vunpack.c.h.b16 %v4533
      %v5246 = vunpack.c.l.b16 %v4534
      %v5247 = vunpack.c.h.b16 %v4534
      %v5248 = vunpack.c.l.b16 %v4535
      %v5249 = vunpack.c.h.b16 %v4535
      %v5250 = vunpack.c.l.b16 %v4536
      %v5251 = vunpack.c.h.b16 %v4536
      %v5252 = vunpack.c.l.b16 %v4537
      %v5253 = vunpack.c.h.b16 %v4537
      %v5254 = vunpack.c.l.b16 %v4538
      %v5255 = vunpack.c.h.b16 %v4538
      %v5256 = vunpack.c.l.b16 %v4539
      %v5257 = vunpack.c.h.b16 %v4539
      %v5258 = vunpack.c.l.b16 %v4540
      %v5259 = vunpack.c.h.b16 %v4540
      %v5260 = vunpack.c.l.b16 %v4541
      %v5261 = vunpack.c.h.b16 %v4541
      %v5262 = vunpack.c.l.b16 %v4542
      %v5263 = vunpack.c.h.b16 %v4542
      %v5264 = vunpack.c.l.b16 %v4543
      %v5265 = vunpack.c.h.b16 %v4543
      %v5266 = vunpack.c.l.b16 %v4544
      %v5267 = vunpack.c.h.b16 %v4544
      %v5268 = vunpack.c.l.b16 %v4545
      %v5269 = vunpack.c.h.b16 %v4545
      %v5270 = vunpack.c.l.b16 %v4546
      %v5271 = vunpack.c.h.b16 %v4546
      %v5272 = vunpack.c.l.b16 %v4547
      %v5273 = vunpack.c.h.b16 %v4547
      %v5274 = vunpack.c.l.b16 %v4548
      %v5275 = vunpack.c.h.b16 %v4548
      %v5276 = vunpack.c.l.b16 %v4549
      %v5277 = vunpack.c.h.b16 %v4549
      %v5278 = vunpack.c.l.b16 %v4550
      %v5279 = vunpack.c.h.b16 %v4550
      %v5280 = vunpack.c.l.b16 %v4551
      %v5281 = vunpack.c.h.b16 %v4551
      %v5282 = vunpack.c.l.b16 %v4552
      %v5283 = vunpack.c.h.b16 %v4552
      %v5284 = vunpack.c.l.b16 %v4553
      %v5285 = vunpack.c.h.b16 %v4553
      %v5286 = vunpack.c.l.b16 %v4554
      %v5287 = vunpack.c.h.b16 %v4554
      %v5288 = vunpack.c.l.b16 %v4555
      %v5289 = vunpack.c.h.b16 %v4555
      %v5290 = vunpack.c.l.b16 %v4556
      %v5291 = vunpack.c.h.b16 %v4556
      %v5292 = vunpack.c.l.b16 %v4557
      %v5293 = vunpack.c.h.b16 %v4557
      %v5294 = vunpack.c.l.b16 %v4558
      %v5295 = vunpack.c.h.b16 %v4558
      %v5296 = vunpack.c.l.b16 %v4559
      %v5297 = vunpack.c.h.b16 %v4559
      %v5298 = vunpack.c.l.b16 %v4560
      %v5299 = vunpack.c.h.b16 %v4560
      %v5300 = vunpack.c.l.b16 %v4561
      %v5301 = vunpack.c.h.b16 %v4561
      %v5302 = vunpack.c.l.b16 %v4562
      %v5303 = vunpack.c.h.b16 %v4562
      %v5304 = vunpack.c.l.b16 %v4563
      %v5305 = vunpack.c.h.b16 %v4563
      %v5306 = vunpack.c.l.b16 %v4564
      %v5307 = vunpack.c.h.b16 %v4564
      %v5308 = vunpack.c.l.b16 %v4565
      %v5309 = vunpack.c.h.b16 %v4565
      %v5310 = vunpack.c.l.b16 %v4566
      %v5311 = vunpack.c.h.b16 %v4566
      %v5312 = vunpack.c.l.b16 %v4567
      %v5313 = vunpack.c.h.b16 %v4567
      %v5314 = vunpack.c.l.b16 %v4568
      %v5315 = vunpack.c.h.b16 %v4568
      %v5316 = vunpack.c.l.b16 %v4569
      %v5317 = vunpack.c.h.b16 %v4569
      %v5318 = vunpack.c.l.b16 %v4570
      %v5319 = vunpack.c.h.b16 %v4570
      %v5320 = vunpack.c.l.b16 %v4571
      %v5321 = vunpack.c.h.b16 %v4571
      %v5322 = vunpack.c.l.b16 %v4572
      %v5323 = vunpack.c.h.b16 %v4572
      %v5324 = vunpack.c.l.b16 %v4573
      %v5325 = vunpack.c.h.b16 %v4573
      %v5326 = vunpack.c.l.b16 %v4574
      %v5327 = vunpack.c.h.b16 %v4574
      %v5328 = vunpack.c.l.b16 %v4575
      %v5329 = vunpack.c.h.b16 %v4575
      %v5330 = vunpack.c.l.b16 %v4576
      %v5331 = vunpack.c.h.b16 %v4576
      %v5332 = vunpack.c.l.b16 %v4577
      %v5333 = vunpack.c.h.b16 %v4577
      %v5334 = vunpack.c.l.b16 %v4578
      %v5335 = vunpack.c.h.b16 %v4578
      %v5336 = vunpack.c.l.b16 %v4579
      %v5337 = vunpack.c.h.b16 %v4579
      %v5338 = vunpack.c.l.b16 %v4580
      %v5339 = vunpack.c.h.b16 %v4580
      %v5340 = vunpack.c.l.b16 %v4581
      %v5341 = vunpack.c.h.b16 %v4581
      %v5342 = vunpack.c.l.b16 %v4582
      %v5343 = vunpack.c.h.b16 %v4582
      %v5344 = vunpack.c.l.b16 %v4583
      %v5345 = vunpack.c.h.b16 %v4583
      %v5346 = vunpack.c.l.b16 %v4584
      %v5347 = vunpack.c.h.b16 %v4584
      %v5348 = vunpack.c.l.b16 %v4585
      %v5349 = vunpack.c.h.b16 %v4585
      %v5350 = vunpack.c.l.b16 %v4586
      %v5351 = vunpack.c.h.b16 %v4586
      %v5352 = vunpack.c.l.b16 %v4587
      %v5353 = vunpack.c.h.b16 %v4587
      %v5354 = vunpack.c.l.b16 %v4588
      %v5355 = vunpack.c.h.b16 %v4588
      %v5356 = vunpack.c.l.b16 %v4589
      %v5357 = vunpack.c.h.b16 %v4589
      %v5358 = vunpack.c.l.b16 %v4590
      %v5359 = vunpack.c.h.b16 %v4590
      %v5360 = vpack.c.b16 %v4852, %v4848
      %v5361 = vpack.c.b16 %v4853, %v4849
      %v5362 = vpack.c.b16 %v4854, %v4850
      %v5363 = vpack.c.b16 %v4855, %v4851
      %v5364 = vpack.c.b16 %v4860, %v4856
      %v5365 = vpack.c.b16 %v4861, %v4857
      %v5366 = vpack.c.b16 %v4862, %v4858
      %v5367 = vpack.c.b16 %v4863, %v4859
      %v5368 = vpack.c.b16 %v4868, %v4864
      %v5369 = vpack.c.b16 %v4869, %v4865
      %v5370 = vpack.c.b16 %v4870, %v4866
      %v5371 = vpack.c.b16 %v4871, %v4867
      %v5372 = vpack.c.b16 %v4876, %v4872
      %v5373 = vpack.c.b16 %v4877, %v4873
      %v5374 = vpack.c.b16 %v4878, %v4874
      %v5375 = vpack.c.b16 %v4879, %v4875
      %v5376 = vpack.c.b16 %v4884, %v4880
      %v5377 = vpack.c.b16 %v4885, %v4881
      %v5378 = vpack.c.b16 %v4886, %v4882
      %v5379 = vpack.c.b16 %v4887, %v4883
      %v5380 = vpack.c.b16 %v4892, %v4888
      %v5381 = vpack.c.b16 %v4893, %v4889
      %v5382 = vpack.c.b16 %v4894, %v4890
      %v5383 = vpack.c.b16 %v4895, %v4891
      %v5384 = vpack.c.b16 %v4900, %v4896
      %v5385 = vpack.c.b16 %v4901, %v4897
      %v5386 = vpack.c.b16 %v4902, %v4898
      %v5387 = vpack.c.b16 %v4903, %v4899
      %v5388 = vpack.c.b16 %v4908, %v4904
      %v5389 = vpack.c.b16 %v4909, %v4905
      %v5390 = vpack.c.b16 %v4910, %v4906
      %v5391 = vpack.c.b16 %v4911, %v4907
      %v5392 = vpack.c.b16 %v4916, %v4912
      %v5393 = vpack.c.b16 %v4917, %v4913
      %v5394 = vpack.c.b16 %v4918, %v4914
      %v5395 = vpack.c.b16 %v4919, %v4915
      %v5396 = vpack.c.b16 %v4924, %v4920
      %v5397 = vpack.c.b16 %v4925, %v4921
      %v5398 = vpack.c.b16 %v4926, %v4922
      %v5399 = vpack.c.b16 %v4927, %v4923
      %v5400 = vpack.c.b16 %v4932, %v4928
      %v5401 = vpack.c.b16 %v4933, %v4929
      %v5402 = vpack.c.b16 %v4934, %v4930
      %v5403 = vpack.c.b16 %v4935, %v4931
      %v5404 = vpack.c.b16 %v4940, %v4936
      %v5405 = vpack.c.b16 %v4941, %v4937
      %v5406 = vpack.c.b16 %v4942, %v4938
      %v5407 = vpack.c.b16 %v4943, %v4939
      %v5408 = vpack.c.b16 %v4948, %v4944
      %v5409 = vpack.c.b16 %v4949, %v4945
      %v5410 = vpack.c.b16 %v4950, %v4946
      %v5411 = vpack.c.b16 %v4951, %v4947
      %v5412 = vpack.c.b16 %v4956, %v4952
      %v5413 = vpack.c.b16 %v4957, %v4953
      %v5414 = vpack.c.b16 %v4958, %v4954
      %v5415 = vpack.c.b16 %v4959, %v4955
      %v5416 = vpack.c.b16 %v4964, %v4960
      %v5417 = vpack.c.b16 %v4965, %v4961
      %v5418 = vpack.c.b16 %v4966, %v4962
      %v5419 = vpack.c.b16 %v4967, %v4963
      %v5420 = vpack.c.b16 %v4972, %v4968
      %v5421 = vpack.c.b16 %v4973, %v4969
      %v5422 = vpack.c.b16 %v4974, %v4970
      %v5423 = vpack.c.b16 %v4975, %v4971
      %v5424 = vpack.c.b16 %v4980, %v4976
      %v5425 = vpack.c.b16 %v4981, %v4977
      %v5426 = vpack.c.b16 %v4982, %v4978
      %v5427 = vpack.c.b16 %v4983, %v4979
      %v5428 = vpack.c.b16 %v4988, %v4984
      %v5429 = vpack.c.b16 %v4989, %v4985
      %v5430 = vpack.c.b16 %v4990, %v4986
      %v5431 = vpack.c.b16 %v4991, %v4987
      %v5432 = vpack.c.b16 %v4996, %v4992
      %v5433 = vpack.c.b16 %v4997, %v4993
      %v5434 = vpack.c.b16 %v4998, %v4994
      %v5435 = vpack.c.b16 %v4999, %v4995
      %v5436 = vpack.c.b16 %v5004, %v5000
      %v5437 = vpack.c.b16 %v5005, %v5001
      %v5438 = vpack.c.b16 %v5006, %v5002
      %v5439 = vpack.c.b16 %v5007, %v5003
      %v5440 = vpack.c.b16 %v5012, %v5008
      %v5441 = vpack.c.b16 %v5013, %v5009
      %v5442 = vpack.c.b16 %v5014, %v5010
      %v5443 = vpack.c.b16 %v5015, %v5011
      %v5444 = vpack.c.b16 %v5020, %v5016
      %v5445 = vpack.c.b16 %v5021, %v5017
      %v5446 = vpack.c.b16 %v5022, %v5018
      %v5447 = vpack.c.b16 %v5023, %v5019
      %v5448 = vpack.c.b16 %v5028, %v5024
      %v5449 = vpack.c.b16 %v5029, %v5025
      %v5450 = vpack.c.b16 %v5030, %v5026
      %v5451 = vpack.c.b16 %v5031, %v5027
      %v5452 = vpack.c.b16 %v5036, %v5032
      %v5453 = vpack.c.b16 %v5037, %v5033
      %v5454 = vpack.c.b16 %v5038, %v5034
      %v5455 = vpack.c.b16 %v5039, %v5035
      %v5456 = vpack.c.b16 %v5044, %v5040
      %v5457 = vpack.c.b16 %v5045, %v5041
      %v5458 = vpack.c.b16 %v5046, %v5042
      %v5459 = vpack.c.b16 %v5047, %v5043
      %v5460 = vpack.c.b16 %v5052, %v5048
      %v5461 = vpack.c.b16 %v5053, %v5049
      %v5462 = vpack.c.b16 %v5054, %v5050
      %v5463 = vpack.c.b16 %v5055, %v5051
      %v5464 = vpack.c.b16 %v5060, %v5056
      %v5465 = vpack.c.b16 %v5061, %v5057
      %v5466 = vpack.c.b16 %v5062, %v5058
      %v5467 = vpack.c.b16 %v5063, %v5059
      %v5468 = vpack.c.b16 %v5068, %v5064
      %v5469 = vpack.c.b16 %v5069, %v5065
      %v5470 = vpack.c.b16 %v5070, %v5066
      %v5471 = vpack.c.b16 %v5071, %v5067
      %v5472 = vpack.c.b16 %v5076, %v5072
      %v5473 = vpack.c.b16 %v5077, %v5073
      %v5474 = vpack.c.b16 %v5078, %v5074
      %v5475 = vpack.c.b16 %v5079, %v5075
      %v5476 = vpack.c.b16 %v5084, %v5080
      %v5477 = vpack.c.b16 %v5085, %v5081
      %v5478 = vpack.c.b16 %v5086, %v5082
      %v5479 = vpack.c.b16 %v5087, %v5083
      %v5480 = vpack.c.b16 %v5092, %v5088
      %v5481 = vpack.c.b16 %v5093, %v5089
      %v5482 = vpack.c.b16 %v5094, %v5090
      %v5483 = vpack.c.b16 %v5095, %v5091
      %v5484 = vpack.c.b16 %v5100, %v5096
      %v5485 = vpack.c.b16 %v5101, %v5097
      %v5486 = vpack.c.b16 %v5102, %v5098
      %v5487 = vpack.c.b16 %v5103, %v5099
      %v5488 = vpack.c.b16 %v5108, %v5104
      %v5489 = vpack.c.b16 %v5109, %v5105
      %v5490 = vpack.c.b16 %v5110, %v5106
      %v5491 = vpack.c.b16 %v5111, %v5107
      %v5492 = vpack.c.b16 %v5116, %v5112
      %v5493 = vpack.c.b16 %v5117, %v5113
      %v5494 = vpack.c.b16 %v5118, %v5114
      %v5495 = vpack.c.b16 %v5119, %v5115
      %v5496 = vpack.c.b16 %v5124, %v5120
      %v5497 = vpack.c.b16 %v5125, %v5121
      %v5498 = vpack.c.b16 %v5126, %v5122
      %v5499 = vpack.c.b16 %v5127, %v5123
      %v5500 = vpack.c.b16 %v5132, %v5128
      %v5501 = vpack.c.b16 %v5133, %v5129
      %v5502 = vpack.c.b16 %v5134, %v5130
      %v5503 = vpack.c.b16 %v5135, %v5131
      %v5504 = vpack.c.b16 %v5140, %v5136
      %v5505 = vpack.c.b16 %v5141, %v5137
      %v5506 = vpack.c.b16 %v5142, %v5138
      %v5507 = vpack.c.b16 %v5143, %v5139
      %v5508 = vpack.c.b16 %v5148, %v5144
      %v5509 = vpack.c.b16 %v5149, %v5145
      %v5510 = vpack.c.b16 %v5150, %v5146
      %v5511 = vpack.c.b16 %v5151, %v5147
      %v5512 = vpack.c.b16 %v5156, %v5152
      %v5513 = vpack.c.b16 %v5157, %v5153
      %v5514 = vpack.c.b16 %v5158, %v5154
      %v5515 = vpack.c.b16 %v5159, %v5155
      %v5516 = vpack.c.b16 %v5164, %v5160
      %v5517 = vpack.c.b16 %v5165, %v5161
      %v5518 = vpack.c.b16 %v5166, %v5162
      %v5519 = vpack.c.b16 %v5167, %v5163
      %v5520 = vpack.c.b16 %v5172, %v5168
      %v5521 = vpack.c.b16 %v5173, %v5169
      %v5522 = vpack.c.b16 %v5174, %v5170
      %v5523 = vpack.c.b16 %v5175, %v5171
      %v5524 = vpack.c.b16 %v5180, %v5176
      %v5525 = vpack.c.b16 %v5181, %v5177
      %v5526 = vpack.c.b16 %v5182, %v5178
      %v5527 = vpack.c.b16 %v5183, %v5179
      %v5528 = vpack.c.b16 %v5188, %v5184
      %v5529 = vpack.c.b16 %v5189, %v5185
      %v5530 = vpack.c.b16 %v5190, %v5186
      %v5531 = vpack.c.b16 %v5191, %v5187
      %v5532 = vpack.c.b16 %v5196, %v5192
      %v5533 = vpack.c.b16 %v5197, %v5193
      %v5534 = vpack.c.b16 %v5198, %v5194
      %v5535 = vpack.c.b16 %v5199, %v5195
      %v5536 = vpack.c.b16 %v5204, %v5200
      %v5537 = vpack.c.b16 %v5205, %v5201
      %v5538 = vpack.c.b16 %v5206, %v5202
      %v5539 = vpack.c.b16 %v5207, %v5203
      %v5540 = vpack.c.b16 %v5212, %v5208
      %v5541 = vpack.c.b16 %v5213, %v5209
      %v5542 = vpack.c.b16 %v5214, %v5210
      %v5543 = vpack.c.b16 %v5215, %v5211
      %v5544 = vpack.c.b16 %v5220, %v5216
      %v5545 = vpack.c.b16 %v5221, %v5217
      %v5546 = vpack.c.b16 %v5222, %v5218
      %v5547 = vpack.c.b16 %v5223, %v5219
      %v5548 = vpack.c.b16 %v5228, %v5224
      %v5549 = vpack.c.b16 %v5229, %v5225
      %v5550 = vpack.c.b16 %v5230, %v5226
      %v5551 = vpack.c.b16 %v5231, %v5227
      %v5552 = vpack.c.b16 %v5236, %v5232
      %v5553 = vpack.c.b16 %v5237, %v5233
      %v5554 = vpack.c.b16 %v5238, %v5234
      %v5555 = vpack.c.b16 %v5239, %v5235
      %v5556 = vpack.c.b16 %v5244, %v5240
      %v5557 = vpack.c.b16 %v5245, %v5241
      %v5558 = vpack.c.b16 %v5246, %v5242
      %v5559 = vpack.c.b16 %v5247, %v5243
      %v5560 = vpack.c.b16 %v5252, %v5248
      %v5561 = vpack.c.b16 %v5253, %v5249
      %v5562 = vpack.c.b16 %v5254, %v5250
      %v5563 = vpack.c.b16 %v5255, %v5251
      %v5564 = vpack.c.b16 %v5260, %v5256
      %v5565 = vpack.c.b16 %v5261, %v5257
      %v5566 = vpack.c.b16 %v5262, %v5258
      %v5567 = vpack.c.b16 %v5263, %v5259
      %v5568 = vpack.c.b16 %v5268, %v5264
      %v5569 = vpack.c.b16 %v5269, %v5265
      %v5570 = vpack.c.b16 %v5270, %v5266
      %v5571 = vpack.c.b16 %v5271, %v5267
      %v5572 = vpack.c.b16 %v5276, %v5272
      %v5573 = vpack.c.b16 %v5277, %v5273
      %v5574 = vpack.c.b16 %v5278, %v5274
      %v5575 = vpack.c.b16 %v5279, %v5275
      %v5576 = vpack.c.b16 %v5284, %v5280
      %v5577 = vpack.c.b16 %v5285, %v5281
      %v5578 = vpack.c.b16 %v5286, %v5282
      %v5579 = vpack.c.b16 %v5287, %v5283
      %v5580 = vpack.c.b16 %v5292, %v5288
      %v5581 = vpack.c.b16 %v5293, %v5289
      %v5582 = vpack.c.b16 %v5294, %v5290
      %v5583 = vpack.c.b16 %v5295, %v5291
      %v5584 = vpack.c.b16 %v5300, %v5296
      %v5585 = vpack.c.b16 %v5301, %v5297
      %v5586 = vpack.c.b16 %v5302, %v5298
      %v5587 = vpack.c.b16 %v5303, %v5299
      %v5588 = vpack.c.b16 %v5308, %v5304
      %v5589 = vpack.c.b16 %v5309, %v5305
      %v5590 = vpack.c.b16 %v5310, %v5306
      %v5591 = vpack.c.b16 %v5311, %v5307
      %v5592 = vpack.c.b16 %v5316, %v5312
      %v5593 = vpack.c.b16 %v5317, %v5313
      %v5594 = vpack.c.b16 %v5318, %v5314
      %v5595 = vpack.c.b16 %v5319, %v5315
      %v5596 = vpack.c.b16 %v5324, %v5320
      %v5597 = vpack.c.b16 %v5325, %v5321
      %v5598 = vpack.c.b16 %v5326, %v5322
      %v5599 = vpack.c.b16 %v5327, %v5323
      %v5600 = vpack.c.b16 %v5332, %v5328
      %v5601 = vpack.c.b16 %v5333, %v5329
      %v5602 = vpack.c.b16 %v5334, %v5330
      %v5603 = vpack.c.b16 %v5335, %v5331
      %v5604 = vpack.c.b16 %v5340, %v5336
      %v5605 = vpack.c.b16 %v5341, %v5337
      %v5606 = vpack.c.b16 %v5342, %v5338
      %v5607 = vpack.c.b16 %v5343, %v5339
      %v5608 = vpack.c.b16 %v5348, %v5344
      %v5609 = vpack.c.b16 %v5349, %v5345
      %v5610 = vpack.c.b16 %v5350, %v5346
      %v5611 = vpack.c.b16 %v5351, %v5347
      %v5612 = vpack.c.b16 %v5356, %v5352
      %v5613 = vpack.c.b16 %v5357, %v5353
      %v5614 = vpack.c.b16 %v5358, %v5354
      %v5615 = vpack.c.b16 %v5359, %v5355
      %v5873 = vlaneseq
      %v5874 = vshrl.u32 %v5873, 7
      %v5875 = vsub.s32 0, %v5874
      %v5876 = vrot.slane %v4591, %v5875
      %v5877 = vlaneseq
      %v5878 = vshrl.u32 %v5877, 7
      %v5879 = vsub.s32 1, %v5878
      %v5880 = vrot.slane %v4591, %v5879
      %v5881 = vlaneseq
      %v5882 = vshrl.u32 %v5881, 7
      %v5883 = vsub.s32 2, %v5882
      %v5884 = vrot.slane %v4591, %v5883
      %v5885 = vlaneseq
      %v5886 = vshrl.u32 %v5885, 7
      %v5887 = vsub.s32 3, %v5886
      %v5888 = vrot.slane %v4591, %v5887
      %5893 = vmatprep.subr.bf16.mxu0 %v5361
      %5894 = vmatpush1.bf16.msra.mxu0 %v5360
      %5895 = vmatprep.subr.bf16.mxu0 %v5365
      %5896 = vmatpush1.bf16.msra.mxu0 %v5364
      %5897 = vmatprep.subr.bf16.mxu0 %v5369
      %5898 = vmatpush1.bf16.msra.mxu0 %v5368
      %5899 = vmatprep.subr.bf16.mxu0 %v5373
      %5900 = vmatpush1.bf16.msra.mxu0 %v5372
      %5901 = vmatprep.subr.bf16.mxu0 %v5377
      %5902 = vmatpush1.bf16.msra.mxu0 %v5376
      %5903 = vmatprep.subr.bf16.mxu0 %v5381
      %5904 = vmatpush1.bf16.msra.mxu0 %v5380
      %5905 = vmatprep.subr.bf16.mxu0 %v5385
      %5906 = vmatpush1.bf16.msra.mxu0 %v5384
      %5907 = vmatprep.subr.bf16.mxu0 %v5389
      %5908 = vmatpush1.bf16.msra.mxu0 %v5388
      %5909 = vmatprep.subr.bf16.mxu0 %v5393
      %5910 = vmatpush1.bf16.msra.mxu0 %v5392
      %5911 = vmatprep.subr.bf16.mxu0 %v5397
      %5912 = vmatpush1.bf16.msra.mxu0 %v5396
      %5913 = vmatprep.subr.bf16.mxu0 %v5401
      %5914 = vmatpush1.bf16.msra.mxu0 %v5400
      %5915 = vmatprep.subr.bf16.mxu0 %v5405
      %5916 = vmatpush1.bf16.msra.mxu0 %v5404
      %5917 = vmatprep.subr.bf16.mxu0 %v5409
      %5918 = vmatpush1.bf16.msra.mxu0 %v5408
      %5919 = vmatprep.subr.bf16.mxu0 %v5413
      %5920 = vmatpush1.bf16.msra.mxu0 %v5412
      %5921 = vmatprep.subr.bf16.mxu0 %v5417
      %5922 = vmatpush1.bf16.msra.mxu0 %v5416
      %5923 = vmatprep.subr.bf16.mxu0 %v5421
      %5924 = vmatpush1.bf16.msra.mxu0 %v5420
      %5925 = vmatprep.mubr.bf16.mxu0 %v4328
      %5926 = vmatmul.mubr.bf16.gmra.mrb[0].mxu0 %v4327
      %v5927 = vpop.f32.mrb[0].mxu0
      %v5928 = vadd.f32 %v5876, %v5927
      %v5929 = vpop.f32.mrb[0].mxu0
      %v5930 = vadd.f32 %v5880, %v5929
      %v5931 = vpop.f32.mrb[0].mxu0
      %v5932 = vpop.f32.mrb[0].mxu0
      %5933 = vdwg.mxu0
      %5934 = vmatprep.subr.bf16.mxu0 %v5425
      %5935 = vmatpush1.bf16.msra.mxu0 %v5424
      %5936 = vmatprep.subr.bf16.mxu0 %v5429
      %5937 = vmatpush1.bf16.msra.mxu0 %v5428
      %5938 = vmatprep.subr.bf16.mxu0 %v5433
      %5939 = vmatpush1.bf16.msra.mxu0 %v5432
      %5940 = vmatprep.subr.bf16.mxu0 %v5437
      %5941 = vmatpush1.bf16.msra.mxu0 %v5436
      %5942 = vmatprep.subr.bf16.mxu0 %v5441
      %5943 = vmatpush1.bf16.msra.mxu0 %v5440
      %5944 = vmatprep.subr.bf16.mxu0 %v5445
      %5945 = vmatpush1.bf16.msra.mxu0 %v5444
      %5946 = vmatprep.subr.bf16.mxu0 %v5449
      %5947 = vmatpush1.bf16.msra.mxu0 %v5448
      %5948 = vmatprep.subr.bf16.mxu0 %v5453
      %5949 = vmatpush1.bf16.msra.mxu0 %v5452
      %5950 = vmatprep.subr.bf16.mxu0 %v5457
      %5951 = vmatpush1.bf16.msra.mxu0 %v5456
      %5952 = vmatprep.subr.bf16.mxu0 %v5461
      %5953 = vmatpush1.bf16.msra.mxu0 %v5460
      %5954 = vmatprep.subr.bf16.mxu0 %v5465
      %5955 = vmatpush1.bf16.msra.mxu0 %v5464
      %5956 = vmatprep.subr.bf16.mxu0 %v5469
      %5957 = vmatpush1.bf16.msra.mxu0 %v5468
      %5958 = vmatprep.subr.bf16.mxu0 %v5473
      %5959 = vmatpush1.bf16.msra.mxu0 %v5472
      %5960 = vmatprep.subr.bf16.mxu0 %v5477
      %5961 = vmatpush1.bf16.msra.mxu0 %v5476
      %5962 = vmatprep.subr.bf16.mxu0 %v5481
      %5963 = vmatpush1.bf16.msra.mxu0 %v5480
      %5964 = vmatprep.subr.bf16.mxu0 %v5485
      %5965 = vmatpush1.bf16.msra.mxu0 %v5484
      %5966 = vmatprep.mubr.bf16.mxu0 %v4330
      %5967 = vmatmul.mubr.bf16.gmra.mrb[0].mxu0 %v4329
      %v5968 = vpop.f32.mrb[0].mxu0
      %v5969 = vadd.f32 %v5928, %v5968
      %v5970 = vpop.f32.mrb[0].mxu0
      %v5971 = vadd.f32 %v5930, %v5970
      %v5972 = vpop.f32.mrb[0].mxu0
      %v5973 = vpop.f32.mrb[0].mxu0
      %5974 = vdwg.mxu0
      %5975 = vmatprep.subr.bf16.mxu0 %v5489
      %5976 = vmatpush1.bf16.msra.mxu0 %v5488
      %5977 = vmatprep.subr.bf16.mxu0 %v5493
      %5978 = vmatpush1.bf16.msra.mxu0 %v5492
      %5979 = vmatprep.subr.bf16.mxu0 %v5497
      %5980 = vmatpush1.bf16.msra.mxu0 %v5496
      %5981 = vmatprep.subr.bf16.mxu0 %v5501
      %5982 = vmatpush1.bf16.msra.mxu0 %v5500
      %5983 = vmatprep.subr.bf16.mxu0 %v5505
      %5984 = vmatpush1.bf16.msra.mxu0 %v5504
      %5985 = vmatprep.subr.bf16.mxu0 %v5509
      %5986 = vmatpush1.bf16.msra.mxu0 %v5508
      %5987 = vmatprep.subr.bf16.mxu0 %v5513
      %5988 = vmatpush1.bf16.msra.mxu0 %v5512
      %5989 = vmatprep.subr.bf16.mxu0 %v5517
      %5990 = vmatpush1.bf16.msra.mxu0 %v5516
      %5991 = vmatprep.subr.bf16.mxu0 %v5521
      %5992 = vmatpush1.bf16.msra.mxu0 %v5520
      %5993 = vmatprep.subr.bf16.mxu0 %v5525
      %5994 = vmatpush1.bf16.msra.mxu0 %v5524
      %5995 = vmatprep.subr.bf16.mxu0 %v5529
      %5996 = vmatpush1.bf16.msra.mxu0 %v5528
      %5997 = vmatprep.subr.bf16.mxu0 %v5533
      %5998 = vmatpush1.bf16.msra.mxu0 %v5532
      %5999 = vmatprep.subr.bf16.mxu0 %v5537
      %6000 = vmatpush1.bf16.msra.mxu0 %v5536
      %6001 = vmatprep.subr.bf16.mxu0 %v5541
      %6002 = vmatpush1.bf16.msra.mxu0 %v5540
      %6003 = vmatprep.subr.bf16.mxu0 %v5545
      %6004 = vmatpush1.bf16.msra.mxu0 %v5544
      %6005 = vmatprep.subr.bf16.mxu0 %v5549
      %6006 = vmatpush1.bf16.msra.mxu0 %v5548
      %6007 = vmatprep.mubr.bf16.mxu0 %v4332
      %6008 = vmatmul.mubr.bf16.gmra.mrb[0].mxu0 %v4331
      %v6009 = vpop.f32.mrb[0].mxu0
      %v6010 = vadd.f32 %v5969, %v6009
      %v6011 = vpop.f32.mrb[0].mxu0
      %v6012 = vadd.f32 %v5971, %v6011
      %v6013 = vpop.f32.mrb[0].mxu0
      %v6014 = vpop.f32.mrb[0].mxu0
      %6015 = vdwg.mxu0
      %6016 = vmatprep.subr.bf16.mxu0 %v5553
      %6017 = vmatpush1.bf16.msra.mxu0 %v5552
      %6018 = vmatprep.subr.bf16.mxu0 %v5557
      %6019 = vmatpush1.bf16.msra.mxu0 %v5556
      %6020 = vmatprep.subr.bf16.mxu0 %v5561
      %6021 = vmatpush1.bf16.msra.mxu0 %v5560
      %6022 = vmatprep.subr.bf16.mxu0 %v5565
      %6023 = vmatpush1.bf16.msra.mxu0 %v5564
      %6024 = vmatprep.subr.bf16.mxu0 %v5569
      %6025 = vmatpush1.bf16.msra.mxu0 %v5568
      %6026 = vmatprep.subr.bf16.mxu0 %v5573
      %6027 = vmatpush1.bf16.msra.mxu0 %v5572
      %6028 = vmatprep.subr.bf16.mxu0 %v5577
      %6029 = vmatpush1.bf16.msra.mxu0 %v5576
      %6030 = vmatprep.subr.bf16.mxu0 %v5581
      %6031 = vmatpush1.bf16.msra.mxu0 %v5580
      %6032 = vmatprep.subr.bf16.mxu0 %v5585
      %6033 = vmatpush1.bf16.msra.mxu0 %v5584
      %6034 = vmatprep.subr.bf16.mxu0 %v5589
      %6035 = vmatpush1.bf16.msra.mxu0 %v5588
      %6036 = vmatprep.subr.bf16.mxu0 %v5593
      %6037 = vmatpush1.bf16.msra.mxu0 %v5592
      %6038 = vmatprep.subr.bf16.mxu0 %v5597
      %6039 = vmatpush1.bf16.msra.mxu0 %v5596
      %6040 = vmatprep.subr.bf16.mxu0 %v5601
      %6041 = vmatpush1.bf16.msra.mxu0 %v5600
      %6042 = vmatprep.subr.bf16.mxu0 %v5605
      %6043 = vmatpush1.bf16.msra.mxu0 %v5604
      %6044 = vmatprep.subr.bf16.mxu0 %v5609
      %6045 = vmatpush1.bf16.msra.mxu0 %v5608
      %6046 = vmatprep.subr.bf16.mxu0 %v5613
      %6047 = vmatpush1.bf16.msra.mxu0 %v5612
      %6048 = vmatprep.mubr.bf16.mxu0 %v4334
      %6049 = vmatmul.mubr.bf16.gmra.mrb[0].mxu0 %v4333
      %v6050 = vpop.f32.mrb[0].mxu0
      %v6051 = vadd.f32 %v6010, %v6050
      %v6052 = vpop.f32.mrb[0].mxu0
      %v6053 = vadd.f32 %v6012, %v6052
      %v6054 = vpop.f32.mrb[0].mxu0
      %v6055 = vpop.f32.mrb[0].mxu0
      %6056 = vdwg.mxu0
      %6057 = vmatprep.subr.bf16.mxu0 %v5363
      %6058 = vmatpush1.bf16.msra.mxu0 %v5362
      %6059 = vmatprep.subr.bf16.mxu0 %v5367
      %6060 = vmatpush1.bf16.msra.mxu0 %v5366
      %6061 = vmatprep.subr.bf16.mxu0 %v5371
      %6062 = vmatpush1.bf16.msra.mxu0 %v5370
      %6063 = vmatprep.subr.bf16.mxu0 %v5375
      %6064 = vmatpush1.bf16.msra.mxu0 %v5374
      %6065 = vmatprep.subr.bf16.mxu0 %v5379
      %6066 = vmatpush1.bf16.msra.mxu0 %v5378
      %6067 = vmatprep.subr.bf16.mxu0 %v5383
      %6068 = vmatpush1.bf16.msra.mxu0 %v5382
      %6069 = vmatprep.subr.bf16.mxu0 %v5387
      %6070 = vmatpush1.bf16.msra.mxu0 %v5386
      %6071 = vmatprep.subr.bf16.mxu0 %v5391
      %6072 = vmatpush1.bf16.msra.mxu0 %v5390
      %6073 = vmatprep.subr.bf16.mxu0 %v5395
      %6074 = vmatpush1.bf16.msra.mxu0 %v5394
      %6075 = vmatprep.subr.bf16.mxu0 %v5399
      %6076 = vmatpush1.bf16.msra.mxu0 %v5398
      %6077 = vmatprep.subr.bf16.mxu0 %v5403
      %6078 = vmatpush1.bf16.msra.mxu0 %v5402
      %6079 = vmatprep.subr.bf16.mxu0 %v5407
      %6080 = vmatpush1.bf16.msra.mxu0 %v5406
      %6081 = vmatprep.subr.bf16.mxu0 %v5411
      %6082 = vmatpush1.bf16.msra.mxu0 %v5410
      %6083 = vmatprep.subr.bf16.mxu0 %v5415
      %6084 = vmatpush1.bf16.msra.mxu0 %v5414
      %6085 = vmatprep.subr.bf16.mxu0 %v5419
      %6086 = vmatpush1.bf16.msra.mxu0 %v5418
      %6087 = vmatprep.subr.bf16.mxu0 %v5423
      %6088 = vmatpush1.bf16.msra.mxu0 %v5422
      %6089 = vmatprep.mubr.bf16.mxu0 %v4328
      %6090 = vmatmul.mubr.bf16.gmra.mrb[0].mxu0 %v4327
      %v6091 = vpop.f32.mrb[0].mxu0
      %v6092 = vadd.f32 %v5884, %v6091
      %v6093 = vpop.f32.mrb[0].mxu0
      %v6094 = vadd.f32 %v5888, %v6093
      %v6095 = vpop.f32.mrb[0].mxu0
      %v6096 = vpop.f32.mrb[0].mxu0
      %6097 = vdwg.mxu0
      %6098 = vmatprep.subr.bf16.mxu0 %v5427
      %6099 = vmatpush1.bf16.msra.mxu0 %v5426
      %6100 = vmatprep.subr.bf16.mxu0 %v5431
      %6101 = vmatpush1.bf16.msra.mxu0 %v5430
      %6102 = vmatprep.subr.bf16.mxu0 %v5435
      %6103 = vmatpush1.bf16.msra.mxu0 %v5434
      %6104 = vmatprep.subr.bf16.mxu0 %v5439
      %6105 = vmatpush1.bf16.msra.mxu0 %v5438
      %6106 = vmatprep.subr.bf16.mxu0 %v5443
      %6107 = vmatpush1.bf16.msra.mxu0 %v5442
      %6108 = vmatprep.subr.bf16.mxu0 %v5447
      %6109 = vmatpush1.bf16.msra.mxu0 %v5446
      %6110 = vmatprep.subr.bf16.mxu0 %v5451
      %6111 = vmatpush1.bf16.msra.mxu0 %v5450
      %6112 = vmatprep.subr.bf16.mxu0 %v5455
      %6113 = vmatpush1.bf16.msra.mxu0 %v5454
      %6114 = vmatprep.subr.bf16.mxu0 %v5459
      %6115 = vmatpush1.bf16.msra.mxu0 %v5458
      %6116 = vmatprep.subr.bf16.mxu0 %v5463
      %6117 = vmatpush1.bf16.msra.mxu0 %v5462
      %6118 = vmatprep.subr.bf16.mxu0 %v5467
      %6119 = vmatpush1.bf16.msra.mxu0 %v5466
      %6120 = vmatprep.subr.bf16.mxu0 %v5471
      %6121 = vmatpush1.bf16.msra.mxu0 %v5470
      %6122 = vmatprep.subr.bf16.mxu0 %v5475
      %6123 = vmatpush1.bf16.msra.mxu0 %v5474
      %6124 = vmatprep.subr.bf16.mxu0 %v5479
      %6125 = vmatpush1.bf16.msra.mxu0 %v5478
      %6126 = vmatprep.subr.bf16.mxu0 %v5483
      %6127 = vmatpush1.bf16.msra.mxu0 %v5482
      %6128 = vmatprep.subr.bf16.mxu0 %v5487
      %6129 = vmatpush1.bf16.msra.mxu0 %v5486
      %6130 = vmatprep.mubr.bf16.mxu0 %v4330
      %6131 = vmatmul.mubr.bf16.gmra.mrb[0].mxu0 %v4329
      %v6132 = vpop.f32.mrb[0].mxu0
      %v6133 = vadd.f32 %v6092, %v6132
      %v6134 = vpop.f32.mrb[0].mxu0
      %v6135 = vadd.f32 %v6094, %v6134
      %v6136 = vpop.f32.mrb[0].mxu0
      %v6137 = vpop.f32.mrb[0].mxu0
      %6138 = vdwg.mxu0
      %6139 = vmatprep.subr.bf16.mxu0 %v5491
      %6140 = vmatpush1.bf16.msra.mxu0 %v5490
      %6141 = vmatprep.subr.bf16.mxu0 %v5495
      %6142 = vmatpush1.bf16.msra.mxu0 %v5494
      %6143 = vmatprep.subr.bf16.mxu0 %v5499
      %6144 = vmatpush1.bf16.msra.mxu0 %v5498
      %6145 = vmatprep.subr.bf16.mxu0 %v5503
      %6146 = vmatpush1.bf16.msra.mxu0 %v5502
      %6147 = vmatprep.subr.bf16.mxu0 %v5507
      %6148 = vmatpush1.bf16.msra.mxu0 %v5506
      %6149 = vmatprep.subr.bf16.mxu0 %v5511
      %6150 = vmatpush1.bf16.msra.mxu0 %v5510
      %6151 = vmatprep.subr.bf16.mxu0 %v5515
      %6152 = vmatpush1.bf16.msra.mxu0 %v5514
      %6153 = vmatprep.subr.bf16.mxu0 %v5519
      %6154 = vmatpush1.bf16.msra.mxu0 %v5518
      %6155 = vmatprep.subr.bf16.mxu0 %v5523
      %6156 = vmatpush1.bf16.msra.mxu0 %v5522
      %6157 = vmatprep.subr.bf16.mxu0 %v5527
      %6158 = vmatpush1.bf16.msra.mxu0 %v5526
      %6159 = vmatprep.subr.bf16.mxu0 %v5531
      %6160 = vmatpush1.bf16.msra.mxu0 %v5530
      %6161 = vmatprep.subr.bf16.mxu0 %v5535
      %6162 = vmatpush1.bf16.msra.mxu0 %v5534
      %6163 = vmatprep.subr.bf16.mxu0 %v5539
      %6164 = vmatpush1.bf16.msra.mxu0 %v5538
      %6165 = vmatprep.subr.bf16.mxu0 %v5543
      %6166 = vmatpush1.bf16.msra.mxu0 %v5542
      %6167 = vmatprep.subr.bf16.mxu0 %v5547
      %6168 = vmatpush1.bf16.msra.mxu0 %v5546
      %6169 = vmatprep.subr.bf16.mxu0 %v5551
      %6170 = vmatpush1.bf16.msra.mxu0 %v5550
      %6171 = vmatprep.mubr.bf16.mxu0 %v4332
      %6172 = vmatmul.mubr.bf16.gmra.mrb[0].mxu0 %v4331
      %v6173 = vpop.f32.mrb[0].mxu0
      %v6174 = vadd.f32 %v6133, %v6173
      %v6175 = vpop.f32.mrb[0].mxu0
      %v6176 = vadd.f32 %v6135, %v6175
      %v6177 = vpop.f32.mrb[0].mxu0
      %v6178 = vpop.f32.mrb[0].mxu0
      %6179 = vdwg.mxu0
      %6180 = vmatprep.subr.bf16.mxu0 %v5555
      %6181 = vmatpush1.bf16.msra.mxu0 %v5554
      %6182 = vmatprep.subr.bf16.mxu0 %v5559
      %6183 = vmatpush1.bf16.msra.mxu0 %v5558
      %6184 = vmatprep.subr.bf16.mxu0 %v5563
      %6185 = vmatpush1.bf16.msra.mxu0 %v5562
      %6186 = vmatprep.subr.bf16.mxu0 %v5567
      %6187 = vmatpush1.bf16.msra.mxu0 %v5566
      %6188 = vmatprep.subr.bf16.mxu0 %v5571
      %6189 = vmatpush1.bf16.msra.mxu0 %v5570
      %6190 = vmatprep.subr.bf16.mxu0 %v5575
      %6191 = vmatpush1.bf16.msra.mxu0 %v5574
      %6192 = vmatprep.subr.bf16.mxu0 %v5579
      %6193 = vmatpush1.bf16.msra.mxu0 %v5578
      %6194 = vmatprep.subr.bf16.mxu0 %v5583
      %6195 = vmatpush1.bf16.msra.mxu0 %v5582
      %6196 = vmatprep.subr.bf16.mxu0 %v5587
      %6197 = vmatpush1.bf16.msra.mxu0 %v5586
      %6198 = vmatprep.subr.bf16.mxu0 %v5591
      %6199 = vmatpush1.bf16.msra.mxu0 %v5590
      %6200 = vmatprep.subr.bf16.mxu0 %v5595
      %6201 = vmatpush1.bf16.msra.mxu0 %v5594
      %6202 = vmatprep.subr.bf16.mxu0 %v5599
      %6203 = vmatpush1.bf16.msra.mxu0 %v5598
      %6204 = vmatprep.subr.bf16.mxu0 %v5603
      %6205 = vmatpush1.bf16.msra.mxu0 %v5602
      %6206 = vmatprep.subr.bf16.mxu0 %v5607
      %6207 = vmatpush1.bf16.msra.mxu0 %v5606
      %6208 = vmatprep.subr.bf16.mxu0 %v5611
      %6209 = vmatpush1.bf16.msra.mxu0 %v5610
      %6210 = vmatprep.subr.bf16.mxu0 %v5615
      %6211 = vmatpush1.bf16.msra.mxu0 %v5614
      %6212 = vmatprep.mubr.bf16.mxu0 %v4334
      %6213 = vmatmul.mubr.bf16.gmra.mrb[0].mxu0 %v4333
      %v6214 = vpop.f32.mrb[0].mxu0
      %v6215 = vadd.f32 %v6174, %v6214
      %v6216 = vpop.f32.mrb[0].mxu0
      %v6217 = vadd.f32 %v6176, %v6216
      %v6218 = vpop.f32.mrb[0].mxu0
      %v6219 = vpop.f32.mrb[0].mxu0
      %6220 = vdwg.mxu0
      %v6221 = vmax.f32 %v6051, 0.0
      %v6222 = vmax.f32 %v6053, 0.0
      %v6223 = vmax.f32 %v6215, 0.0
      %v6224 = vmax.f32 %v6217, 0.0
      %v6225 = vpack.c.bf16 %v6221, %v6221
      %v6226 = vpack.c.bf16 %v6222, %v6222
      %v6227 = vpack.c.bf16 %v6223, %v6223
      %v6228 = vpack.c.bf16 %v6224, %v6224
      %v6229 = vld [vmem:[%s12] sm:$0xf]
      %v6230 = vld [vmem:[%s12 + $0x4] sm:$0xf]
      %v6231 = vld [vmem:[%s12 + $0x8] sm:$0xf]
      %v6232 = vld [vmem:[%s12 + $0xc] sm:$0xf]
      %v6233 = vld [vmem:[%s12 + $0x10] sm:$0xf]
      %v6234 = vld [vmem:[%s12 + $0x14] sm:$0xf]
      %v6235 = vld [vmem:[%s12 + $0x18] sm:$0xf]
      %v6236 = vld [vmem:[%s12 + $0x1c] sm:$0xf]
      %v6237 = vld [vmem:[%s12 + $0x20] sm:$0xf]
      %v6238 = vld [vmem:[%s12 + $0x24] sm:$0xf]
      %v6239 = vld [vmem:[%s12 + $0x28] sm:$0xf]
      %v6240 = vld [vmem:[%s12 + $0x2c] sm:$0xf]
      %v6241 = vld [vmem:[%s12 + $0x30] sm:$0xf]
      %v6242 = vld [vmem:[%s12 + $0x34] sm:$0xf]
      %v6243 = vld [vmem:[%s12 + $0x38] sm:$0xf]
      %v6244 = vld [vmem:[%s12 + $0x3c] sm:$0xf]
      %v6245 = vld [vmem:[%s12 + $0x40] sm:$0xf]
      %v6246 = vld [vmem:[%s12 + $0x44] sm:$0xf]
      %v6247 = vld [vmem:[%s12 + $0x48] sm:$0xf]
      %v6248 = vld [vmem:[%s12 + $0x4c] sm:$0xf]
      %v6249 = vld [vmem:[%s12 + $0x50] sm:$0xf]
      %v6250 = vld [vmem:[%s12 + $0x54] sm:$0xf]
      %v6251 = vld [vmem:[%s12 + $0x58] sm:$0xf]
      %v6252 = vld [vmem:[%s12 + $0x5c] sm:$0xf]
      %v6253 = vld [vmem:[%s12 + $0x60] sm:$0xf]
      %v6254 = vld [vmem:[%s12 + $0x64] sm:$0xf]
      %v6255 = vld [vmem:[%s12 + $0x68] sm:$0xf]
      %v6256 = vld [vmem:[%s12 + $0x6c] sm:$0xf]
      %v6257 = vld [vmem:[%s12 + $0x70] sm:$0xf]
      %v6258 = vld [vmem:[%s12 + $0x74] sm:$0xf]
      %v6259 = vld [vmem:[%s12 + $0x78] sm:$0xf]
      %v6260 = vld [vmem:[%s12 + $0x7c] sm:$0xf]
      %v6261 = vld [vmem:[%s12 + $0x80] sm:$0xf]
      %v6262 = vld [vmem:[%s12 + $0x84] sm:$0xf]
      %v6263 = vld [vmem:[%s12 + $0x88] sm:$0xf]
      %v6264 = vld [vmem:[%s12 + $0x8c] sm:$0xf]
      %v6265 = vld [vmem:[%s12 + $0x90] sm:$0xf]
      %v6266 = vld [vmem:[%s12 + $0x94] sm:$0xf]
      %v6267 = vld [vmem:[%s12 + $0x98] sm:$0xf]
      %v6268 = vld [vmem:[%s12 + $0x9c] sm:$0xf]
      %v6269 = vld [vmem:[%s12 + $0xa0] sm:$0xf]
      %v6270 = vld [vmem:[%s12 + $0xa4] sm:$0xf]
      %v6271 = vld [vmem:[%s12 + $0xa8] sm:$0xf]
      %v6272 = vld [vmem:[%s12 + $0xac] sm:$0xf]
      %v6273 = vld [vmem:[%s12 + $0xb0] sm:$0xf]
      %v6274 = vld [vmem:[%s12 + $0xb4] sm:$0xf]
      %v6275 = vld [vmem:[%s12 + $0xb8] sm:$0xf]
      %v6276 = vld [vmem:[%s12 + $0xbc] sm:$0xf]
      %v6277 = vld [vmem:[%s12 + $0xc0] sm:$0xf]
      %v6278 = vld [vmem:[%s12 + $0xc4] sm:$0xf]
      %v6279 = vld [vmem:[%s12 + $0xc8] sm:$0xf]
      %v6280 = vld [vmem:[%s12 + $0xcc] sm:$0xf]
      %v6281 = vld [vmem:[%s12 + $0xd0] sm:$0xf]
      %v6282 = vld [vmem:[%s12 + $0xd4] sm:$0xf]
      %v6283 = vld [vmem:[%s12 + $0xd8] sm:$0xf]
      %v6284 = vld [vmem:[%s12 + $0xdc] sm:$0xf]
      %v6285 = vld [vmem:[%s12 + $0xe0] sm:$0xf]
      %v6286 = vld [vmem:[%s12 + $0xe4] sm:$0xf]
      %v6287 = vld [vmem:[%s12 + $0xe8] sm:$0xf]
      %v6288 = vld [vmem:[%s12 + $0xec] sm:$0xf]
      %v6289 = vld [vmem:[%s12 + $0xf0] sm:$0xf]
      %v6290 = vld [vmem:[%s12 + $0xf4] sm:$0xf]
      %v6291 = vld [vmem:[%s12 + $0xf8] sm:$0xf]
      %v6292 = vld [vmem:[%s12 + $0xfc] sm:$0xf]
      %v6293 = vld [vmem:[%s13] sm:$0x1]
      %v6358 = vunpack.c.l.b16 %v6229
      %v6359 = vunpack.c.l.b16 %v6230
      %v6360 = vunpack.c.l.b16 %v6231
      %v6361 = vunpack.c.l.b16 %v6232
      %v6362 = vunpack.c.l.b16 %v6233
      %v6363 = vunpack.c.l.b16 %v6234
      %v6364 = vunpack.c.l.b16 %v6235
      %v6365 = vunpack.c.l.b16 %v6236
      %v6366 = vunpack.c.l.b16 %v6237
      %v6367 = vunpack.c.l.b16 %v6238
      %v6368 = vunpack.c.l.b16 %v6239
      %v6369 = vunpack.c.l.b16 %v6240
      %v6370 = vunpack.c.l.b16 %v6241
      %v6371 = vunpack.c.l.b16 %v6242
      %v6372 = vunpack.c.l.b16 %v6243
      %v6373 = vunpack.c.l.b16 %v6244
      %v6374 = vunpack.c.l.b16 %v6245
      %v6375 = vunpack.c.l.b16 %v6246
      %v6376 = vunpack.c.l.b16 %v6247
      %v6377 = vunpack.c.l.b16 %v6248
      %v6378 = vunpack.c.l.b16 %v6249
      %v6379 = vunpack.c.l.b16 %v6250
      %v6380 = vunpack.c.l.b16 %v6251
      %v6381 = vunpack.c.l.b16 %v6252
      %v6382 = vunpack.c.l.b16 %v6253
      %v6383 = vunpack.c.l.b16 %v6254
      %v6384 = vunpack.c.l.b16 %v6255
      %v6385 = vunpack.c.l.b16 %v6256
      %v6386 = vunpack.c.l.b16 %v6257
      %v6387 = vunpack.c.l.b16 %v6258
      %v6388 = vunpack.c.l.b16 %v6259
      %v6389 = vunpack.c.l.b16 %v6260
      %v6390 = vunpack.c.l.b16 %v6261
      %v6391 = vunpack.c.l.b16 %v6262
      %v6392 = vunpack.c.l.b16 %v6263
      %v6393 = vunpack.c.l.b16 %v6264
      %v6394 = vunpack.c.l.b16 %v6265
      %v6395 = vunpack.c.l.b16 %v6266
      %v6396 = vunpack.c.l.b16 %v6267
      %v6397 = vunpack.c.l.b16 %v6268
      %v6398 = vunpack.c.l.b16 %v6269
      %v6399 = vunpack.c.l.b16 %v6270
      %v6400 = vunpack.c.l.b16 %v6271
      %v6401 = vunpack.c.l.b16 %v6272
      %v6402 = vunpack.c.l.b16 %v6273
      %v6403 = vunpack.c.l.b16 %v6274
      %v6404 = vunpack.c.l.b16 %v6275
      %v6405 = vunpack.c.l.b16 %v6276
      %v6406 = vunpack.c.l.b16 %v6277
      %v6407 = vunpack.c.l.b16 %v6278
      %v6408 = vunpack.c.l.b16 %v6279
      %v6409 = vunpack.c.l.b16 %v6280
      %v6410 = vunpack.c.l.b16 %v6281
      %v6411 = vunpack.c.l.b16 %v6282
      %v6412 = vunpack.c.l.b16 %v6283
      %v6413 = vunpack.c.l.b16 %v6284
      %v6414 = vunpack.c.l.b16 %v6285
      %v6415 = vunpack.c.l.b16 %v6286
      %v6416 = vunpack.c.l.b16 %v6287
      %v6417 = vunpack.c.l.b16 %v6288
      %v6418 = vunpack.c.l.b16 %v6289
      %v6419 = vunpack.c.l.b16 %v6290
      %v6420 = vunpack.c.l.b16 %v6291
      %v6421 = vunpack.c.l.b16 %v6292
      %v6422 = vpack.c.b16 %v6359, %v6358
      %v6423 = vpack.c.b16 %v6361, %v6360
      %v6424 = vpack.c.b16 %v6363, %v6362
      %v6425 = vpack.c.b16 %v6365, %v6364
      %v6426 = vpack.c.b16 %v6367, %v6366
      %v6427 = vpack.c.b16 %v6369, %v6368
      %v6428 = vpack.c.b16 %v6371, %v6370
      %v6429 = vpack.c.b16 %v6373, %v6372
      %v6430 = vpack.c.b16 %v6375, %v6374
      %v6431 = vpack.c.b16 %v6377, %v6376
      %v6432 = vpack.c.b16 %v6379, %v6378
      %v6433 = vpack.c.b16 %v6381, %v6380
      %v6434 = vpack.c.b16 %v6383, %v6382
      %v6435 = vpack.c.b16 %v6385, %v6384
      %v6436 = vpack.c.b16 %v6387, %v6386
      %v6437 = vpack.c.b16 %v6389, %v6388
      %v6438 = vpack.c.b16 %v6391, %v6390
      %v6439 = vpack.c.b16 %v6393, %v6392
      %v6440 = vpack.c.b16 %v6395, %v6394
      %v6441 = vpack.c.b16 %v6397, %v6396
      %v6442 = vpack.c.b16 %v6399, %v6398
      %v6443 = vpack.c.b16 %v6401, %v6400
      %v6444 = vpack.c.b16 %v6403, %v6402
      %v6445 = vpack.c.b16 %v6405, %v6404
      %v6446 = vpack.c.b16 %v6407, %v6406
      %v6447 = vpack.c.b16 %v6409, %v6408
      %v6448 = vpack.c.b16 %v6411, %v6410
      %v6449 = vpack.c.b16 %v6413, %v6412
      %v6450 = vpack.c.b16 %v6415, %v6414
      %v6451 = vpack.c.b16 %v6417, %v6416
      %v6452 = vpack.c.b16 %v6419, %v6418
      %v6453 = vpack.c.b16 %v6421, %v6420
      %6486 = vmatprep.subr.bf16.mxu0 0
      %6487 = vmatpush1.bf16.msra.mxu0 %v6422
      %6488 = vmatprep.subr.bf16.mxu0 0
      %6489 = vmatpush1.bf16.msra.mxu0 %v6423
      %6490 = vmatprep.subr.bf16.mxu0 0
      %6491 = vmatpush1.bf16.msra.mxu0 %v6424
      %6492 = vmatprep.subr.bf16.mxu0 0
      %6493 = vmatpush1.bf16.msra.mxu0 %v6425
      %6494 = vmatprep.subr.bf16.mxu0 0
      %6495 = vmatpush1.bf16.msra.mxu0 %v6426
      %6496 = vmatprep.subr.bf16.mxu0 0
      %6497 = vmatpush1.bf16.msra.mxu0 %v6427
      %6498 = vmatprep.subr.bf16.mxu0 0
      %6499 = vmatpush1.bf16.msra.mxu0 %v6428
      %6500 = vmatprep.subr.bf16.mxu0 0
      %6501 = vmatpush1.bf16.msra.mxu0 %v6429
      %6502 = vmatprep.subr.bf16.mxu0 0
      %6503 = vmatpush1.bf16.msra.mxu0 %v6430
      %6504 = vmatprep.subr.bf16.mxu0 0
      %6505 = vmatpush1.bf16.msra.mxu0 %v6431
      %6506 = vmatprep.subr.bf16.mxu0 0
      %6507 = vmatpush1.bf16.msra.mxu0 %v6432
      %6508 = vmatprep.subr.bf16.mxu0 0
      %6509 = vmatpush1.bf16.msra.mxu0 %v6433
      %6510 = vmatprep.subr.bf16.mxu0 0
      %6511 = vmatpush1.bf16.msra.mxu0 %v6434
      %6512 = vmatprep.subr.bf16.mxu0 0
      %6513 = vmatpush1.bf16.msra.mxu0 %v6435
      %6514 = vmatprep.subr.bf16.mxu0 0
      %6515 = vmatpush1.bf16.msra.mxu0 %v6436
      %6516 = vmatprep.subr.bf16.mxu0 0
      %6517 = vmatpush1.bf16.msra.mxu0 %v6437
      %6518 = vmatprep.mubr.bf16.mxu0 %v6226
      %6519 = vmatmul.mubr.bf16.gmra.mrb[0].mxu0 %v6225
      %v6520 = vpop.f32.mrb[0].mxu0
      %v6521 = vadd.f32 %v6293, %v6520
      %v6522 = vpop.f32.mrb[0].mxu0
      %v6523 = vpop.f32.mrb[0].mxu0
      %v6524 = vpop.f32.mrb[0].mxu0
      %6525 = vdwg.mxu0
      %6526 = vmatprep.subr.bf16.mxu0 0
      %6527 = vmatpush1.bf16.msra.mxu0 %v6438
      %6528 = vmatprep.subr.bf16.mxu0 0
      %6529 = vmatpush1.bf16.msra.mxu0 %v6439
      %6530 = vmatprep.subr.bf16.mxu0 0
      %6531 = vmatpush1.bf16.msra.mxu0 %v6440
      %6532 = vmatprep.subr.bf16.mxu0 0
      %6533 = vmatpush1.bf16.msra.mxu0 %v6441
      %6534 = vmatprep.subr.bf16.mxu0 0
      %6535 = vmatpush1.bf16.msra.mxu0 %v6442
      %6536 = vmatprep.subr.bf16.mxu0 0
      %6537 = vmatpush1.bf16.msra.mxu0 %v6443
      %6538 = vmatprep.subr.bf16.mxu0 0
      %6539 = vmatpush1.bf16.msra.mxu0 %v6444
      %6540 = vmatprep.subr.bf16.mxu0 0
      %6541 = vmatpush1.bf16.msra.mxu0 %v6445
      %6542 = vmatprep.subr.bf16.mxu0 0
      %6543 = vmatpush1.bf16.msra.mxu0 %v6446
      %6544 = vmatprep.subr.bf16.mxu0 0
      %6545 = vmatpush1.bf16.msra.mxu0 %v6447
      %6546 = vmatprep.subr.bf16.mxu0 0
      %6547 = vmatpush1.bf16.msra.mxu0 %v6448
      %6548 = vmatprep.subr.bf16.mxu0 0
      %6549 = vmatpush1.bf16.msra.mxu0 %v6449
      %6550 = vmatprep.subr.bf16.mxu0 0
      %6551 = vmatpush1.bf16.msra.mxu0 %v6450
      %6552 = vmatprep.subr.bf16.mxu0 0
      %6553 = vmatpush1.bf16.msra.mxu0 %v6451
      %6554 = vmatprep.subr.bf16.mxu0 0
      %6555 = vmatpush1.bf16.msra.mxu0 %v6452
      %6556 = vmatprep.subr.bf16.mxu0 0
      %6557 = vmatpush1.bf16.msra.mxu0 %v6453
      %6558 = vmatprep.mubr.bf16.mxu0 %v6228
      %6559 = vmatmul.mubr.bf16.gmra.mrb[0].mxu0 %v6227
      %v6560 = vpop.f32.mrb[0].mxu0
      %v6561 = vadd.f32 %v6521, %v6560
      %v6562 = vpop.f32.mrb[0].mxu0
      %v6563 = vpop.f32.mrb[0].mxu0
      %v6564 = vpop.f32.mrb[0].mxu0
      %6565 = vdwg.mxu0
      %v6566 = vlaneseq
      %v6567 = vshrl.u32 %v6566, 7
      %v6568 = vsub.s32 0, %v6567
      %v6569 = vrot.slane %v6561, %v6568
      %6570 = vst [vmem:[%s465] sm:$0xff] %v6569
      %p6571 = scmp.lt.s32.totalorder %s25, 1
      %s6572 = scalar_select %p6571, %s25, 1
      %s6573 = smul.addr %s6572, 8
      %s6574 = scalar_lea.vmem %s14, %s6573
      // Predicated region
      $region77: #{qnetwork_forward.1} parent=75 // pred_check
        %p6575 = pneg %p342
      $region78: #{qnetwork_forward.1} parent=75 // pred_check_branch
        %6577 = sbr.rel (%p6575) target = $region80
      $region79: #{qnetwork_forward.1} parent=75 // pred_region
        _
      $region80: #{qnetwork_forward.1} parent=75 // pred_fallthru
        _
    $region76: #{qnetwork_forward.1} parent=5 // pred_fallthru
      _
    %p6578 = scmp.le.s32.totalorder 2, %s20
    // Predicated region
    $region81: #{qnetwork_forward.1} parent=5 // pred_check
      %p6579 = pneg %p6578
    $region82: #{qnetwork_forward.1} parent=5 // pred_check_branch
      %6581 = sbr.rel (%p6579) target = $region84
    $region83: #{qnetwork_forward.1} parent=5 // pred_region
      %s6582 = ssub.s32 %s20, 2
      // Predicated region
      $region85: #{qnetwork_forward.1} parent=83 // pred_check
        %p6583 = pneg %p348
      $region86: #{qnetwork_forward.1} parent=83 // pred_check_branch
        %6585 = sbr.rel (%p6583) target = $region88
      $region87: #{qnetwork_forward.1} parent=83 // pred_region
        %p6586 = scmp.lt.s32.totalorder %s26, 1
        %s6587 = scalar_select %p6586, %s26, 1
        %s6588 = smul.addr %s6587, 8
        %s6589 = scalar_lea.vmem %s14, %s6588
      $region88: #{qnetwork_forward.1} parent=83 // pred_fallthru
        _
    $region84: #{qnetwork_forward.1} parent=5 // pred_fallthru
      _
  $region6: #{qnetwork_forward.1} parent=0 // loop_footer
    %s24 = sadd.s32 1, %s20
  $region7: #{qnetwork_forward.1} parent=0 // loop_footer_branch
    %19 = sbr.rel target = $region3
  $region8: #{qnetwork_forward.1} parent=0 // loop_exit
    _

</llo_original>
